<compile_context>
chip_gen: v7x
topology: tpu7x:2x2x1
jax: 0.10.0
libtpu: 0.0.40
codegen_flags: <defaults>
</compile_context>

<pallas_src>
import jax
import jax.numpy as jnp
from jax import lax
from jax.experimental import pallas as pl
from jax.experimental.pallas import tpu as pltpu

D_MODEL = 128            # lane-dense demo width (production LoFTR uses 256)
NHEAD = 4
LN_EPS = 1e-7            # LoFTR explicitly uses nn.LayerNorm(d_model, eps=1e-07)
ATTN_EPS = 1e-6          # standard LoFTR LinearAttention epsilon
LAYER_NAMES = ('self', 'cross')


def _make_transformer_kernel(layer_names, C):
    """Whole-stack kernel body; one batch element per grid step."""

    def kernel(f0_ref, f1_ref, hmask_ref, hpool_ref, hexp_ref,
               wqkv_ref, wm_ref, w1a_ref, w1b_ref, w2_ref, ln_ref,
               o0_ref, o1_ref):
        f0 = f0_ref[0].astype(jnp.float32)       # [L, C]
        f1 = f1_ref[0].astype(jnp.float32)       # [S, C]

        head_mask = hmask_ref[...]               # [C, C]  bf16 0/1 block-diag
        head_pool = hpool_ref[...]               # [C, H]  f32 0/1 (pool per head)
        head_expand = hexp_ref[...]              # [H, C]  f32 0/1 (broadcast back)

        def feat_map(t):                         # elu(t) + 1
            return jnp.where(t > 0, t + 1.0, jnp.exp(t))

        def layernorm(t, gamma, beta):
            mu = jnp.mean(t, axis=-1, keepdims=True)
            var = jnp.mean(jnp.square(t - mu), axis=-1, keepdims=True)
            return (t - mu) * lax.rsqrt(var + LN_EPS) * gamma + beta

        def encoder(x, s, wq, wkv, wmrg, w1a, w1b, w2m, g1, b1, g2, b2):
            # bf16 matmul operands, f32 accumulation (MXU-native path).
            x16 = x.astype(jnp.bfloat16)
            s16 = s.astype(jnp.bfloat16)

            q = jnp.dot(x16, wq, preferred_element_type=jnp.float32)      # [L, C]
            kvp = jnp.dot(s16, wkv, preferred_element_type=jnp.float32)   # [S, 2C]
            k, v = kvp[:, :C], kvp[:, C:]

            q_elu = feat_map(q)                                           # [L, C]
            k_elu = feat_map(k)                                           # [S, C]

            # Linear attention with heads packed: full-width K^T V, then
            # zero the off-diagonal head blocks with the block-diag mask.
            kv = jnp.einsum('sc,sv->cv',
                            k_elu.astype(jnp.bfloat16),
                            v.astype(jnp.bfloat16),
                            preferred_element_type=jnp.float32)           # [C, C]
            kv16 = kv.astype(jnp.bfloat16) * head_mask

            numer = jnp.dot(q_elu.astype(jnp.bfloat16), kv16,
                            preferred_element_type=jnp.float32)           # [L, C]

            # Per-head normalizer via thin 0/1 pooling matmuls
            # (2*L*C*H flops instead of L*C*C); kept in f32 since it feeds a
            # division and is tiny.
            ksum = jnp.sum(k_elu, axis=0, keepdims=True)                  # [1, C]
            denom_h = jnp.dot(q_elu * ksum, head_pool,
                              preferred_element_type=jnp.float32)         # [L, H]
            denom = jnp.dot(denom_h, head_expand,
                            preferred_element_type=jnp.float32)           # [L, C]

            # Exact reciprocal (EUP slot, off the VALU critical path).
            message = numer * pl.reciprocal(denom + ATTN_EPS, approx=False)

            # ---- merge + norm1 ----
            message = jnp.dot(message.astype(jnp.bfloat16), wmrg,
                              preferred_element_type=jnp.float32)
            message = layernorm(message, g1, b1)

            # ---- MLP without the [L, 2C] concatenate + norm2 ----
            h = (jnp.dot(x16, w1a, preferred_element_type=jnp.float32)
                 + jnp.dot(message.astype(jnp.bfloat16), w1b,
                           preferred_element_type=jnp.float32))
            h = jnp.maximum(h, 0.0)
            h = jnp.dot(h.astype(jnp.bfloat16), w2m,
                        preferred_element_type=jnp.float32)
            h = layernorm(h, g2, b2)
            return x + h

        # TODO(synk): at production depth (8 layers) switch this static loop to
        # lax.fori_loop with dynamic indexing into the stacked weight refs.
        for li, name in enumerate(layer_names):
            wqkv = wqkv_ref[li]                       # [C, 3C] bf16 (Wq|Wk|Wv)
            wq, wkv = wqkv[:, :C], wqkv[:, C:]
            wmrg = wm_ref[li]                         # [C, C]
            w1a = w1a_ref[li]                         # [C, 2C] (x half of W1)
            w1b = w1b_ref[li]                         # [C, 2C] (message half of W1)
            w2m = w2_ref[li]                          # [2C, C]
            lnp = ln_ref[li]                          # [4, C]  f32 (g1,b1,g2,b2)
            g1, b1, g2, b2 = lnp[0:1], lnp[1:2], lnp[2:3], lnp[3:4]

            args = (wq, wkv, wmrg, w1a, w1b, w2m, g1, b1, g2, b2)
            if name == 'self':
                f0 = encoder(f0, f0, *args)
                f1 = encoder(f1, f1, *args)
            elif name == 'cross':
                f0 = encoder(f0, f1, *args)
                f1 = encoder(f1, f0, *args)   # uses the updated feat0 (LoFTR order)
            else:
                raise KeyError(name)

        o0_ref[0] = f0.astype(o0_ref.dtype)
        o1_ref[0] = f1.astype(o1_ref.dtype)

    return kernel


def _vmem_limit_bytes(L, S, C, nl, nhead):
    """Explicit scoped-VMEM budget sized from the chosen tiles (with headroom)."""
    f32, bf16 = 4, 2
    # double-buffered feature inputs + outputs (both maps)
    feat = 2 * 2 * (L + S) * C * f32
    # stacked weights (bf16, double-buffered) + LN params (f32) + head matrices
    per_layer_w = (3 * C * C) + (C * C) + 2 * (C * 2 * C) + (2 * C * C)
    wts = 2 * nl * per_layer_w * bf16 + 2 * nl * 4 * C * f32
    consts = 2 * (C * C * bf16 + 2 * C * nhead * f32)
    # generous allowance for live f32 intermediates in one encoder application
    act = (16 * max(L, S) * C + 4 * C * C) * f32
    est = feat + wts + consts + act
    # stay well below physical VMEM on all generations (64 MiB on v7x).
    return int(min(max(2 * est, 16 * 2 ** 20), 64 * 2 ** 20))


def local_feature_transformer(feat0, feat1, layer_params,
                              layer_names=LAYER_NAMES,
                              d_model=D_MODEL, nhead=NHEAD):
    """feat0: [N, L, C], feat1: [N, S, C] -> ([N, L, C], [N, S, C])."""
    N, L, C = feat0.shape
    S = feat1.shape[1]
    assert C == d_model and feat1.shape[2] == C and feat1.shape[0] == N
    assert d_model % nhead == 0
    hd = d_model // nhead
    nl = len(layer_names)
    assert len(layer_params) == nl
    C2 = 2 * C
    wdt = jnp.bfloat16

    # Stack per-layer weights (bf16) so the whole stack is a few arrays.
    wqkv = jnp.stack([jnp.concatenate([p['wq'], p['wk'], p['wv']], axis=1)
                      for p in layer_params]).astype(wdt)            # [nl, C, 3C]
    wm = jnp.stack([p['wm'] for p in layer_params]).astype(wdt)      # [nl, C, C]
    w1a = jnp.stack([p['w1'][:C] for p in layer_params]).astype(wdt)  # [nl, C, 2C]
    w1b = jnp.stack([p['w1'][C:] for p in layer_params]).astype(wdt)  # [nl, C, 2C]
    w2 = jnp.stack([p['w2'] for p in layer_params]).astype(wdt)      # [nl, 2C, C]
    ln = jnp.stack([jnp.concatenate([p['g1'], p['b1'], p['g2'], p['b2']],
                                    axis=0)
                    for p in layer_params]).astype(jnp.float32)      # [nl, 4, C]

    # Constant head-structure matrices (built host-side; no in-kernel iota).
    d_idx = jnp.arange(C) // hd
    head_mask = (d_idx[:, None] == d_idx[None, :]).astype(wdt)           # [C, C]
    head_pool = (d_idx[:, None] == jnp.arange(nhead)[None, :]).astype(jnp.float32)  # [C, H]
    head_expand = jnp.transpose(head_pool)                               # [H, C]

    kernel = _make_transformer_kernel(tuple(layer_names), C)

    def rep(shape):   # replicated (weight/constant) spec: same block every step
        return pl.BlockSpec(shape, lambda n, _r=len(shape): (0,) * _r)

    return pl.pallas_call(
        kernel,
        out_shape=(jax.ShapeDtypeStruct((N, L, C), feat0.dtype),
                   jax.ShapeDtypeStruct((N, S, C), feat1.dtype)),
        grid=(N,),
        in_specs=[
            pl.BlockSpec((1, L, C), lambda n: (n, 0, 0)),   # feat0
            pl.BlockSpec((1, S, C), lambda n: (n, 0, 0)),   # feat1
            rep((C, C)),            # block-diagonal head mask (bf16)
            rep((C, nhead)),        # head pooling matrix (f32)
            rep((nhead, C)),        # head expansion matrix (f32)
            rep((nl, C, 3 * C)),    # fused Wq|Wk|Wv (bf16)
            rep((nl, C, C)),        # Wmerge (bf16)
            rep((nl, C, C2)),       # mlp W1 (x half, bf16)
            rep((nl, C, C2)),       # mlp W1 (message half, bf16)
            rep((nl, C2, C)),       # mlp W2 (bf16)
            rep((nl, 4, C)),        # layernorm gammas/betas (f32)
        ],
        out_specs=(pl.BlockSpec((1, L, C), lambda n: (n, 0, 0)),
                   pl.BlockSpec((1, S, C), lambda n: (n, 0, 0))),
        compiler_params=pltpu.CompilerParams(
            dimension_semantics=("parallel",),
            vmem_limit_bytes=_vmem_limit_bytes(L, S, C, nl, nhead)),
    )(feat0, feat1, head_mask, head_pool, head_expand,
      wqkv, wm, w1a, w1b, w2, ln)


def xavier_uniform(key, fan_in, fan_out):
    bound = (6.0 / (fan_in + fan_out)) ** 0.5
    # stored directly in [in, out] layout (== transposed nn.Linear weight)
    return jax.random.uniform(key, (fan_in, fan_out), jnp.float32,
                              minval=-bound, maxval=bound)


def init_layer_params(key, d_model=D_MODEL):
    C, C2 = d_model, 2 * d_model
    ks = jax.random.split(key, 6)
    return dict(
        wq=xavier_uniform(ks[0], C, C),
        wk=xavier_uniform(ks[1], C, C),
        wv=xavier_uniform(ks[2], C, C),
        wm=xavier_uniform(ks[3], C, C),
        w1=xavier_uniform(ks[4], C2, C2),
        w2=xavier_uniform(ks[5], C2, C),
        # LayerNorm params keep PyTorch defaults (gamma=1, beta=0);
        # _reset_parameters only touches p.dim() > 1 params.
        g1=jnp.ones((1, C), jnp.float32), b1=jnp.zeros((1, C), jnp.float32),
        g2=jnp.ones((1, C), jnp.float32), b2=jnp.zeros((1, C), jnp.float32),
    )


if __name__ == "__main__":
    key = jax.random.PRNGKey(0)
    k0, k1, kp = jax.random.split(key, 3)

    N, L, S, C = 2, 16, 24, D_MODEL
    feat0 = jax.random.normal(k0, (N, L, C), jnp.float32)
    feat1 = jax.random.normal(k1, (N, S, C), jnp.float32)

    pkeys = jax.random.split(kp, len(LAYER_NAMES))
    layer_params = [init_layer_params(k, C) for k in pkeys]

    out0, out1 = local_feature_transformer(feat0, feat1, layer_params)
    jax.block_until_ready((out0, out1))
    assert out0.shape == (N, L, C) and out1.shape == (N, S, C)
    assert bool(jnp.all(jnp.isfinite(out0))) and bool(jnp.all(jnp.isfinite(out1)))
    print("KERNEL_OK")
</pallas_src>

<mosaic_0001>
module attributes {stable_mosaic.version = 11 : i64} {
  func.func @kernel(%arg0: i32, %arg1: memref<1x16x128xf32, #tpu.memory_space<vmem>>, %arg2: memref<1x24x128xf32, #tpu.memory_space<vmem>>, %arg3: memref<128x128xbf16, #tpu.memory_space<vmem>>, %arg4: memref<128x4xf32, #tpu.memory_space<vmem>>, %arg5: memref<4x128xf32, #tpu.memory_space<vmem>>, %arg6: memref<2x128x384xbf16, #tpu.memory_space<vmem>>, %arg7: memref<2x128x128xbf16, #tpu.memory_space<vmem>>, %arg8: memref<2x128x256xbf16, #tpu.memory_space<vmem>>, %arg9: memref<2x128x256xbf16, #tpu.memory_space<vmem>>, %arg10: memref<2x256x128xbf16, #tpu.memory_space<vmem>>, %arg11: memref<2x4x128xf32, #tpu.memory_space<vmem>>, %arg12: memref<1x16x128xf32, #tpu.memory_space<vmem>>, %arg13: memref<1x24x128xf32, #tpu.memory_space<vmem>>) attributes {dimension_semantics = [#tpu.dimension_semantics<parallel>], iteration_bounds = array<i64: 2>, scalar_prefetch = 0 : i64, scratch_operands = 0 : i64, tpu.core_type = #tpu.core_type<tc>, window_params = [{transform_indices = @transform_0, window_bounds = array<i64: 1, 16, 128>}, {transform_indices = @transform_1, window_bounds = array<i64: 1, 24, 128>}, {pipeline_mode = #tpu.pipeline_mode<synchronous>, transform_indices = @transform_2, window_bounds = array<i64: 128, 128>}, {pipeline_mode = #tpu.pipeline_mode<synchronous>, transform_indices = @transform_3, window_bounds = array<i64: 128, 4>}, {pipeline_mode = #tpu.pipeline_mode<synchronous>, transform_indices = @transform_4, window_bounds = array<i64: 4, 128>}, {pipeline_mode = #tpu.pipeline_mode<synchronous>, transform_indices = @transform_5, window_bounds = array<i64: 2, 128, 384>}, {pipeline_mode = #tpu.pipeline_mode<synchronous>, transform_indices = @transform_6, window_bounds = array<i64: 2, 128, 128>}, {pipeline_mode = #tpu.pipeline_mode<synchronous>, transform_indices = @transform_7, window_bounds = array<i64: 2, 128, 256>}, {pipeline_mode = #tpu.pipeline_mode<synchronous>, transform_indices = @transform_8, window_bounds = array<i64: 2, 128, 256>}, {pipeline_mode = #tpu.pipeline_mode<synchronous>, transform_indices = @transform_9, window_bounds = array<i64: 2, 256, 128>}, {pipeline_mode = #tpu.pipeline_mode<synchronous>, transform_indices = @transform_10, window_bounds = array<i64: 2, 4, 128>}, {transform_indices = @transform_11, window_bounds = array<i64: 1, 16, 128>}, {transform_indices = @transform_12, window_bounds = array<i64: 1, 24, 128>}]} {
    %c0 = arith.constant 0 : index
    %c0_0 = arith.constant 0 : index
    %c0_1 = arith.constant 0 : index
    %0 = vector.load %arg1[%c0, %c0_0, %c0_1] : memref<1x16x128xf32, #tpu.memory_space<vmem>>, vector<1x16x128xf32>
    %1 = vector.shape_cast %0 : vector<1x16x128xf32> to vector<16x128xf32>
    %c0_2 = arith.constant 0 : index
    %c0_3 = arith.constant 0 : index
    %c0_4 = arith.constant 0 : index
    %2 = vector.load %arg2[%c0_2, %c0_3, %c0_4] : memref<1x24x128xf32, #tpu.memory_space<vmem>>, vector<1x24x128xf32>
    %3 = vector.shape_cast %2 : vector<1x24x128xf32> to vector<24x128xf32>
    %c0_5 = arith.constant 0 : index
    %c0_6 = arith.constant 0 : index
    %4 = vector.load %arg3[%c0_5, %c0_6] : memref<128x128xbf16, #tpu.memory_space<vmem>>, vector<128x128xbf16>
    %c0_7 = arith.constant 0 : index
    %c0_8 = arith.constant 0 : index
    %5 = vector.load %arg4[%c0_7, %c0_8] : memref<128x4xf32, #tpu.memory_space<vmem>>, vector<128x4xf32>
    %c0_9 = arith.constant 0 : index
    %c0_10 = arith.constant 0 : index
    %6 = vector.load %arg5[%c0_9, %c0_10] : memref<4x128xf32, #tpu.memory_space<vmem>>, vector<4x128xf32>
    %c0_11 = arith.constant 0 : index
    %c0_12 = arith.constant 0 : index
    %c0_13 = arith.constant 0 : index
    %7 = vector.load %arg6[%c0_11, %c0_12, %c0_13] : memref<2x128x384xbf16, #tpu.memory_space<vmem>>, vector<1x128x384xbf16>
    %8 = vector.shape_cast %7 : vector<1x128x384xbf16> to vector<128x384xbf16>
    %9 = vector.extract_strided_slice %8 {offsets = [0, 0], sizes = [128, 128], strides = [1, 1]} : vector<128x384xbf16> to vector<128x128xbf16>
    %10 = vector.extract_strided_slice %8 {offsets = [0, 128], sizes = [128, 256], strides = [1, 1]} : vector<128x384xbf16> to vector<128x256xbf16>
    %c0_14 = arith.constant 0 : index
    %c0_15 = arith.constant 0 : index
    %c0_16 = arith.constant 0 : index
    %11 = vector.load %arg7[%c0_14, %c0_15, %c0_16] : memref<2x128x128xbf16, #tpu.memory_space<vmem>>, vector<1x128x128xbf16>
    %12 = vector.shape_cast %11 : vector<1x128x128xbf16> to vector<128x128xbf16>
    %c0_17 = arith.constant 0 : index
    %c0_18 = arith.constant 0 : index
    %c0_19 = arith.constant 0 : index
    %13 = vector.load %arg8[%c0_17, %c0_18, %c0_19] : memref<2x128x256xbf16, #tpu.memory_space<vmem>>, vector<1x128x256xbf16>
    %14 = vector.shape_cast %13 : vector<1x128x256xbf16> to vector<128x256xbf16>
    %c0_20 = arith.constant 0 : index
    %c0_21 = arith.constant 0 : index
    %c0_22 = arith.constant 0 : index
    %15 = vector.load %arg9[%c0_20, %c0_21, %c0_22] : memref<2x128x256xbf16, #tpu.memory_space<vmem>>, vector<1x128x256xbf16>
    %16 = vector.shape_cast %15 : vector<1x128x256xbf16> to vector<128x256xbf16>
    %c0_23 = arith.constant 0 : index
    %c0_24 = arith.constant 0 : index
    %c0_25 = arith.constant 0 : index
    %17 = vector.load %arg10[%c0_23, %c0_24, %c0_25] : memref<2x256x128xbf16, #tpu.memory_space<vmem>>, vector<1x256x128xbf16>
    %18 = vector.shape_cast %17 : vector<1x256x128xbf16> to vector<256x128xbf16>
    %c0_26 = arith.constant 0 : index
    %c0_27 = arith.constant 0 : index
    %c0_28 = arith.constant 0 : index
    %19 = vector.load %arg11[%c0_26, %c0_27, %c0_28] : memref<2x4x128xf32, #tpu.memory_space<vmem>>, vector<1x4x128xf32>
    %20 = vector.shape_cast %19 : vector<1x4x128xf32> to vector<4x128xf32>
    %21 = vector.extract_strided_slice %20 {offsets = [0, 0], sizes = [1, 128], strides = [1, 1]} : vector<4x128xf32> to vector<1x128xf32>
    %22 = vector.extract_strided_slice %20 {offsets = [1, 0], sizes = [1, 128], strides = [1, 1]} : vector<4x128xf32> to vector<1x128xf32>
    %23 = vector.extract_strided_slice %20 {offsets = [2, 0], sizes = [1, 128], strides = [1, 1]} : vector<4x128xf32> to vector<1x128xf32>
    %24 = vector.extract_strided_slice %20 {offsets = [3, 0], sizes = [1, 128], strides = [1, 1]} : vector<4x128xf32> to vector<1x128xf32>
    %25 = arith.truncf %1 : vector<16x128xf32> to vector<16x128xbf16>
    %26 = arith.truncf %1 : vector<16x128xf32> to vector<16x128xbf16>
    %cst = arith.constant dense<0.000000e+00> : vector<16x128xf32>
    %27 = tpu.matmul %25, %9, %cst {dimension_numbers = #tpu.dot_dimension_numbers<[1], [0], [0], [1], [0, 0, 1, 1], [], []>} : vector<16x128xbf16>, vector<128x128xbf16>, vector<16x128xf32> -> vector<16x128xf32>
    %cst_29 = arith.constant dense<0.000000e+00> : vector<16x256xf32>
    %28 = tpu.matmul %26, %10, %cst_29 {dimension_numbers = #tpu.dot_dimension_numbers<[1], [0], [0], [1], [0, 0, 1, 1], [], []>} : vector<16x128xbf16>, vector<128x256xbf16>, vector<16x256xf32> -> vector<16x256xf32>
    %29 = vector.extract_strided_slice %28 {offsets = [0, 0], sizes = [16, 128], strides = [1, 1]} : vector<16x256xf32> to vector<16x128xf32>
    %30 = vector.extract_strided_slice %28 {offsets = [0, 128], sizes = [16, 128], strides = [1, 1]} : vector<16x256xf32> to vector<16x128xf32>
    %cst_30 = arith.constant 0.000000e+00 : f32
    %31 = vector.broadcast %cst_30 : f32 to vector<16x128xf32>
    %32 = arith.cmpf ogt, %27, %31 : vector<16x128xf32>
    %cst_31 = arith.constant 1.000000e+00 : f32
    %33 = vector.broadcast %cst_31 : f32 to vector<16x128xf32>
    %34 = arith.addf %27, %33 : vector<16x128xf32>
    %35 = math.exp %27 : vector<16x128xf32>
    %36 = arith.select %32, %34, %35 : vector<16x128xi1>, vector<16x128xf32>
    %cst_32 = arith.constant 0.000000e+00 : f32
    %37 = vector.broadcast %cst_32 : f32 to vector<16x128xf32>
    %38 = arith.cmpf ogt, %29, %37 : vector<16x128xf32>
    %cst_33 = arith.constant 1.000000e+00 : f32
    %39 = vector.broadcast %cst_33 : f32 to vector<16x128xf32>
    %40 = arith.addf %29, %39 : vector<16x128xf32>
    %41 = math.exp %29 : vector<16x128xf32>
    %42 = arith.select %38, %40, %41 : vector<16x128xi1>, vector<16x128xf32>
    %43 = arith.truncf %42 : vector<16x128xf32> to vector<16x128xbf16>
    %44 = arith.truncf %30 : vector<16x128xf32> to vector<16x128xbf16>
    "tpu.trace_start"() <{level = 10 : i32, message = "sc,sv->cv"}> : () -> ()
    %cst_34 = arith.constant dense<0.000000e+00> : vector<128x128xf32>
    %45 = tpu.matmul %43, %44, %cst_34 {dimension_numbers = #tpu.dot_dimension_numbers<[0], [0], [1], [1], [0, 1, 1, 1], [], []>} : vector<16x128xbf16>, vector<16x128xbf16>, vector<128x128xf32> -> vector<128x128xf32>
    "tpu.trace_stop"() : () -> ()
    %46 = arith.truncf %45 : vector<128x128xf32> to vector<128x128xbf16>
    %47 = arith.mulf %46, %4 : vector<128x128xbf16>
    %48 = arith.truncf %36 : vector<16x128xf32> to vector<16x128xbf16>
    %cst_35 = arith.constant dense<0.000000e+00> : vector<16x128xf32>
    %49 = tpu.matmul %48, %47, %cst_35 {dimension_numbers = #tpu.dot_dimension_numbers<[1], [0], [0], [1], [0, 0, 1, 1], [], []>} : vector<16x128xbf16>, vector<128x128xbf16>, vector<16x128xf32> -> vector<16x128xf32>
    %cst_36 = arith.constant dense<0.000000e+00> : vector<128xf32>
    %50 = vector.multi_reduction <add>, %42, %cst_36 [0] : vector<16x128xf32> to vector<128xf32>
    %51 = vector.shape_cast %50 : vector<128xf32> to vector<1x128xf32>
    %52 = vector.broadcast %51 : vector<1x128xf32> to vector<16x128xf32>
    %53 = arith.mulf %36, %52 : vector<16x128xf32>
    %cst_37 = arith.constant dense<0.000000e+00> : vector<16x4xf32>
    %54 = tpu.matmul %53, %5, %cst_37 {dimension_numbers = #tpu.dot_dimension_numbers<[1], [0], [0], [1], [0, 0, 1, 1], [], []>} : vector<16x128xf32>, vector<128x4xf32>, vector<16x4xf32> -> vector<16x4xf32>
    %cst_38 = arith.constant dense<0.000000e+00> : vector<16x128xf32>
    %55 = tpu.matmul %54, %6, %cst_38 {dimension_numbers = #tpu.dot_dimension_numbers<[1], [0], [0], [1], [0, 0, 1, 1], [], []>} : vector<16x4xf32>, vector<4x128xf32>, vector<16x128xf32> -> vector<16x128xf32>
    %cst_39 = arith.constant 9.99999997E-7 : f32
    %56 = vector.broadcast %cst_39 : f32 to vector<16x128xf32>
    %57 = arith.addf %55, %56 : vector<16x128xf32>
    %58 = tpu.reciprocal %57 : vector<16x128xf32> -> vector<16x128xf32>
    %59 = arith.mulf %49, %58 : vector<16x128xf32>
    %60 = arith.truncf %59 : vector<16x128xf32> to vector<16x128xbf16>
    %cst_40 = arith.constant dense<0.000000e+00> : vector<16x128xf32>
    %61 = tpu.matmul %60, %12, %cst_40 {dimension_numbers = #tpu.dot_dimension_numbers<[1], [0], [0], [1], [0, 0, 1, 1], [], []>} : vector<16x128xbf16>, vector<128x128xbf16>, vector<16x128xf32> -> vector<16x128xf32>
    %cst_41 = arith.constant dense<0.000000e+00> : vector<16xf32>
    %62 = vector.multi_reduction <add>, %61, %cst_41 [1] : vector<16x128xf32> to vector<16xf32>
    %63 = vector.shape_cast %62 : vector<16xf32> to vector<16x1xf32>
    %cst_42 = arith.constant 1.280000e+02 : f32
    %64 = vector.broadcast %cst_42 : f32 to vector<16x1xf32>
    %65 = arith.divf %63, %64 : vector<16x1xf32>
    %66 = vector.broadcast %65 : vector<16x1xf32> to vector<16x128xf32>
    %67 = arith.subf %61, %66 : vector<16x128xf32>
    %68 = arith.mulf %67, %67 : vector<16x128xf32>
    %cst_43 = arith.constant dense<0.000000e+00> : vector<16xf32>
    %69 = vector.multi_reduction <add>, %68, %cst_43 [1] : vector<16x128xf32> to vector<16xf32>
    %70 = vector.shape_cast %69 : vector<16xf32> to vector<16x1xf32>
    %cst_44 = arith.constant 1.280000e+02 : f32
    %71 = vector.broadcast %cst_44 : f32 to vector<16x1xf32>
    %72 = arith.divf %70, %71 : vector<16x1xf32>
    %73 = vector.broadcast %65 : vector<16x1xf32> to vector<16x128xf32>
    %74 = arith.subf %61, %73 : vector<16x128xf32>
    %cst_45 = arith.constant 1.000000e-07 : f32
    %75 = vector.broadcast %cst_45 : f32 to vector<16x1xf32>
    %76 = arith.addf %72, %75 : vector<16x1xf32>
    %77 = math.rsqrt %76 : vector<16x1xf32>
    %78 = vector.broadcast %77 : vector<16x1xf32> to vector<16x128xf32>
    %79 = arith.mulf %74, %78 : vector<16x128xf32>
    %80 = vector.broadcast %21 : vector<1x128xf32> to vector<16x128xf32>
    %81 = arith.mulf %79, %80 : vector<16x128xf32>
    %82 = vector.broadcast %22 : vector<1x128xf32> to vector<16x128xf32>
    %83 = arith.addf %81, %82 : vector<16x128xf32>
    %cst_46 = arith.constant dense<0.000000e+00> : vector<16x256xf32>
    %84 = tpu.matmul %25, %14, %cst_46 {dimension_numbers = #tpu.dot_dimension_numbers<[1], [0], [0], [1], [0, 0, 1, 1], [], []>} : vector<16x128xbf16>, vector<128x256xbf16>, vector<16x256xf32> -> vector<16x256xf32>
    %85 = arith.truncf %83 : vector<16x128xf32> to vector<16x128xbf16>
    %cst_47 = arith.constant dense<0.000000e+00> : vector<16x256xf32>
    %86 = tpu.matmul %85, %16, %cst_47 {dimension_numbers = #tpu.dot_dimension_numbers<[1], [0], [0], [1], [0, 0, 1, 1], [], []>} : vector<16x128xbf16>, vector<128x256xbf16>, vector<16x256xf32> -> vector<16x256xf32>
    %87 = arith.addf %84, %86 : vector<16x256xf32>
    %cst_48 = arith.constant 0.000000e+00 : f32
    %88 = vector.broadcast %cst_48 : f32 to vector<16x256xf32>
    %89 = arith.maximumf %87, %88 : vector<16x256xf32>
    %90 = arith.truncf %89 : vector<16x256xf32> to vector<16x256xbf16>
    %cst_49 = arith.constant dense<0.000000e+00> : vector<16x128xf32>
    %91 = tpu.matmul %90, %18, %cst_49 {dimension_numbers = #tpu.dot_dimension_numbers<[1], [0], [0], [1], [0, 0, 1, 1], [], []>} : vector<16x256xbf16>, vector<256x128xbf16>, vector<16x128xf32> -> vector<16x128xf32>
    %cst_50 = arith.constant dense<0.000000e+00> : vector<16xf32>
    %92 = vector.multi_reduction <add>, %91, %cst_50 [1] : vector<16x128xf32> to vector<16xf32>
    %93 = vector.shape_cast %92 : vector<16xf32> to vector<16x1xf32>
    %cst_51 = arith.constant 1.280000e+02 : f32
    %94 = vector.broadcast %cst_51 : f32 to vector<16x1xf32>
    %95 = arith.divf %93, %94 : vector<16x1xf32>
    %96 = vector.broadcast %95 : vector<16x1xf32> to vector<16x128xf32>
    %97 = arith.subf %91, %96 : vector<16x128xf32>
    %98 = arith.mulf %97, %97 : vector<16x128xf32>
    %cst_52 = arith.constant dense<0.000000e+00> : vector<16xf32>
    %99 = vector.multi_reduction <add>, %98, %cst_52 [1] : vector<16x128xf32> to vector<16xf32>
    %100 = vector.shape_cast %99 : vector<16xf32> to vector<16x1xf32>
    %cst_53 = arith.constant 1.280000e+02 : f32
    %101 = vector.broadcast %cst_53 : f32 to vector<16x1xf32>
    %102 = arith.divf %100, %101 : vector<16x1xf32>
    %103 = vector.broadcast %95 : vector<16x1xf32> to vector<16x128xf32>
    %104 = arith.subf %91, %103 : vector<16x128xf32>
    %cst_54 = arith.constant 1.000000e-07 : f32
    %105 = vector.broadcast %cst_54 : f32 to vector<16x1xf32>
    %106 = arith.addf %102, %105 : vector<16x1xf32>
    %107 = math.rsqrt %106 : vector<16x1xf32>
    %108 = vector.broadcast %107 : vector<16x1xf32> to vector<16x128xf32>
    %109 = arith.mulf %104, %108 : vector<16x128xf32>
    %110 = vector.broadcast %23 : vector<1x128xf32> to vector<16x128xf32>
    %111 = arith.mulf %109, %110 : vector<16x128xf32>
    %112 = vector.broadcast %24 : vector<1x128xf32> to vector<16x128xf32>
    %113 = arith.addf %111, %112 : vector<16x128xf32>
    %114 = arith.addf %1, %113 : vector<16x128xf32>
    %115 = arith.truncf %3 : vector<24x128xf32> to vector<24x128xbf16>
    %116 = arith.truncf %3 : vector<24x128xf32> to vector<24x128xbf16>
    %cst_55 = arith.constant dense<0.000000e+00> : vector<24x128xf32>
    %117 = tpu.matmul %115, %9, %cst_55 {dimension_numbers = #tpu.dot_dimension_numbers<[1], [0], [0], [1], [0, 0, 1, 1], [], []>} : vector<24x128xbf16>, vector<128x128xbf16>, vector<24x128xf32> -> vector<24x128xf32>
    %cst_56 = arith.constant dense<0.000000e+00> : vector<24x256xf32>
    %118 = tpu.matmul %116, %10, %cst_56 {dimension_numbers = #tpu.dot_dimension_numbers<[1], [0], [0], [1], [0, 0, 1, 1], [], []>} : vector<24x128xbf16>, vector<128x256xbf16>, vector<24x256xf32> -> vector<24x256xf32>
    %119 = vector.extract_strided_slice %118 {offsets = [0, 0], sizes = [24, 128], strides = [1, 1]} : vector<24x256xf32> to vector<24x128xf32>
    %120 = vector.extract_strided_slice %118 {offsets = [0, 128], sizes = [24, 128], strides = [1, 1]} : vector<24x256xf32> to vector<24x128xf32>
    %cst_57 = arith.constant 0.000000e+00 : f32
    %121 = vector.broadcast %cst_57 : f32 to vector<24x128xf32>
    %122 = arith.cmpf ogt, %117, %121 : vector<24x128xf32>
    %cst_58 = arith.constant 1.000000e+00 : f32
    %123 = vector.broadcast %cst_58 : f32 to vector<24x128xf32>
    %124 = arith.addf %117, %123 : vector<24x128xf32>
    %125 = math.exp %117 : vector<24x128xf32>
    %126 = arith.select %122, %124, %125 : vector<24x128xi1>, vector<24x128xf32>
    %cst_59 = arith.constant 0.000000e+00 : f32
    %127 = vector.broadcast %cst_59 : f32 to vector<24x128xf32>
    %128 = arith.cmpf ogt, %119, %127 : vector<24x128xf32>
    %cst_60 = arith.constant 1.000000e+00 : f32
    %129 = vector.broadcast %cst_60 : f32 to vector<24x128xf32>
    %130 = arith.addf %119, %129 : vector<24x128xf32>
    %131 = math.exp %119 : vector<24x128xf32>
    %132 = arith.select %128, %130, %131 : vector<24x128xi1>, vector<24x128xf32>
    %133 = arith.truncf %132 : vector<24x128xf32> to vector<24x128xbf16>
    %134 = arith.truncf %120 : vector<24x128xf32> to vector<24x128xbf16>
    "tpu.trace_start"() <{level = 10 : i32, message = "sc,sv->cv"}> : () -> ()
    %cst_61 = arith.constant dense<0.000000e+00> : vector<128x128xf32>
    %135 = tpu.matmul %133, %134, %cst_61 {dimension_numbers = #tpu.dot_dimension_numbers<[0], [0], [1], [1], [0, 1, 1, 1], [], []>} : vector<24x128xbf16>, vector<24x128xbf16>, vector<128x128xf32> -> vector<128x128xf32>
    "tpu.trace_stop"() : () -> ()
    %136 = arith.truncf %135 : vector<128x128xf32> to vector<128x128xbf16>
    %137 = arith.mulf %136, %4 : vector<128x128xbf16>
    %138 = arith.truncf %126 : vector<24x128xf32> to vector<24x128xbf16>
    %cst_62 = arith.constant dense<0.000000e+00> : vector<24x128xf32>
    %139 = tpu.matmul %138, %137, %cst_62 {dimension_numbers = #tpu.dot_dimension_numbers<[1], [0], [0], [1], [0, 0, 1, 1], [], []>} : vector<24x128xbf16>, vector<128x128xbf16>, vector<24x128xf32> -> vector<24x128xf32>
    %cst_63 = arith.constant dense<0.000000e+00> : vector<128xf32>
    %140 = vector.multi_reduction <add>, %132, %cst_63 [0] : vector<24x128xf32> to vector<128xf32>
    %141 = vector.shape_cast %140 : vector<128xf32> to vector<1x128xf32>
    %142 = vector.broadcast %141 : vector<1x128xf32> to vector<24x128xf32>
    %143 = arith.mulf %126, %142 : vector<24x128xf32>
    %cst_64 = arith.constant dense<0.000000e+00> : vector<24x4xf32>
    %144 = tpu.matmul %143, %5, %cst_64 {dimension_numbers = #tpu.dot_dimension_numbers<[1], [0], [0], [1], [0, 0, 1, 1], [], []>} : vector<24x128xf32>, vector<128x4xf32>, vector<24x4xf32> -> vector<24x4xf32>
    %cst_65 = arith.constant dense<0.000000e+00> : vector<24x128xf32>
    %145 = tpu.matmul %144, %6, %cst_65 {dimension_numbers = #tpu.dot_dimension_numbers<[1], [0], [0], [1], [0, 0, 1, 1], [], []>} : vector<24x4xf32>, vector<4x128xf32>, vector<24x128xf32> -> vector<24x128xf32>
    %cst_66 = arith.constant 9.99999997E-7 : f32
    %146 = vector.broadcast %cst_66 : f32 to vector<24x128xf32>
    %147 = arith.addf %145, %146 : vector<24x128xf32>
    %148 = tpu.reciprocal %147 : vector<24x128xf32> -> vector<24x128xf32>
    %149 = arith.mulf %139, %148 : vector<24x128xf32>
    %150 = arith.truncf %149 : vector<24x128xf32> to vector<24x128xbf16>
    %cst_67 = arith.constant dense<0.000000e+00> : vector<24x128xf32>
    %151 = tpu.matmul %150, %12, %cst_67 {dimension_numbers = #tpu.dot_dimension_numbers<[1], [0], [0], [1], [0, 0, 1, 1], [], []>} : vector<24x128xbf16>, vector<128x128xbf16>, vector<24x128xf32> -> vector<24x128xf32>
    %cst_68 = arith.constant dense<0.000000e+00> : vector<24xf32>
    %152 = vector.multi_reduction <add>, %151, %cst_68 [1] : vector<24x128xf32> to vector<24xf32>
    %153 = vector.shape_cast %152 : vector<24xf32> to vector<24x1xf32>
    %cst_69 = arith.constant 1.280000e+02 : f32
    %154 = vector.broadcast %cst_69 : f32 to vector<24x1xf32>
    %155 = arith.divf %153, %154 : vector<24x1xf32>
    %156 = vector.broadcast %155 : vector<24x1xf32> to vector<24x128xf32>
    %157 = arith.subf %151, %156 : vector<24x128xf32>
    %158 = arith.mulf %157, %157 : vector<24x128xf32>
    %cst_70 = arith.constant dense<0.000000e+00> : vector<24xf32>
    %159 = vector.multi_reduction <add>, %158, %cst_70 [1] : vector<24x128xf32> to vector<24xf32>
    %160 = vector.shape_cast %159 : vector<24xf32> to vector<24x1xf32>
    %cst_71 = arith.constant 1.280000e+02 : f32
    %161 = vector.broadcast %cst_71 : f32 to vector<24x1xf32>
    %162 = arith.divf %160, %161 : vector<24x1xf32>
    %163 = vector.broadcast %155 : vector<24x1xf32> to vector<24x128xf32>
    %164 = arith.subf %151, %163 : vector<24x128xf32>
    %cst_72 = arith.constant 1.000000e-07 : f32
    %165 = vector.broadcast %cst_72 : f32 to vector<24x1xf32>
    %166 = arith.addf %162, %165 : vector<24x1xf32>
    %167 = math.rsqrt %166 : vector<24x1xf32>
    %168 = vector.broadcast %167 : vector<24x1xf32> to vector<24x128xf32>
    %169 = arith.mulf %164, %168 : vector<24x128xf32>
    %170 = vector.broadcast %21 : vector<1x128xf32> to vector<24x128xf32>
    %171 = arith.mulf %169, %170 : vector<24x128xf32>
    %172 = vector.broadcast %22 : vector<1x128xf32> to vector<24x128xf32>
    %173 = arith.addf %171, %172 : vector<24x128xf32>
    %cst_73 = arith.constant dense<0.000000e+00> : vector<24x256xf32>
    %174 = tpu.matmul %115, %14, %cst_73 {dimension_numbers = #tpu.dot_dimension_numbers<[1], [0], [0], [1], [0, 0, 1, 1], [], []>} : vector<24x128xbf16>, vector<128x256xbf16>, vector<24x256xf32> -> vector<24x256xf32>
    %175 = arith.truncf %173 : vector<24x128xf32> to vector<24x128xbf16>
    %cst_74 = arith.constant dense<0.000000e+00> : vector<24x256xf32>
    %176 = tpu.matmul %175, %16, %cst_74 {dimension_numbers = #tpu.dot_dimension_numbers<[1], [0], [0], [1], [0, 0, 1, 1], [], []>} : vector<24x128xbf16>, vector<128x256xbf16>, vector<24x256xf32> -> vector<24x256xf32>
    %177 = arith.addf %174, %176 : vector<24x256xf32>
    %cst_75 = arith.constant 0.000000e+00 : f32
    %178 = vector.broadcast %cst_75 : f32 to vector<24x256xf32>
    %179 = arith.maximumf %177, %178 : vector<24x256xf32>
    %180 = arith.truncf %179 : vector<24x256xf32> to vector<24x256xbf16>
    %cst_76 = arith.constant dense<0.000000e+00> : vector<24x128xf32>
    %181 = tpu.matmul %180, %18, %cst_76 {dimension_numbers = #tpu.dot_dimension_numbers<[1], [0], [0], [1], [0, 0, 1, 1], [], []>} : vector<24x256xbf16>, vector<256x128xbf16>, vector<24x128xf32> -> vector<24x128xf32>
    %cst_77 = arith.constant dense<0.000000e+00> : vector<24xf32>
    %182 = vector.multi_reduction <add>, %181, %cst_77 [1] : vector<24x128xf32> to vector<24xf32>
    %183 = vector.shape_cast %182 : vector<24xf32> to vector<24x1xf32>
    %cst_78 = arith.constant 1.280000e+02 : f32
    %184 = vector.broadcast %cst_78 : f32 to vector<24x1xf32>
    %185 = arith.divf %183, %184 : vector<24x1xf32>
    %186 = vector.broadcast %185 : vector<24x1xf32> to vector<24x128xf32>
    %187 = arith.subf %181, %186 : vector<24x128xf32>
    %188 = arith.mulf %187, %187 : vector<24x128xf32>
    %cst_79 = arith.constant dense<0.000000e+00> : vector<24xf32>
    %189 = vector.multi_reduction <add>, %188, %cst_79 [1] : vector<24x128xf32> to vector<24xf32>
    %190 = vector.shape_cast %189 : vector<24xf32> to vector<24x1xf32>
    %cst_80 = arith.constant 1.280000e+02 : f32
    %191 = vector.broadcast %cst_80 : f32 to vector<24x1xf32>
    %192 = arith.divf %190, %191 : vector<24x1xf32>
    %193 = vector.broadcast %185 : vector<24x1xf32> to vector<24x128xf32>
    %194 = arith.subf %181, %193 : vector<24x128xf32>
    %cst_81 = arith.constant 1.000000e-07 : f32
    %195 = vector.broadcast %cst_81 : f32 to vector<24x1xf32>
    %196 = arith.addf %192, %195 : vector<24x1xf32>
    %197 = math.rsqrt %196 : vector<24x1xf32>
    %198 = vector.broadcast %197 : vector<24x1xf32> to vector<24x128xf32>
    %199 = arith.mulf %194, %198 : vector<24x128xf32>
    %200 = vector.broadcast %23 : vector<1x128xf32> to vector<24x128xf32>
    %201 = arith.mulf %199, %200 : vector<24x128xf32>
    %202 = vector.broadcast %24 : vector<1x128xf32> to vector<24x128xf32>
    %203 = arith.addf %201, %202 : vector<24x128xf32>
    %204 = arith.addf %3, %203 : vector<24x128xf32>
    %c1 = arith.constant 1 : index
    %c0_82 = arith.constant 0 : index
    %c0_83 = arith.constant 0 : index
    %205 = vector.load %arg6[%c1, %c0_82, %c0_83] : memref<2x128x384xbf16, #tpu.memory_space<vmem>>, vector<1x128x384xbf16>
    %206 = vector.shape_cast %205 : vector<1x128x384xbf16> to vector<128x384xbf16>
    %207 = vector.extract_strided_slice %206 {offsets = [0, 0], sizes = [128, 128], strides = [1, 1]} : vector<128x384xbf16> to vector<128x128xbf16>
    %208 = vector.extract_strided_slice %206 {offsets = [0, 128], sizes = [128, 256], strides = [1, 1]} : vector<128x384xbf16> to vector<128x256xbf16>
    %c1_84 = arith.constant 1 : index
    %c0_85 = arith.constant 0 : index
    %c0_86 = arith.constant 0 : index
    %209 = vector.load %arg7[%c1_84, %c0_85, %c0_86] : memref<2x128x128xbf16, #tpu.memory_space<vmem>>, vector<1x128x128xbf16>
    %210 = vector.shape_cast %209 : vector<1x128x128xbf16> to vector<128x128xbf16>
    %c1_87 = arith.constant 1 : index
    %c0_88 = arith.constant 0 : index
    %c0_89 = arith.constant 0 : index
    %211 = vector.load %arg8[%c1_87, %c0_88, %c0_89] : memref<2x128x256xbf16, #tpu.memory_space<vmem>>, vector<1x128x256xbf16>
    %212 = vector.shape_cast %211 : vector<1x128x256xbf16> to vector<128x256xbf16>
    %c1_90 = arith.constant 1 : index
    %c0_91 = arith.constant 0 : index
    %c0_92 = arith.constant 0 : index
    %213 = vector.load %arg9[%c1_90, %c0_91, %c0_92] : memref<2x128x256xbf16, #tpu.memory_space<vmem>>, vector<1x128x256xbf16>
    %214 = vector.shape_cast %213 : vector<1x128x256xbf16> to vector<128x256xbf16>
    %c1_93 = arith.constant 1 : index
    %c0_94 = arith.constant 0 : index
    %c0_95 = arith.constant 0 : index
    %215 = vector.load %arg10[%c1_93, %c0_94, %c0_95] : memref<2x256x128xbf16, #tpu.memory_space<vmem>>, vector<1x256x128xbf16>
    %216 = vector.shape_cast %215 : vector<1x256x128xbf16> to vector<256x128xbf16>
    %c1_96 = arith.constant 1 : index
    %c0_97 = arith.constant 0 : index
    %c0_98 = arith.constant 0 : index
    %217 = vector.load %arg11[%c1_96, %c0_97, %c0_98] : memref<2x4x128xf32, #tpu.memory_space<vmem>>, vector<1x4x128xf32>
    %218 = vector.shape_cast %217 : vector<1x4x128xf32> to vector<4x128xf32>
    %219 = vector.extract_strided_slice %218 {offsets = [0, 0], sizes = [1, 128], strides = [1, 1]} : vector<4x128xf32> to vector<1x128xf32>
    %220 = vector.extract_strided_slice %218 {offsets = [1, 0], sizes = [1, 128], strides = [1, 1]} : vector<4x128xf32> to vector<1x128xf32>
    %221 = vector.extract_strided_slice %218 {offsets = [2, 0], sizes = [1, 128], strides = [1, 1]} : vector<4x128xf32> to vector<1x128xf32>
    %222 = vector.extract_strided_slice %218 {offsets = [3, 0], sizes = [1, 128], strides = [1, 1]} : vector<4x128xf32> to vector<1x128xf32>
    %223 = arith.truncf %114 : vector<16x128xf32> to vector<16x128xbf16>
    %224 = arith.truncf %204 : vector<24x128xf32> to vector<24x128xbf16>
    %cst_99 = arith.constant dense<0.000000e+00> : vector<16x128xf32>
    %225 = tpu.matmul %223, %207, %cst_99 {dimension_numbers = #tpu.dot_dimension_numbers<[1], [0], [0], [1], [0, 0, 1, 1], [], []>} : vector<16x128xbf16>, vector<128x128xbf16>, vector<16x128xf32> -> vector<16x128xf32>
    %cst_100 = arith.constant dense<0.000000e+00> : vector<24x256xf32>
    %226 = tpu.matmul %224, %208, %cst_100 {dimension_numbers = #tpu.dot_dimension_numbers<[1], [0], [0], [1], [0, 0, 1, 1], [], []>} : vector<24x128xbf16>, vector<128x256xbf16>, vector<24x256xf32> -> vector<24x256xf32>
    %227 = vector.extract_strided_slice %226 {offsets = [0, 0], sizes = [24, 128], strides = [1, 1]} : vector<24x256xf32> to vector<24x128xf32>
    %228 = vector.extract_strided_slice %226 {offsets = [0, 128], sizes = [24, 128], strides = [1, 1]} : vector<24x256xf32> to vector<24x128xf32>
    %cst_101 = arith.constant 0.000000e+00 : f32
    %229 = vector.broadcast %cst_101 : f32 to vector<16x128xf32>
    %230 = arith.cmpf ogt, %225, %229 : vector<16x128xf32>
    %cst_102 = arith.constant 1.000000e+00 : f32
    %231 = vector.broadcast %cst_102 : f32 to vector<16x128xf32>
    %232 = arith.addf %225, %231 : vector<16x128xf32>
    %233 = math.exp %225 : vector<16x128xf32>
    %234 = arith.select %230, %232, %233 : vector<16x128xi1>, vector<16x128xf32>
    %cst_103 = arith.constant 0.000000e+00 : f32
    %235 = vector.broadcast %cst_103 : f32 to vector<24x128xf32>
    %236 = arith.cmpf ogt, %227, %235 : vector<24x128xf32>
    %cst_104 = arith.constant 1.000000e+00 : f32
    %237 = vector.broadcast %cst_104 : f32 to vector<24x128xf32>
    %238 = arith.addf %227, %237 : vector<24x128xf32>
    %239 = math.exp %227 : vector<24x128xf32>
    %240 = arith.select %236, %238, %239 : vector<24x128xi1>, vector<24x128xf32>
    %241 = arith.truncf %240 : vector<24x128xf32> to vector<24x128xbf16>
    %242 = arith.truncf %228 : vector<24x128xf32> to vector<24x128xbf16>
    "tpu.trace_start"() <{level = 10 : i32, message = "sc,sv->cv"}> : () -> ()
    %cst_105 = arith.constant dense<0.000000e+00> : vector<128x128xf32>
    %243 = tpu.matmul %241, %242, %cst_105 {dimension_numbers = #tpu.dot_dimension_numbers<[0], [0], [1], [1], [0, 1, 1, 1], [], []>} : vector<24x128xbf16>, vector<24x128xbf16>, vector<128x128xf32> -> vector<128x128xf32>
    "tpu.trace_stop"() : () -> ()
    %244 = arith.truncf %243 : vector<128x128xf32> to vector<128x128xbf16>
    %245 = arith.mulf %244, %4 : vector<128x128xbf16>
    %246 = arith.truncf %234 : vector<16x128xf32> to vector<16x128xbf16>
    %cst_106 = arith.constant dense<0.000000e+00> : vector<16x128xf32>
    %247 = tpu.matmul %246, %245, %cst_106 {dimension_numbers = #tpu.dot_dimension_numbers<[1], [0], [0], [1], [0, 0, 1, 1], [], []>} : vector<16x128xbf16>, vector<128x128xbf16>, vector<16x128xf32> -> vector<16x128xf32>
    %cst_107 = arith.constant dense<0.000000e+00> : vector<128xf32>
    %248 = vector.multi_reduction <add>, %240, %cst_107 [0] : vector<24x128xf32> to vector<128xf32>
    %249 = vector.shape_cast %248 : vector<128xf32> to vector<1x128xf32>
    %250 = vector.broadcast %249 : vector<1x128xf32> to vector<16x128xf32>
    %251 = arith.mulf %234, %250 : vector<16x128xf32>
    %cst_108 = arith.constant dense<0.000000e+00> : vector<16x4xf32>
    %252 = tpu.matmul %251, %5, %cst_108 {dimension_numbers = #tpu.dot_dimension_numbers<[1], [0], [0], [1], [0, 0, 1, 1], [], []>} : vector<16x128xf32>, vector<128x4xf32>, vector<16x4xf32> -> vector<16x4xf32>
    %cst_109 = arith.constant dense<0.000000e+00> : vector<16x128xf32>
    %253 = tpu.matmul %252, %6, %cst_109 {dimension_numbers = #tpu.dot_dimension_numbers<[1], [0], [0], [1], [0, 0, 1, 1], [], []>} : vector<16x4xf32>, vector<4x128xf32>, vector<16x128xf32> -> vector<16x128xf32>
    %cst_110 = arith.constant 9.99999997E-7 : f32
    %254 = vector.broadcast %cst_110 : f32 to vector<16x128xf32>
    %255 = arith.addf %253, %254 : vector<16x128xf32>
    %256 = tpu.reciprocal %255 : vector<16x128xf32> -> vector<16x128xf32>
    %257 = arith.mulf %247, %256 : vector<16x128xf32>
    %258 = arith.truncf %257 : vector<16x128xf32> to vector<16x128xbf16>
    %cst_111 = arith.constant dense<0.000000e+00> : vector<16x128xf32>
    %259 = tpu.matmul %258, %210, %cst_111 {dimension_numbers = #tpu.dot_dimension_numbers<[1], [0], [0], [1], [0, 0, 1, 1], [], []>} : vector<16x128xbf16>, vector<128x128xbf16>, vector<16x128xf32> -> vector<16x128xf32>
    %cst_112 = arith.constant dense<0.000000e+00> : vector<16xf32>
    %260 = vector.multi_reduction <add>, %259, %cst_112 [1] : vector<16x128xf32> to vector<16xf32>
    %261 = vector.shape_cast %260 : vector<16xf32> to vector<16x1xf32>
    %cst_113 = arith.constant 1.280000e+02 : f32
    %262 = vector.broadcast %cst_113 : f32 to vector<16x1xf32>
    %263 = arith.divf %261, %262 : vector<16x1xf32>
    %264 = vector.broadcast %263 : vector<16x1xf32> to vector<16x128xf32>
    %265 = arith.subf %259, %264 : vector<16x128xf32>
    %266 = arith.mulf %265, %265 : vector<16x128xf32>
    %cst_114 = arith.constant dense<0.000000e+00> : vector<16xf32>
    %267 = vector.multi_reduction <add>, %266, %cst_114 [1] : vector<16x128xf32> to vector<16xf32>
    %268 = vector.shape_cast %267 : vector<16xf32> to vector<16x1xf32>
    %cst_115 = arith.constant 1.280000e+02 : f32
    %269 = vector.broadcast %cst_115 : f32 to vector<16x1xf32>
    %270 = arith.divf %268, %269 : vector<16x1xf32>
    %271 = vector.broadcast %263 : vector<16x1xf32> to vector<16x128xf32>
    %272 = arith.subf %259, %271 : vector<16x128xf32>
    %cst_116 = arith.constant 1.000000e-07 : f32
    %273 = vector.broadcast %cst_116 : f32 to vector<16x1xf32>
    %274 = arith.addf %270, %273 : vector<16x1xf32>
    %275 = math.rsqrt %274 : vector<16x1xf32>
    %276 = vector.broadcast %275 : vector<16x1xf32> to vector<16x128xf32>
    %277 = arith.mulf %272, %276 : vector<16x128xf32>
    %278 = vector.broadcast %219 : vector<1x128xf32> to vector<16x128xf32>
    %279 = arith.mulf %277, %278 : vector<16x128xf32>
    %280 = vector.broadcast %220 : vector<1x128xf32> to vector<16x128xf32>
    %281 = arith.addf %279, %280 : vector<16x128xf32>
    %cst_117 = arith.constant dense<0.000000e+00> : vector<16x256xf32>
    %282 = tpu.matmul %223, %212, %cst_117 {dimension_numbers = #tpu.dot_dimension_numbers<[1], [0], [0], [1], [0, 0, 1, 1], [], []>} : vector<16x128xbf16>, vector<128x256xbf16>, vector<16x256xf32> -> vector<16x256xf32>
    %283 = arith.truncf %281 : vector<16x128xf32> to vector<16x128xbf16>
    %cst_118 = arith.constant dense<0.000000e+00> : vector<16x256xf32>
    %284 = tpu.matmul %283, %214, %cst_118 {dimension_numbers = #tpu.dot_dimension_numbers<[1], [0], [0], [1], [0, 0, 1, 1], [], []>} : vector<16x128xbf16>, vector<128x256xbf16>, vector<16x256xf32> -> vector<16x256xf32>
    %285 = arith.addf %282, %284 : vector<16x256xf32>
    %cst_119 = arith.constant 0.000000e+00 : f32
    %286 = vector.broadcast %cst_119 : f32 to vector<16x256xf32>
    %287 = arith.maximumf %285, %286 : vector<16x256xf32>
    %288 = arith.truncf %287 : vector<16x256xf32> to vector<16x256xbf16>
    %cst_120 = arith.constant dense<0.000000e+00> : vector<16x128xf32>
    %289 = tpu.matmul %288, %216, %cst_120 {dimension_numbers = #tpu.dot_dimension_numbers<[1], [0], [0], [1], [0, 0, 1, 1], [], []>} : vector<16x256xbf16>, vector<256x128xbf16>, vector<16x128xf32> -> vector<16x128xf32>
    %cst_121 = arith.constant dense<0.000000e+00> : vector<16xf32>
    %290 = vector.multi_reduction <add>, %289, %cst_121 [1] : vector<16x128xf32> to vector<16xf32>
    %291 = vector.shape_cast %290 : vector<16xf32> to vector<16x1xf32>
    %cst_122 = arith.constant 1.280000e+02 : f32
    %292 = vector.broadcast %cst_122 : f32 to vector<16x1xf32>
    %293 = arith.divf %291, %292 : vector<16x1xf32>
    %294 = vector.broadcast %293 : vector<16x1xf32> to vector<16x128xf32>
    %295 = arith.subf %289, %294 : vector<16x128xf32>
    %296 = arith.mulf %295, %295 : vector<16x128xf32>
    %cst_123 = arith.constant dense<0.000000e+00> : vector<16xf32>
    %297 = vector.multi_reduction <add>, %296, %cst_123 [1] : vector<16x128xf32> to vector<16xf32>
    %298 = vector.shape_cast %297 : vector<16xf32> to vector<16x1xf32>
    %cst_124 = arith.constant 1.280000e+02 : f32
    %299 = vector.broadcast %cst_124 : f32 to vector<16x1xf32>
    %300 = arith.divf %298, %299 : vector<16x1xf32>
    %301 = vector.broadcast %293 : vector<16x1xf32> to vector<16x128xf32>
    %302 = arith.subf %289, %301 : vector<16x128xf32>
    %cst_125 = arith.constant 1.000000e-07 : f32
    %303 = vector.broadcast %cst_125 : f32 to vector<16x1xf32>
    %304 = arith.addf %300, %303 : vector<16x1xf32>
    %305 = math.rsqrt %304 : vector<16x1xf32>
    %306 = vector.broadcast %305 : vector<16x1xf32> to vector<16x128xf32>
    %307 = arith.mulf %302, %306 : vector<16x128xf32>
    %308 = vector.broadcast %221 : vector<1x128xf32> to vector<16x128xf32>
    %309 = arith.mulf %307, %308 : vector<16x128xf32>
    %310 = vector.broadcast %222 : vector<1x128xf32> to vector<16x128xf32>
    %311 = arith.addf %309, %310 : vector<16x128xf32>
    %312 = arith.addf %114, %311 : vector<16x128xf32>
    %313 = arith.truncf %204 : vector<24x128xf32> to vector<24x128xbf16>
    %314 = arith.truncf %312 : vector<16x128xf32> to vector<16x128xbf16>
    %cst_126 = arith.constant dense<0.000000e+00> : vector<24x128xf32>
    %315 = tpu.matmul %313, %207, %cst_126 {dimension_numbers = #tpu.dot_dimension_numbers<[1], [0], [0], [1], [0, 0, 1, 1], [], []>} : vector<24x128xbf16>, vector<128x128xbf16>, vector<24x128xf32> -> vector<24x128xf32>
    %cst_127 = arith.constant dense<0.000000e+00> : vector<16x256xf32>
    %316 = tpu.matmul %314, %208, %cst_127 {dimension_numbers = #tpu.dot_dimension_numbers<[1], [0], [0], [1], [0, 0, 1, 1], [], []>} : vector<16x128xbf16>, vector<128x256xbf16>, vector<16x256xf32> -> vector<16x256xf32>
    %317 = vector.extract_strided_slice %316 {offsets = [0, 0], sizes = [16, 128], strides = [1, 1]} : vector<16x256xf32> to vector<16x128xf32>
    %318 = vector.extract_strided_slice %316 {offsets = [0, 128], sizes = [16, 128], strides = [1, 1]} : vector<16x256xf32> to vector<16x128xf32>
    %cst_128 = arith.constant 0.000000e+00 : f32
    %319 = vector.broadcast %cst_128 : f32 to vector<24x128xf32>
    %320 = arith.cmpf ogt, %315, %319 : vector<24x128xf32>
    %cst_129 = arith.constant 1.000000e+00 : f32
    %321 = vector.broadcast %cst_129 : f32 to vector<24x128xf32>
    %322 = arith.addf %315, %321 : vector<24x128xf32>
    %323 = math.exp %315 : vector<24x128xf32>
    %324 = arith.select %320, %322, %323 : vector<24x128xi1>, vector<24x128xf32>
    %cst_130 = arith.constant 0.000000e+00 : f32
    %325 = vector.broadcast %cst_130 : f32 to vector<16x128xf32>
    %326 = arith.cmpf ogt, %317, %325 : vector<16x128xf32>
    %cst_131 = arith.constant 1.000000e+00 : f32
    %327 = vector.broadcast %cst_131 : f32 to vector<16x128xf32>
    %328 = arith.addf %317, %327 : vector<16x128xf32>
    %329 = math.exp %317 : vector<16x128xf32>
    %330 = arith.select %326, %328, %329 : vector<16x128xi1>, vector<16x128xf32>
    %331 = arith.truncf %330 : vector<16x128xf32> to vector<16x128xbf16>
    %332 = arith.truncf %318 : vector<16x128xf32> to vector<16x128xbf16>
    "tpu.trace_start"() <{level = 10 : i32, message = "sc,sv->cv"}> : () -> ()
    %cst_132 = arith.constant dense<0.000000e+00> : vector<128x128xf32>
    %333 = tpu.matmul %331, %332, %cst_132 {dimension_numbers = #tpu.dot_dimension_numbers<[0], [0], [1], [1], [0, 1, 1, 1], [], []>} : vector<16x128xbf16>, vector<16x128xbf16>, vector<128x128xf32> -> vector<128x128xf32>
    "tpu.trace_stop"() : () -> ()
    %334 = arith.truncf %333 : vector<128x128xf32> to vector<128x128xbf16>
    %335 = arith.mulf %334, %4 : vector<128x128xbf16>
    %336 = arith.truncf %324 : vector<24x128xf32> to vector<24x128xbf16>
    %cst_133 = arith.constant dense<0.000000e+00> : vector<24x128xf32>
    %337 = tpu.matmul %336, %335, %cst_133 {dimension_numbers = #tpu.dot_dimension_numbers<[1], [0], [0], [1], [0, 0, 1, 1], [], []>} : vector<24x128xbf16>, vector<128x128xbf16>, vector<24x128xf32> -> vector<24x128xf32>
    %cst_134 = arith.constant dense<0.000000e+00> : vector<128xf32>
    %338 = vector.multi_reduction <add>, %330, %cst_134 [0] : vector<16x128xf32> to vector<128xf32>
    %339 = vector.shape_cast %338 : vector<128xf32> to vector<1x128xf32>
    %340 = vector.broadcast %339 : vector<1x128xf32> to vector<24x128xf32>
    %341 = arith.mulf %324, %340 : vector<24x128xf32>
    %cst_135 = arith.constant dense<0.000000e+00> : vector<24x4xf32>
    %342 = tpu.matmul %341, %5, %cst_135 {dimension_numbers = #tpu.dot_dimension_numbers<[1], [0], [0], [1], [0, 0, 1, 1], [], []>} : vector<24x128xf32>, vector<128x4xf32>, vector<24x4xf32> -> vector<24x4xf32>
    %cst_136 = arith.constant dense<0.000000e+00> : vector<24x128xf32>
    %343 = tpu.matmul %342, %6, %cst_136 {dimension_numbers = #tpu.dot_dimension_numbers<[1], [0], [0], [1], [0, 0, 1, 1], [], []>} : vector<24x4xf32>, vector<4x128xf32>, vector<24x128xf32> -> vector<24x128xf32>
    %cst_137 = arith.constant 9.99999997E-7 : f32
    %344 = vector.broadcast %cst_137 : f32 to vector<24x128xf32>
    %345 = arith.addf %343, %344 : vector<24x128xf32>
    %346 = tpu.reciprocal %345 : vector<24x128xf32> -> vector<24x128xf32>
    %347 = arith.mulf %337, %346 : vector<24x128xf32>
    %348 = arith.truncf %347 : vector<24x128xf32> to vector<24x128xbf16>
    %cst_138 = arith.constant dense<0.000000e+00> : vector<24x128xf32>
    %349 = tpu.matmul %348, %210, %cst_138 {dimension_numbers = #tpu.dot_dimension_numbers<[1], [0], [0], [1], [0, 0, 1, 1], [], []>} : vector<24x128xbf16>, vector<128x128xbf16>, vector<24x128xf32> -> vector<24x128xf32>
    %cst_139 = arith.constant dense<0.000000e+00> : vector<24xf32>
    %350 = vector.multi_reduction <add>, %349, %cst_139 [1] : vector<24x128xf32> to vector<24xf32>
    %351 = vector.shape_cast %350 : vector<24xf32> to vector<24x1xf32>
    %cst_140 = arith.constant 1.280000e+02 : f32
    %352 = vector.broadcast %cst_140 : f32 to vector<24x1xf32>
    %353 = arith.divf %351, %352 : vector<24x1xf32>
    %354 = vector.broadcast %353 : vector<24x1xf32> to vector<24x128xf32>
    %355 = arith.subf %349, %354 : vector<24x128xf32>
    %356 = arith.mulf %355, %355 : vector<24x128xf32>
    %cst_141 = arith.constant dense<0.000000e+00> : vector<24xf32>
    %357 = vector.multi_reduction <add>, %356, %cst_141 [1] : vector<24x128xf32> to vector<24xf32>
    %358 = vector.shape_cast %357 : vector<24xf32> to vector<24x1xf32>
    %cst_142 = arith.constant 1.280000e+02 : f32
    %359 = vector.broadcast %cst_142 : f32 to vector<24x1xf32>
    %360 = arith.divf %358, %359 : vector<24x1xf32>
    %361 = vector.broadcast %353 : vector<24x1xf32> to vector<24x128xf32>
    %362 = arith.subf %349, %361 : vector<24x128xf32>
    %cst_143 = arith.constant 1.000000e-07 : f32
    %363 = vector.broadcast %cst_143 : f32 to vector<24x1xf32>
    %364 = arith.addf %360, %363 : vector<24x1xf32>
    %365 = math.rsqrt %364 : vector<24x1xf32>
    %366 = vector.broadcast %365 : vector<24x1xf32> to vector<24x128xf32>
    %367 = arith.mulf %362, %366 : vector<24x128xf32>
    %368 = vector.broadcast %219 : vector<1x128xf32> to vector<24x128xf32>
    %369 = arith.mulf %367, %368 : vector<24x128xf32>
    %370 = vector.broadcast %220 : vector<1x128xf32> to vector<24x128xf32>
    %371 = arith.addf %369, %370 : vector<24x128xf32>
    %cst_144 = arith.constant dense<0.000000e+00> : vector<24x256xf32>
    %372 = tpu.matmul %313, %212, %cst_144 {dimension_numbers = #tpu.dot_dimension_numbers<[1], [0], [0], [1], [0, 0, 1, 1], [], []>} : vector<24x128xbf16>, vector<128x256xbf16>, vector<24x256xf32> -> vector<24x256xf32>
    %373 = arith.truncf %371 : vector<24x128xf32> to vector<24x128xbf16>
    %cst_145 = arith.constant dense<0.000000e+00> : vector<24x256xf32>
    %374 = tpu.matmul %373, %214, %cst_145 {dimension_numbers = #tpu.dot_dimension_numbers<[1], [0], [0], [1], [0, 0, 1, 1], [], []>} : vector<24x128xbf16>, vector<128x256xbf16>, vector<24x256xf32> -> vector<24x256xf32>
    %375 = arith.addf %372, %374 : vector<24x256xf32>
    %cst_146 = arith.constant 0.000000e+00 : f32
    %376 = vector.broadcast %cst_146 : f32 to vector<24x256xf32>
    %377 = arith.maximumf %375, %376 : vector<24x256xf32>
    %378 = arith.truncf %377 : vector<24x256xf32> to vector<24x256xbf16>
    %cst_147 = arith.constant dense<0.000000e+00> : vector<24x128xf32>
    %379 = tpu.matmul %378, %216, %cst_147 {dimension_numbers = #tpu.dot_dimension_numbers<[1], [0], [0], [1], [0, 0, 1, 1], [], []>} : vector<24x256xbf16>, vector<256x128xbf16>, vector<24x128xf32> -> vector<24x128xf32>
    %cst_148 = arith.constant dense<0.000000e+00> : vector<24xf32>
    %380 = vector.multi_reduction <add>, %379, %cst_148 [1] : vector<24x128xf32> to vector<24xf32>
    %381 = vector.shape_cast %380 : vector<24xf32> to vector<24x1xf32>
    %cst_149 = arith.constant 1.280000e+02 : f32
    %382 = vector.broadcast %cst_149 : f32 to vector<24x1xf32>
    %383 = arith.divf %381, %382 : vector<24x1xf32>
    %384 = vector.broadcast %383 : vector<24x1xf32> to vector<24x128xf32>
    %385 = arith.subf %379, %384 : vector<24x128xf32>
    %386 = arith.mulf %385, %385 : vector<24x128xf32>
    %cst_150 = arith.constant dense<0.000000e+00> : vector<24xf32>
    %387 = vector.multi_reduction <add>, %386, %cst_150 [1] : vector<24x128xf32> to vector<24xf32>
    %388 = vector.shape_cast %387 : vector<24xf32> to vector<24x1xf32>
    %cst_151 = arith.constant 1.280000e+02 : f32
    %389 = vector.broadcast %cst_151 : f32 to vector<24x1xf32>
    %390 = arith.divf %388, %389 : vector<24x1xf32>
    %391 = vector.broadcast %383 : vector<24x1xf32> to vector<24x128xf32>
    %392 = arith.subf %379, %391 : vector<24x128xf32>
    %cst_152 = arith.constant 1.000000e-07 : f32
    %393 = vector.broadcast %cst_152 : f32 to vector<24x1xf32>
    %394 = arith.addf %390, %393 : vector<24x1xf32>
    %395 = math.rsqrt %394 : vector<24x1xf32>
    %396 = vector.broadcast %395 : vector<24x1xf32> to vector<24x128xf32>
    %397 = arith.mulf %392, %396 : vector<24x128xf32>
    %398 = vector.broadcast %221 : vector<1x128xf32> to vector<24x128xf32>
    %399 = arith.mulf %397, %398 : vector<24x128xf32>
    %400 = vector.broadcast %222 : vector<1x128xf32> to vector<24x128xf32>
    %401 = arith.addf %399, %400 : vector<24x128xf32>
    %402 = arith.addf %204, %401 : vector<24x128xf32>
    %c0_153 = arith.constant 0 : index
    %c0_154 = arith.constant 0 : index
    %c0_155 = arith.constant 0 : index
    %403 = vector.load %arg12[%c0_153, %c0_154, %c0_155] : memref<1x16x128xf32, #tpu.memory_space<vmem>>, vector<1x16x128xf32>
    %404 = vector.shape_cast %403 : vector<1x16x128xf32> to vector<16x128xf32>
    %405 = vector.shape_cast %312 : vector<16x128xf32> to vector<1x16x128xf32>
    tpu.vector_store %arg12[%c0_153, %c0_154, %c0_155], %405 {strides = array<i32>} : memref<1x16x128xf32, #tpu.memory_space<vmem>>, vector<1x16x128xf32>,
    %c0_156 = arith.constant 0 : index
    %c0_157 = arith.constant 0 : index
    %c0_158 = arith.constant 0 : index
    %406 = vector.load %arg13[%c0_156, %c0_157, %c0_158] : memref<1x24x128xf32, #tpu.memory_space<vmem>>, vector<1x24x128xf32>
    %407 = vector.shape_cast %406 : vector<1x24x128xf32> to vector<24x128xf32>
    %408 = vector.shape_cast %402 : vector<24x128xf32> to vector<1x24x128xf32>
    tpu.vector_store %arg13[%c0_156, %c0_157, %c0_158], %408 {strides = array<i32>} : memref<1x24x128xf32, #tpu.memory_space<vmem>>, vector<1x24x128xf32>,
    return
  }
  func.func @transform_0(%arg0: i32) -> (i32, i32, i32) {
    %c0_i32 = arith.constant 0 : i32
    %c0_i32_0 = arith.constant 0 : i32
    %c0_i32_1 = arith.constant 0 : i32
    return %arg0, %c0_i32, %c0_i32_0 : i32, i32, i32
  }
  func.func @transform_1(%arg0: i32) -> (i32, i32, i32) {
    %c0_i32 = arith.constant 0 : i32
    %c0_i32_0 = arith.constant 0 : i32
    %c0_i32_1 = arith.constant 0 : i32
    return %arg0, %c0_i32, %c0_i32_0 : i32, i32, i32
  }
  func.func @transform_2(%arg0: i32) -> (i32, i32) {
    %c0_i32 = arith.constant 0 : i32
    %c0_i32_0 = arith.constant 0 : i32
    %c0_i32_1 = arith.constant 0 : i32
    return %c0_i32, %c0_i32_0 : i32, i32
  }
  func.func @transform_3(%arg0: i32) -> (i32, i32) {
    %c0_i32 = arith.constant 0 : i32
    %c0_i32_0 = arith.constant 0 : i32
    %c0_i32_1 = arith.constant 0 : i32
    return %c0_i32, %c0_i32_0 : i32, i32
  }
  func.func @transform_4(%arg0: i32) -> (i32, i32) {
    %c0_i32 = arith.constant 0 : i32
    %c0_i32_0 = arith.constant 0 : i32
    %c0_i32_1 = arith.constant 0 : i32
    return %c0_i32, %c0_i32_0 : i32, i32
  }
  func.func @transform_5(%arg0: i32) -> (i32, i32, i32) {
    %c0_i32 = arith.constant 0 : i32
    %c0_i32_0 = arith.constant 0 : i32
    %c0_i32_1 = arith.constant 0 : i32
    %c0_i32_2 = arith.constant 0 : i32
    return %c0_i32, %c0_i32_0, %c0_i32_1 : i32, i32, i32
  }
  func.func @transform_6(%arg0: i32) -> (i32, i32, i32) {
    %c0_i32 = arith.constant 0 : i32
    %c0_i32_0 = arith.constant 0 : i32
    %c0_i32_1 = arith.constant 0 : i32
    %c0_i32_2 = arith.constant 0 : i32
    return %c0_i32, %c0_i32_0, %c0_i32_1 : i32, i32, i32
  }
  func.func @transform_7(%arg0: i32) -> (i32, i32, i32) {
    %c0_i32 = arith.constant 0 : i32
    %c0_i32_0 = arith.constant 0 : i32
    %c0_i32_1 = arith.constant 0 : i32
    %c0_i32_2 = arith.constant 0 : i32
    return %c0_i32, %c0_i32_0, %c0_i32_1 : i32, i32, i32
  }
  func.func @transform_8(%arg0: i32) -> (i32, i32, i32) {
    %c0_i32 = arith.constant 0 : i32
    %c0_i32_0 = arith.constant 0 : i32
    %c0_i32_1 = arith.constant 0 : i32
    %c0_i32_2 = arith.constant 0 : i32
    return %c0_i32, %c0_i32_0, %c0_i32_1 : i32, i32, i32
  }
  func.func @transform_9(%arg0: i32) -> (i32, i32, i32) {
    %c0_i32 = arith.constant 0 : i32
    %c0_i32_0 = arith.constant 0 : i32
    %c0_i32_1 = arith.constant 0 : i32
    %c0_i32_2 = arith.constant 0 : i32
    return %c0_i32, %c0_i32_0, %c0_i32_1 : i32, i32, i32
  }
  func.func @transform_10(%arg0: i32) -> (i32, i32, i32) {
    %c0_i32 = arith.constant 0 : i32
    %c0_i32_0 = arith.constant 0 : i32
    %c0_i32_1 = arith.constant 0 : i32
    %c0_i32_2 = arith.constant 0 : i32
    return %c0_i32, %c0_i32_0, %c0_i32_1 : i32, i32, i32
  }
  func.func @transform_11(%arg0: i32) -> (i32, i32, i32) {
    %c0_i32 = arith.constant 0 : i32
    %c0_i32_0 = arith.constant 0 : i32
    %c0_i32_1 = arith.constant 0 : i32
    return %arg0, %c0_i32, %c0_i32_0 : i32, i32, i32
  }
  func.func @transform_12(%arg0: i32) -> (i32, i32, i32) {
    %c0_i32 = arith.constant 0 : i32
    %c0_i32_0 = arith.constant 0 : i32
    %c0_i32_1 = arith.constant 0 : i32
    return %arg0, %c0_i32, %c0_i32_0 : i32, i32, i32
  }
}

</mosaic_0001>

<llo_original>
// kernel: tpu_custom_call.1
$region0: #{tpu_custom_call.1}
  #allocation0 [shape = 'u32[]', space=smem, size = 0x4, offset = 0x4, fixed_abs, tag = 'smem constant byte address 0x4 - core index']
  #allocation1 [shape = 'u32[144,128]{1,0:T(1,128)}', space=vmem, size = 0x12000, scoped, tag = 'internal scratch']
  %s0 = inlined_call_operand.hbm [shape: f32[2,16,128], index: 0, kind: input, shape index: {}]
  %s1 = inlined_call_operand.hbm [shape: f32[2,24,128], index: 1, kind: input, shape index: {}]
  %s2 = inlined_call_operand.hbm [shape: bf16[128,128], index: 2, kind: input, shape index: {}]
  %s3 = inlined_call_operand.vmem [shape: f32[128,4], index: 3, kind: input, shape index: {}]
  %s4 = inlined_call_operand.vmem [shape: f32[4,128], index: 4, kind: input, shape index: {}]
  %s5 = inlined_call_operand.hbm [shape: bf16[2,128,384], index: 5, kind: input, shape index: {}]
  %s6 = inlined_call_operand.vmem [shape: bf16[2,128,128], index: 6, kind: input, shape index: {}]
  %s7 = inlined_call_operand.hbm [shape: bf16[2,128,256], index: 7, kind: input, shape index: {}]
  %s8 = inlined_call_operand.hbm [shape: bf16[2,128,256], index: 8, kind: input, shape index: {}]
  %s9 = inlined_call_operand.hbm [shape: bf16[2,256,128], index: 9, kind: input, shape index: {}]
  %s10 = inlined_call_operand.vmem [shape: f32[2,4,128], index: 10, kind: input, shape index: {}]
  %s11 = inlined_call_operand.hbm [shape: f32[2,16,128], index: 11, kind: output, shape index: {0}]
  %s12 = inlined_call_operand.hbm [shape: f32[2,24,128], index: 12, kind: output, shape index: {1}]
  %13 = xla_tuple %s11, %s12
  %s14 = sld [smem:[#allocation0]]
  $region113: #{tpu_custom_call.1} parent=0
    _
  %s16 = ssub.s32 1, %s14
  %s17 = scalar_select 0, %s16, %s14
  $region1: #{tpu_custom_call.1} parent=0
    #allocation2 [shape = 'u8[16384]{0}', space=vmem, size = 0x4000, scoped, tag = 'input window, operand 0']
    #allocation3 [shape = 's32[2]{0}', space=sflag, size = 0x8, scoped, tag = 'scoped memory for tpu_custom_call.1']
    #allocation4 [shape = 's32[2]{0}', space=sflag, size = 0x8, scoped, tag = 'scoped memory for tpu_custom_call.1']
    #allocation5 [shape = 'u8[24576]{0}', space=vmem, size = 0x6000, scoped, tag = 'input window, operand 1']
    #allocation6 [shape = 's32[2]{0}', space=sflag, size = 0x8, scoped, tag = 'scoped memory for tpu_custom_call.1']
    #allocation7 [shape = 'u8[32768]{0}', space=vmem, size = 0x8000, scoped, tag = 'input window, operand 2, single buffered']
    #allocation8 [shape = 'u8[196608]{0}', space=vmem, size = 0x30000, scoped, tag = 'input window, operand 5, single buffered']
    #allocation9 [shape = 's32[1]{0}', space=sflag, size = 0x4, scoped, tag = 'scoped memory for tpu_custom_call.1']
    #allocation10 [shape = 'u8[131072]{0}', space=vmem, size = 0x20000, scoped, tag = 'input window, operand 7, single buffered']
    #allocation11 [shape = 'u8[131072]{0}', space=vmem, size = 0x20000, scoped, tag = 'input window, operand 8, single buffered']
    #allocation12 [shape = 's32[1]{0}', space=sflag, size = 0x4, scoped, tag = 'scoped memory for tpu_custom_call.1']
    #allocation13 [shape = 'u8[131072]{0}', space=vmem, size = 0x20000, scoped, tag = 'input window, operand 9, single buffered']
    #allocation14 [shape = 'u8[16384]{0}', space=vmem, size = 0x4000, scoped, tag = 'output window, operand 0']
    #allocation15 [shape = 'u8[24576]{0}', space=vmem, size = 0x6000, scoped, tag = 'output window, operand 1']
    #allocation16 [shape = 's32[2]{0}', space=sflag, size = 0x8, scoped, tag = 'scoped memory for tpu_custom_call.1']
    %18 = vsyncpa [#allocation3], 0
    %s19 = scalar_lea.sflag [#allocation3], 1
    %20 = vsyncpa %s19, 0
    %21 = vsyncpa [#allocation6], 0
    %s22 = scalar_lea.sflag [#allocation6], 1
    %23 = vsyncpa %s22, 0
    %24 = vsyncpa [#allocation9], 0
    %25 = vsyncpa [#allocation12], 0
    %26 = vsyncpa [#allocation4], 0
    %s27 = scalar_lea.sflag [#allocation4], 1
    %28 = vsyncpa %s27, 0
    %29 = vsyncpa [#allocation16], 0
    %s30 = scalar_lea.sflag [#allocation16], 1
    %31 = vsyncpa %s30, 0
    loop: start=0, step=1, limit=4
    $region2: #{tpu_custom_call.1} parent=1 // loop_pre_header
      _
    $region3: #{tpu_custom_call.1} parent=1 // loop_header
      %s33 = sphi 0, %s37
      %p34 = scmp.ge.s32.totalorder %s33, 4
      %s43 = sphi 0, %s45
      %s46 = sphi 0, %s43
      %s47 = sphi 0, %s46
      %s63 = sphi 0, %s47
      %s69 = sphi 0, %s71
      %s72 = sphi 0, %s69
      %s73 = sphi 0, %s72
      %s89 = sphi 0, %s73
      %s93 = sphi 0, %s93
      %s95 = sphi 0, %s93
      %s96 = sphi 0, %s95
      %s110 = sphi 0, %s96
      %s114 = sphi 0, %s114
      %s116 = sphi 0, %s114
      %s117 = sphi 0, %s116
      %s131 = sphi 0, %s117
      %s135 = sphi 0, %s135
      %s137 = sphi 0, %s135
      %s138 = sphi 0, %s137
      %s152 = sphi 0, %s138
      %s156 = sphi 0, %s156
      %s158 = sphi 0, %s156
      %s159 = sphi 0, %s158
      %s173 = sphi 0, %s159
      %s177 = sphi 0, %s177
      %s179 = sphi 0, %s177
      %s180 = sphi 0, %s179
      %s194 = sphi 0, %s180
      %s198 = sphi 0, %s198
      %s200 = sphi 0, %s198
      %s201 = sphi 0, %s200
      %s215 = sphi 0, %s201
      %s219 = sphi 0, %s219
      %s221 = sphi 0, %s219
      %s222 = sphi 0, %s221
      %s236 = sphi 0, %s222
      %s240 = sphi 0, %s240
      %s242 = sphi 0, %s240
      %s243 = sphi 0, %s242
      %s257 = sphi 0, %s243
      %s261 = sphi 0, %s261
      %s263 = sphi 0, %s261
      %s264 = sphi 0, %s263
      %s278 = sphi 0, %s264
      %s284 = sphi 0, %s286
      %s287 = sphi 0, %s284
      %s288 = sphi 0, %s287
      %s304 = sphi 0, %s288
      %s310 = sphi 0, %s312
      %s313 = sphi 0, %s310
      %s314 = sphi 0, %s313
      %s330 = sphi 0, %s314
    $region4: #{tpu_custom_call.1} parent=1 // loop_header_branch
      %36 = sbr.rel (%p34) target = $region8
    $region5: #{tpu_custom_call.1} parent=1 // loop_body
      %s38 = ssub.s32 %s33, 1
      %s39 = ssub.s32 %s33, 2
      %s40 = sadd.s32 %s33, 1
      %s41 = ssub.s32 %s33, %s40
      %p42 = scmp.eq.s32.totalorder %s41, 0
      %s44 = sadd.s32 %s43, 1
      %s45 = scalar_select %p42, %s43, %s44
      %p48 = pneg %p42
      %p49 = scmp.eq.s32.totalorder %s33, 1
      %p50 = por %p48, %p49
      %p51 = scmp.ne.s32.totalorder %s43, %s46
      %p52 = scmp.eq.s32.totalorder %s33, 0
      %p53 = por %p51, %p52
      %p54 = scmp.ne.s32.totalorder %s43, %s46
      %p55 = scmp.eq.s32.totalorder %s38, 1
      %p56 = por %p54, %p55
      %p57 = scmp.ne.s32.totalorder %s46, %s47
      %p58 = scmp.eq.s32.totalorder %s38, 0
      %p59 = por %p57, %p58
      %p60 = scmp.ne.s32.totalorder %s46, %s47
      %p61 = scmp.eq.s32.totalorder %s39, 1
      %p62 = por %p60, %p61
      %p64 = scmp.ne.s32.totalorder %s47, %s63
      %p65 = scmp.eq.s32.totalorder %s39, 0
      %p66 = por %p64, %p65
      %s67 = ssub.s32 %s33, %s40
      %p68 = scmp.eq.s32.totalorder %s67, 0
      %s70 = sadd.s32 %s69, 1
      %s71 = scalar_select %p68, %s69, %s70
      %p74 = pneg %p68
      %p75 = scmp.eq.s32.totalorder %s33, 1
      %p76 = por %p74, %p75
      %p77 = scmp.ne.s32.totalorder %s69, %s72
      %p78 = scmp.eq.s32.totalorder %s33, 0
      %p79 = por %p77, %p78
      %p80 = scmp.ne.s32.totalorder %s69, %s72
      %p81 = scmp.eq.s32.totalorder %s38, 1
      %p82 = por %p80, %p81
      %p83 = scmp.ne.s32.totalorder %s72, %s73
      %p84 = scmp.eq.s32.totalorder %s38, 0
      %p85 = por %p83, %p84
      %p86 = scmp.ne.s32.totalorder %s72, %s73
      %p87 = scmp.eq.s32.totalorder %s39, 1
      %p88 = por %p86, %p87
      %p90 = scmp.ne.s32.totalorder %s73, %s89
      %p91 = scmp.eq.s32.totalorder %s39, 0
      %p92 = por %p90, %p91
      %s94 = sadd.s32 %s93, 1
      %p97 = scmp.eq.s32.totalorder %s33, 1
      %p98 = scmp.ne.s32.totalorder %s93, %s95
      %p99 = scmp.eq.s32.totalorder %s33, 0
      %p100 = por %p98, %p99
      %p101 = scmp.ne.s32.totalorder %s93, %s95
      %p102 = scmp.eq.s32.totalorder %s38, 1
      %p103 = por %p101, %p102
      %p104 = scmp.ne.s32.totalorder %s95, %s96
      %p105 = scmp.eq.s32.totalorder %s38, 0
      %p106 = por %p104, %p105
      %p107 = scmp.ne.s32.totalorder %s95, %s96
      %p108 = scmp.eq.s32.totalorder %s39, 1
      %p109 = por %p107, %p108
      %p111 = scmp.ne.s32.totalorder %s96, %s110
      %p112 = scmp.eq.s32.totalorder %s39, 0
      %p113 = por %p111, %p112
      %s115 = sadd.s32 %s114, 1
      %p118 = scmp.eq.s32.totalorder %s33, 1
      %p119 = scmp.ne.s32.totalorder %s114, %s116
      %p120 = scmp.eq.s32.totalorder %s33, 0
      %p121 = por %p119, %p120
      %p122 = scmp.ne.s32.totalorder %s114, %s116
      %p123 = scmp.eq.s32.totalorder %s38, 1
      %p124 = por %p122, %p123
      %p125 = scmp.ne.s32.totalorder %s116, %s117
      %p126 = scmp.eq.s32.totalorder %s38, 0
      %p127 = por %p125, %p126
      %p128 = scmp.ne.s32.totalorder %s116, %s117
      %p129 = scmp.eq.s32.totalorder %s39, 1
      %p130 = por %p128, %p129
      %p132 = scmp.ne.s32.totalorder %s117, %s131
      %p133 = scmp.eq.s32.totalorder %s39, 0
      %p134 = por %p132, %p133
      %s136 = sadd.s32 %s135, 1
      %p139 = scmp.eq.s32.totalorder %s33, 1
      %p140 = scmp.ne.s32.totalorder %s135, %s137
      %p141 = scmp.eq.s32.totalorder %s33, 0
      %p142 = por %p140, %p141
      %p143 = scmp.ne.s32.totalorder %s135, %s137
      %p144 = scmp.eq.s32.totalorder %s38, 1
      %p145 = por %p143, %p144
      %p146 = scmp.ne.s32.totalorder %s137, %s138
      %p147 = scmp.eq.s32.totalorder %s38, 0
      %p148 = por %p146, %p147
      %p149 = scmp.ne.s32.totalorder %s137, %s138
      %p150 = scmp.eq.s32.totalorder %s39, 1
      %p151 = por %p149, %p150
      %p153 = scmp.ne.s32.totalorder %s138, %s152
      %p154 = scmp.eq.s32.totalorder %s39, 0
      %p155 = por %p153, %p154
      %s157 = sadd.s32 %s156, 1
      %p160 = scmp.eq.s32.totalorder %s33, 1
      %p161 = scmp.ne.s32.totalorder %s156, %s158
      %p162 = scmp.eq.s32.totalorder %s33, 0
      %p163 = por %p161, %p162
      %p164 = scmp.ne.s32.totalorder %s156, %s158
      %p165 = scmp.eq.s32.totalorder %s38, 1
      %p166 = por %p164, %p165
      %p167 = scmp.ne.s32.totalorder %s158, %s159
      %p168 = scmp.eq.s32.totalorder %s38, 0
      %p169 = por %p167, %p168
      %p170 = scmp.ne.s32.totalorder %s158, %s159
      %p171 = scmp.eq.s32.totalorder %s39, 1
      %p172 = por %p170, %p171
      %p174 = scmp.ne.s32.totalorder %s159, %s173
      %p175 = scmp.eq.s32.totalorder %s39, 0
      %p176 = por %p174, %p175
      %s178 = sadd.s32 %s177, 1
      %p181 = scmp.eq.s32.totalorder %s33, 1
      %p182 = scmp.ne.s32.totalorder %s177, %s179
      %p183 = scmp.eq.s32.totalorder %s33, 0
      %p184 = por %p182, %p183
      %p185 = scmp.ne.s32.totalorder %s177, %s179
      %p186 = scmp.eq.s32.totalorder %s38, 1
      %p187 = por %p185, %p186
      %p188 = scmp.ne.s32.totalorder %s179, %s180
      %p189 = scmp.eq.s32.totalorder %s38, 0
      %p190 = por %p188, %p189
      %p191 = scmp.ne.s32.totalorder %s179, %s180
      %p192 = scmp.eq.s32.totalorder %s39, 1
      %p193 = por %p191, %p192
      %p195 = scmp.ne.s32.totalorder %s180, %s194
      %p196 = scmp.eq.s32.totalorder %s39, 0
      %p197 = por %p195, %p196
      %s199 = sadd.s32 %s198, 1
      %p202 = scmp.eq.s32.totalorder %s33, 1
      %p203 = scmp.ne.s32.totalorder %s198, %s200
      %p204 = scmp.eq.s32.totalorder %s33, 0
      %p205 = por %p203, %p204
      %p206 = scmp.ne.s32.totalorder %s198, %s200
      %p207 = scmp.eq.s32.totalorder %s38, 1
      %p208 = por %p206, %p207
      %p209 = scmp.ne.s32.totalorder %s200, %s201
      %p210 = scmp.eq.s32.totalorder %s38, 0
      %p211 = por %p209, %p210
      %p212 = scmp.ne.s32.totalorder %s200, %s201
      %p213 = scmp.eq.s32.totalorder %s39, 1
      %p214 = por %p212, %p213
      %p216 = scmp.ne.s32.totalorder %s201, %s215
      %p217 = scmp.eq.s32.totalorder %s39, 0
      %p218 = por %p216, %p217
      %s220 = sadd.s32 %s219, 1
      %p223 = scmp.eq.s32.totalorder %s33, 1
      %p224 = scmp.ne.s32.totalorder %s219, %s221
      %p225 = scmp.eq.s32.totalorder %s33, 0
      %p226 = por %p224, %p225
      %p227 = scmp.ne.s32.totalorder %s219, %s221
      %p228 = scmp.eq.s32.totalorder %s38, 1
      %p229 = por %p227, %p228
      %p230 = scmp.ne.s32.totalorder %s221, %s222
      %p231 = scmp.eq.s32.totalorder %s38, 0
      %p232 = por %p230, %p231
      %p233 = scmp.ne.s32.totalorder %s221, %s222
      %p234 = scmp.eq.s32.totalorder %s39, 1
      %p235 = por %p233, %p234
      %p237 = scmp.ne.s32.totalorder %s222, %s236
      %p238 = scmp.eq.s32.totalorder %s39, 0
      %p239 = por %p237, %p238
      %s241 = sadd.s32 %s240, 1
      %p244 = scmp.eq.s32.totalorder %s33, 1
      %p245 = scmp.ne.s32.totalorder %s240, %s242
      %p246 = scmp.eq.s32.totalorder %s33, 0
      %p247 = por %p245, %p246
      %p248 = scmp.ne.s32.totalorder %s240, %s242
      %p249 = scmp.eq.s32.totalorder %s38, 1
      %p250 = por %p248, %p249
      %p251 = scmp.ne.s32.totalorder %s242, %s243
      %p252 = scmp.eq.s32.totalorder %s38, 0
      %p253 = por %p251, %p252
      %p254 = scmp.ne.s32.totalorder %s242, %s243
      %p255 = scmp.eq.s32.totalorder %s39, 1
      %p256 = por %p254, %p255
      %p258 = scmp.ne.s32.totalorder %s243, %s257
      %p259 = scmp.eq.s32.totalorder %s39, 0
      %p260 = por %p258, %p259
      %s262 = sadd.s32 %s261, 1
      %p265 = scmp.eq.s32.totalorder %s33, 1
      %p266 = scmp.ne.s32.totalorder %s261, %s263
      %p267 = scmp.eq.s32.totalorder %s33, 0
      %p268 = por %p266, %p267
      %p269 = scmp.ne.s32.totalorder %s261, %s263
      %p270 = scmp.eq.s32.totalorder %s38, 1
      %p271 = por %p269, %p270
      %p272 = scmp.ne.s32.totalorder %s263, %s264
      %p273 = scmp.eq.s32.totalorder %s38, 0
      %p274 = por %p272, %p273
      %p275 = scmp.ne.s32.totalorder %s263, %s264
      %p276 = scmp.eq.s32.totalorder %s39, 1
      %p277 = por %p275, %p276
      %p279 = scmp.ne.s32.totalorder %s264, %s278
      %p280 = scmp.eq.s32.totalorder %s39, 0
      %p281 = por %p279, %p280
      %s282 = ssub.s32 %s33, %s40
      %p283 = scmp.eq.s32.totalorder %s282, 0
      %s285 = sadd.s32 %s284, 1
      %s286 = scalar_select %p283, %s284, %s285
      %p289 = pneg %p283
      %p290 = scmp.eq.s32.totalorder %s33, 1
      %p291 = por %p289, %p290
      %p292 = scmp.ne.s32.totalorder %s284, %s287
      %p293 = scmp.eq.s32.totalorder %s33, 0
      %p294 = por %p292, %p293
      %p295 = scmp.ne.s32.totalorder %s284, %s287
      %p296 = scmp.eq.s32.totalorder %s38, 1
      %p297 = por %p295, %p296
      %p298 = scmp.ne.s32.totalorder %s287, %s288
      %p299 = scmp.eq.s32.totalorder %s38, 0
      %p300 = por %p298, %p299
      %p301 = scmp.ne.s32.totalorder %s287, %s288
      %p302 = scmp.eq.s32.totalorder %s39, 1
      %p303 = por %p301, %p302
      %p305 = scmp.ne.s32.totalorder %s288, %s304
      %p306 = scmp.eq.s32.totalorder %s39, 0
      %p307 = por %p305, %p306
      %s308 = ssub.s32 %s33, %s40
      %p309 = scmp.eq.s32.totalorder %s308, 0
      %s311 = sadd.s32 %s310, 1
      %s312 = scalar_select %p309, %s310, %s311
      %p315 = pneg %p309
      %p316 = scmp.eq.s32.totalorder %s33, 1
      %p317 = por %p315, %p316
      %p318 = scmp.ne.s32.totalorder %s310, %s313
      %p319 = scmp.eq.s32.totalorder %s33, 0
      %p320 = por %p318, %p319
      %p321 = scmp.ne.s32.totalorder %s310, %s313
      %p322 = scmp.eq.s32.totalorder %s38, 1
      %p323 = por %p321, %p322
      %p324 = scmp.ne.s32.totalorder %s313, %s314
      %p325 = scmp.eq.s32.totalorder %s38, 0
      %p326 = por %p324, %p325
      %p327 = scmp.ne.s32.totalorder %s313, %s314
      %p328 = scmp.eq.s32.totalorder %s39, 1
      %p329 = por %p327, %p328
      %p331 = scmp.ne.s32.totalorder %s314, %s330
      %p332 = scmp.eq.s32.totalorder %s39, 0
      %p333 = por %p331, %p332
      %p334 = scmp.le.s32.totalorder 1, %s33
      %p335 = scmp.lt.s32.totalorder %s33, 3
      %p336 = pnand %p334, %p335
      %p337 = pneg %p336
      // Predicated region
      $region9: #{tpu_custom_call.1} parent=5 // pred_check
        _
      $region10: #{tpu_custom_call.1} parent=5 // pred_check_branch
        %339 = sbr.rel (%p336) target = $region12
      $region11: #{tpu_custom_call.1} parent=5 // pred_region
        %s340 = ssub.s32 %s33, 1
        // Predicated region
        $region13: #{tpu_custom_call.1} parent=11 // pred_check
          %p341 = pneg %p106
        $region14: #{tpu_custom_call.1} parent=11 // pred_check_branch
          %343 = sbr.rel (%p341) target = $region16
        $region15: #{tpu_custom_call.1} parent=11 // pred_region
          %s345 = ssub.s32 1024, 1024
          %346 = vsyncadd [#allocation6], %s345
          %s347 = sshll.u32 [#allocation7], 4
          %s348 = int_to_ptr.vmem [resolvable:$true] %s347
          %353 = dma.hbm_to_vmem [thread:$0]  %s2, 1024, %s348, [#allocation6], 64, 64, 4
        $region16: #{tpu_custom_call.1} parent=11 // pred_fallthru
          _
        // Predicated region
        $region17: #{tpu_custom_call.1} parent=11 // pred_check
          %p354 = pneg %p127
        $region18: #{tpu_custom_call.1} parent=11 // pred_check_branch
          %356 = sbr.rel (%p354) target = $region20
        $region19: #{tpu_custom_call.1} parent=11 // pred_region
          _
        $region20: #{tpu_custom_call.1} parent=11 // pred_fallthru
          _
        // Predicated region
        $region21: #{tpu_custom_call.1} parent=11 // pred_check
          %p357 = pneg %p148
        $region22: #{tpu_custom_call.1} parent=11 // pred_check_branch
          %359 = sbr.rel (%p357) target = $region24
        $region23: #{tpu_custom_call.1} parent=11 // pred_region
          _
        $region24: #{tpu_custom_call.1} parent=11 // pred_fallthru
          _
        // Predicated region
        $region25: #{tpu_custom_call.1} parent=11 // pred_check
          %p360 = pneg %p169
        $region26: #{tpu_custom_call.1} parent=11 // pred_check_branch
          %362 = sbr.rel (%p360) target = $region28
        $region27: #{tpu_custom_call.1} parent=11 // pred_region
          %s364 = ssub.s32 6144, 6144
          %365 = vsyncadd [#allocation9], %s364
          %s366 = sshll.u32 [#allocation8], 4
          %s367 = int_to_ptr.vmem [resolvable:$true] %s366
          %372 = dma.hbm_to_vmem [thread:$0]  %s5, 6144, %s367, [#allocation9], 192, 192, 12
        $region28: #{tpu_custom_call.1} parent=11 // pred_fallthru
          _
        // Predicated region
        $region29: #{tpu_custom_call.1} parent=11 // pred_check
          %p373 = pneg %p190
        $region30: #{tpu_custom_call.1} parent=11 // pred_check_branch
          %375 = sbr.rel (%p373) target = $region32
        $region31: #{tpu_custom_call.1} parent=11 // pred_region
          _
        $region32: #{tpu_custom_call.1} parent=11 // pred_fallthru
          _
        // Predicated region
        $region33: #{tpu_custom_call.1} parent=11 // pred_check
          %p376 = pneg %p211
        $region34: #{tpu_custom_call.1} parent=11 // pred_check_branch
          %378 = sbr.rel (%p376) target = $region36
        $region35: #{tpu_custom_call.1} parent=11 // pred_region
          %s380 = ssub.s32 4096, 4096
          %381 = vsyncadd [#allocation9], %s380
          %s382 = sshll.u32 [#allocation10], 4
          %s383 = int_to_ptr.vmem [resolvable:$true] %s382
          %388 = dma.hbm_to_vmem [thread:$0]  %s7, 4096, %s383, [#allocation9], 128, 128, 8
        $region36: #{tpu_custom_call.1} parent=11 // pred_fallthru
          _
        // Predicated region
        $region37: #{tpu_custom_call.1} parent=11 // pred_check
          %p389 = pneg %p232
        $region38: #{tpu_custom_call.1} parent=11 // pred_check_branch
          %391 = sbr.rel (%p389) target = $region40
        $region39: #{tpu_custom_call.1} parent=11 // pred_region
          %s393 = ssub.s32 4096, 4096
          %394 = vsyncadd [#allocation12], %s393
          %s395 = sshll.u32 [#allocation11], 4
          %s396 = int_to_ptr.vmem [resolvable:$true] %s395
          %401 = dma.hbm_to_vmem [thread:$0]  %s8, 4096, %s396, [#allocation12], 128, 128, 8
        $region40: #{tpu_custom_call.1} parent=11 // pred_fallthru
          _
        // Predicated region
        $region41: #{tpu_custom_call.1} parent=11 // pred_check
          %p402 = pneg %p253
        $region42: #{tpu_custom_call.1} parent=11 // pred_check_branch
          %404 = sbr.rel (%p402) target = $region44
        $region43: #{tpu_custom_call.1} parent=11 // pred_region
          %s406 = ssub.s32 4096, 4096
          %407 = vsyncadd [#allocation12], %s406
          %s408 = sshll.u32 [#allocation13], 4
          %s409 = int_to_ptr.vmem [resolvable:$true] %s408
          %414 = dma.hbm_to_vmem [thread:$0]  %s9, 4096, %s409, [#allocation12], 64, 64, 4
        $region44: #{tpu_custom_call.1} parent=11 // pred_fallthru
          _
        // Predicated region
        $region45: #{tpu_custom_call.1} parent=11 // pred_check
          %p415 = pneg %p274
        $region46: #{tpu_custom_call.1} parent=11 // pred_check_branch
          %417 = sbr.rel (%p415) target = $region48
        $region47: #{tpu_custom_call.1} parent=11 // pred_region
          _
        $region48: #{tpu_custom_call.1} parent=11 // pred_fallthru
          _
      $region12: #{tpu_custom_call.1} parent=5 // pred_fallthru
        _
      %p418 = scmp.lt.s32.totalorder %s33, 2
      // Predicated region
      $region49: #{tpu_custom_call.1} parent=5 // pred_check
        %p419 = pneg %p418
      $region50: #{tpu_custom_call.1} parent=5 // pred_check_branch
        %421 = sbr.rel (%p419) target = $region52
      $region51: #{tpu_custom_call.1} parent=5 // pred_region
        // Predicated region
        $region53: #{tpu_custom_call.1} parent=51 // pred_check
          %p422 = pneg %p53
        $region54: #{tpu_custom_call.1} parent=51 // pred_check_branch
          %424 = sbr.rel (%p422) target = $region56
        $region55: #{tpu_custom_call.1} parent=51 // pred_region
          %s425 = sand.u32 %s43, 1
          %s426 = scalar_lea.sflag [#allocation3], %s425
          %s427 = sand.u32 %s43, 1
          %s428 = smul.addr %s427, 16
          %s429 = scalar_lea.vmem [#allocation2], %s428
          %s431 = ssub.s32 256, 256
          %432 = vsyncadd %s426, %s431
          %s433 = smul.addr %s33, 2
          %s434 = smul.addr %s433, 128
          %s435 = scalar_lea.hbm %s0, %s434
          %s436 = sshll.u32 %s429, 4
          %s437 = int_to_ptr.vmem [resolvable:$true] %s436
          %442 = dma.hbm_to_vmem [thread:$0]  %s435, 256, %s437, %s426, 128, 128, 8
        $region56: #{tpu_custom_call.1} parent=51 // pred_fallthru
          _
        // Predicated region
        $region57: #{tpu_custom_call.1} parent=51 // pred_check
          %p443 = pneg %p79
        $region58: #{tpu_custom_call.1} parent=51 // pred_check_branch
          %445 = sbr.rel (%p443) target = $region60
        $region59: #{tpu_custom_call.1} parent=51 // pred_region
          %s446 = sand.u32 %s33, 1
          %s447 = scalar_lea.sflag [#allocation6], %s446
          %s448 = sand.u32 %s69, 1
          %s449 = smul.addr %s448, 24
          %s450 = scalar_lea.vmem [#allocation5], %s449
          %s452 = ssub.s32 384, 384
          %453 = vsyncadd %s447, %s452
          %s454 = smul.addr %s33, 3
          %s455 = smul.addr %s454, 128
          %s456 = scalar_lea.hbm %s1, %s455
          %s457 = sshll.u32 %s450, 4
          %s458 = int_to_ptr.vmem [resolvable:$true] %s457
          %463 = dma.hbm_to_vmem [thread:$0]  %s456, 384, %s458, %s447, 128, 128, 8
        $region60: #{tpu_custom_call.1} parent=51 // pred_fallthru
          _
      $region52: #{tpu_custom_call.1} parent=5 // pred_fallthru
        _
      %p464 = scmp.le.s32.totalorder 1, %s33
      %p465 = scmp.lt.s32.totalorder %s33, 3
      %p466 = pnand %p464, %p465
      %p467 = pneg %p466
      // Predicated region
      $region61: #{tpu_custom_call.1} parent=5 // pred_check
        _
      $region62: #{tpu_custom_call.1} parent=5 // pred_check_branch
        %469 = sbr.rel (%p466) target = $region64
      $region63: #{tpu_custom_call.1} parent=5 // pred_region
        %s470 = ssub.s32 %s33, 1
        %s471 = sand.u32 %s46, 1
        %s472 = scalar_lea.sflag [#allocation3], %s471
        %s473 = sand.u32 %s46, 1
        %s474 = smul.addr %s473, 16
        %s475 = scalar_lea.vmem [#allocation2], %s474
        // Predicated region
        $region65: #{tpu_custom_call.1} parent=63 // pred_check
          %p476 = pneg %p59
        $region66: #{tpu_custom_call.1} parent=63 // pred_check_branch
          %478 = sbr.rel (%p476) target = $region68
        $region67: #{tpu_custom_call.1} parent=63 // pred_region
          %479 = dma.done %s472, 256
        $region68: #{tpu_custom_call.1} parent=63 // pred_fallthru
          _
        %s480 = sand.u32 %s38, 1
        %s481 = scalar_lea.sflag [#allocation6], %s480
        %s482 = sand.u32 %s72, 1
        %s483 = smul.addr %s482, 24
        %s484 = scalar_lea.vmem [#allocation5], %s483
        // Predicated region
        $region69: #{tpu_custom_call.1} parent=63 // pred_check
          %p485 = pneg %p85
        $region70: #{tpu_custom_call.1} parent=63 // pred_check_branch
          %487 = sbr.rel (%p485) target = $region72
        $region71: #{tpu_custom_call.1} parent=63 // pred_region
          %488 = dma.done %s481, 384
        $region72: #{tpu_custom_call.1} parent=63 // pred_fallthru
          _
        // Predicated region
        $region73: #{tpu_custom_call.1} parent=63 // pred_check
          %p489 = pneg %p106
        $region74: #{tpu_custom_call.1} parent=63 // pred_check_branch
          %491 = sbr.rel (%p489) target = $region76
        $region75: #{tpu_custom_call.1} parent=63 // pred_region
          %492 = dma.done [#allocation6], 1024
        $region76: #{tpu_custom_call.1} parent=63 // pred_fallthru
          _
        // Predicated region
        $region77: #{tpu_custom_call.1} parent=63 // pred_check
          %p493 = pneg %p169
        $region78: #{tpu_custom_call.1} parent=63 // pred_check_branch
          %495 = sbr.rel (%p493) target = $region80
        $region79: #{tpu_custom_call.1} parent=63 // pred_region
          %496 = dma.done [#allocation9], 6144
        $region80: #{tpu_custom_call.1} parent=63 // pred_fallthru
          _
        // Predicated region
        $region81: #{tpu_custom_call.1} parent=63 // pred_check
          %p497 = pneg %p211
        $region82: #{tpu_custom_call.1} parent=63 // pred_check_branch
          %499 = sbr.rel (%p497) target = $region84
        $region83: #{tpu_custom_call.1} parent=63 // pred_region
          %500 = dma.done [#allocation9], 4096
        $region84: #{tpu_custom_call.1} parent=63 // pred_fallthru
          _
        // Predicated region
        $region85: #{tpu_custom_call.1} parent=63 // pred_check
          %p501 = pneg %p232
        $region86: #{tpu_custom_call.1} parent=63 // pred_check_branch
          %503 = sbr.rel (%p501) target = $region88
        $region87: #{tpu_custom_call.1} parent=63 // pred_region
          %504 = dma.done [#allocation12], 4096
        $region88: #{tpu_custom_call.1} parent=63 // pred_fallthru
          _
        // Predicated region
        $region89: #{tpu_custom_call.1} parent=63 // pred_check
          %p505 = pneg %p253
        $region90: #{tpu_custom_call.1} parent=63 // pred_check_branch
          %507 = sbr.rel (%p505) target = $region92
        $region91: #{tpu_custom_call.1} parent=63 // pred_region
          %508 = dma.done [#allocation12], 4096
        $region92: #{tpu_custom_call.1} parent=63 // pred_fallthru
          _
        %s509 = sand.u32 %s46, 1
        %s510 = scalar_lea.sflag [#allocation3], %s509
        %s511 = sand.u32 %s46, 1
        %s512 = smul.addr %s511, 16
        %s513 = scalar_lea.vmem [#allocation2], %s512
        %p514 = pneg %p59
        %p515 = pneg %p56
        %s516 = sand.u32 %s38, 1
        %s517 = scalar_lea.sflag [#allocation6], %s516
        %s518 = sand.u32 %s72, 1
        %s519 = smul.addr %s518, 24
        %s520 = scalar_lea.vmem [#allocation5], %s519
        %p521 = pneg %p85
        %p522 = pneg %p82
        %p523 = pneg %p106
        %p524 = pneg %p103
        %p525 = pneg %p127
        %p526 = pneg %p124
        %p527 = pneg %p148
        %p528 = pneg %p145
        %p529 = pneg %p169
        %p530 = pneg %p166
        %p531 = pneg %p190
        %p532 = pneg %p187
        %p533 = pneg %p211
        %p534 = pneg %p208
        %p535 = pneg %p232
        %p536 = pneg %p229
        %p537 = pneg %p253
        %p538 = pneg %p250
        %p539 = pneg %p274
        %p540 = pneg %p271
        %p541 = pneg %p300
        %p542 = pneg %p297
        %s543 = sand.u32 %s287, 1
        %s544 = scalar_lea.sflag [#allocation4], %s543
        %s545 = sand.u32 %s287, 1
        %s546 = smul.addr %s545, 16
        %s547 = scalar_lea.vmem [#allocation14], %s546
        %p548 = pneg %p326
        %p549 = pneg %p323
        %s550 = sand.u32 %s313, 1
        %s551 = scalar_lea.sflag [#allocation16], %s550
        %s552 = sand.u32 %s313, 1
        %s553 = smul.addr %s552, 24
        %s554 = scalar_lea.vmem [#allocation15], %s553
        %v556 = vld [vmem:[%s475] sm:$0xff]
        %v557 = vld [vmem:[%s475 + $0x8] sm:$0xff]
        %v558 = vld [vmem:[%s484] sm:$0xff]
        %v559 = vld [vmem:[%s484 + $0x8] sm:$0xff]
        %v560 = vld [vmem:[%s484 + $0x10] sm:$0xff]
        %v561 = vld [vmem:[#allocation7] sm:$0xf]
        %v562 = vld [vmem:[#allocation7 + $0x4] sm:$0xf]
        %v563 = vld [vmem:[#allocation7 + $0x8] sm:$0xf]
        %v564 = vld [vmem:[#allocation7 + $0xc] sm:$0xf]
        %v565 = vld [vmem:[#allocation7 + $0x10] sm:$0xf]
        %v566 = vld [vmem:[#allocation7 + $0x14] sm:$0xf]
        %v567 = vld [vmem:[#allocation7 + $0x18] sm:$0xf]
        %v568 = vld [vmem:[#allocation7 + $0x1c] sm:$0xf]
        %v569 = vld [vmem:[#allocation7 + $0x20] sm:$0xf]
        %v570 = vld [vmem:[#allocation7 + $0x24] sm:$0xf]
        %v571 = vld [vmem:[#allocation7 + $0x28] sm:$0xf]
        %v572 = vld [vmem:[#allocation7 + $0x2c] sm:$0xf]
        %v573 = vld [vmem:[#allocation7 + $0x30] sm:$0xf]
        %v574 = vld [vmem:[#allocation7 + $0x34] sm:$0xf]
        %v575 = vld [vmem:[#allocation7 + $0x38] sm:$0xf]
        %v576 = vld [vmem:[#allocation7 + $0x3c] sm:$0xf]
        %v577 = vld [vmem:[%s3] sm:$0xff]
        %v578 = vld [vmem:[%s3 + $0x8] sm:$0xff]
        %v579 = vld [vmem:[%s3 + $0x10] sm:$0xff]
        %v580 = vld [vmem:[%s3 + $0x18] sm:$0xff]
        %v581 = vld [vmem:[%s3 + $0x20] sm:$0xff]
        %v582 = vld [vmem:[%s3 + $0x28] sm:$0xff]
        %v583 = vld [vmem:[%s3 + $0x30] sm:$0xff]
        %v584 = vld [vmem:[%s3 + $0x38] sm:$0xff]
        %v585 = vld [vmem:[%s3 + $0x40] sm:$0xff]
        %v586 = vld [vmem:[%s3 + $0x48] sm:$0xff]
        %v587 = vld [vmem:[%s3 + $0x50] sm:$0xff]
        %v588 = vld [vmem:[%s3 + $0x58] sm:$0xff]
        %v589 = vld [vmem:[%s3 + $0x60] sm:$0xff]
        %v590 = vld [vmem:[%s3 + $0x68] sm:$0xff]
        %v591 = vld [vmem:[%s3 + $0x70] sm:$0xff]
        %v592 = vld [vmem:[%s3 + $0x78] sm:$0xff]
        %v593 = vld [vmem:[%s4] sm:$0xf]
        %v594 = vld [vmem:[#allocation8] sm:$0xff]
        %v595 = vld [vmem:[#allocation8 + $0x8] sm:$0xf]
        %v596 = vld [vmem:[#allocation8 + $0xc] sm:$0xff]
        %v597 = vld [vmem:[#allocation8 + $0x14] sm:$0xf]
        %v598 = vld [vmem:[#allocation8 + $0x18] sm:$0xff]
        %v599 = vld [vmem:[#allocation8 + $0x20] sm:$0xf]
        %v600 = vld [vmem:[#allocation8 + $0x24] sm:$0xff]
        %v601 = vld [vmem:[#allocation8 + $0x2c] sm:$0xf]
        %v602 = vld [vmem:[#allocation8 + $0x30] sm:$0xff]
        %v603 = vld [vmem:[#allocation8 + $0x38] sm:$0xf]
        %v604 = vld [vmem:[#allocation8 + $0x3c] sm:$0xff]
        %v605 = vld [vmem:[#allocation8 + $0x44] sm:$0xf]
        %v606 = vld [vmem:[#allocation8 + $0x48] sm:$0xff]
        %v607 = vld [vmem:[#allocation8 + $0x50] sm:$0xf]
        %v608 = vld [vmem:[#allocation8 + $0x54] sm:$0xff]
        %v609 = vld [vmem:[#allocation8 + $0x5c] sm:$0xf]
        %v610 = vld [vmem:[#allocation8 + $0x60] sm:$0xff]
        %v611 = vld [vmem:[#allocation8 + $0x68] sm:$0xf]
        %v612 = vld [vmem:[#allocation8 + $0x6c] sm:$0xff]
        %v613 = vld [vmem:[#allocation8 + $0x74] sm:$0xf]
        %v614 = vld [vmem:[#allocation8 + $0x78] sm:$0xff]
        %v615 = vld [vmem:[#allocation8 + $0x80] sm:$0xf]
        %v616 = vld [vmem:[#allocation8 + $0x84] sm:$0xff]
        %v617 = vld [vmem:[#allocation8 + $0x8c] sm:$0xf]
        %v618 = vld [vmem:[#allocation8 + $0x90] sm:$0xff]
        %v619 = vld [vmem:[#allocation8 + $0x98] sm:$0xf]
        %v620 = vld [vmem:[#allocation8 + $0x9c] sm:$0xff]
        %v621 = vld [vmem:[#allocation8 + $0xa4] sm:$0xf]
        %v622 = vld [vmem:[#allocation8 + $0xa8] sm:$0xff]
        %v623 = vld [vmem:[#allocation8 + $0xb0] sm:$0xf]
        %v624 = vld [vmem:[#allocation8 + $0xb4] sm:$0xff]
        %v625 = vld [vmem:[#allocation8 + $0xbc] sm:$0xf]
        %v626 = vld [vmem:[%s6] sm:$0xf]
        %v627 = vld [vmem:[%s6 + $0x4] sm:$0xf]
        %v628 = vld [vmem:[%s6 + $0x8] sm:$0xf]
        %v629 = vld [vmem:[%s6 + $0xc] sm:$0xf]
        %v630 = vld [vmem:[%s6 + $0x10] sm:$0xf]
        %v631 = vld [vmem:[%s6 + $0x14] sm:$0xf]
        %v632 = vld [vmem:[%s6 + $0x18] sm:$0xf]
        %v633 = vld [vmem:[%s6 + $0x1c] sm:$0xf]
        %v634 = vld [vmem:[%s6 + $0x20] sm:$0xf]
        %v635 = vld [vmem:[%s6 + $0x24] sm:$0xf]
        %v636 = vld [vmem:[%s6 + $0x28] sm:$0xf]
        %v637 = vld [vmem:[%s6 + $0x2c] sm:$0xf]
        %v638 = vld [vmem:[%s6 + $0x30] sm:$0xf]
        %v639 = vld [vmem:[%s6 + $0x34] sm:$0xf]
        %v640 = vld [vmem:[%s6 + $0x38] sm:$0xf]
        %v641 = vld [vmem:[%s6 + $0x3c] sm:$0xf]
        %v642 = vld [vmem:[#allocation10] sm:$0xff]
        %v643 = vld [vmem:[#allocation10 + $0x8] sm:$0xff]
        %v644 = vld [vmem:[#allocation10 + $0x10] sm:$0xff]
        %v645 = vld [vmem:[#allocation10 + $0x18] sm:$0xff]
        %v646 = vld [vmem:[#allocation10 + $0x20] sm:$0xff]
        %v647 = vld [vmem:[#allocation10 + $0x28] sm:$0xff]
        %v648 = vld [vmem:[#allocation10 + $0x30] sm:$0xff]
        %v649 = vld [vmem:[#allocation10 + $0x38] sm:$0xff]
        %v650 = vld [vmem:[#allocation10 + $0x40] sm:$0xff]
        %v651 = vld [vmem:[#allocation10 + $0x48] sm:$0xff]
        %v652 = vld [vmem:[#allocation10 + $0x50] sm:$0xff]
        %v653 = vld [vmem:[#allocation10 + $0x58] sm:$0xff]
        %v654 = vld [vmem:[#allocation10 + $0x60] sm:$0xff]
        %v655 = vld [vmem:[#allocation10 + $0x68] sm:$0xff]
        %v656 = vld [vmem:[#allocation10 + $0x70] sm:$0xff]
        %v657 = vld [vmem:[#allocation10 + $0x78] sm:$0xff]
        %v658 = vld [vmem:[#allocation11] sm:$0xff]
        %v659 = vld [vmem:[#allocation11 + $0x8] sm:$0xff]
        %v660 = vld [vmem:[#allocation11 + $0x10] sm:$0xff]
        %v661 = vld [vmem:[#allocation11 + $0x18] sm:$0xff]
        %v662 = vld [vmem:[#allocation11 + $0x20] sm:$0xff]
        %v663 = vld [vmem:[#allocation11 + $0x28] sm:$0xff]
        %v664 = vld [vmem:[#allocation11 + $0x30] sm:$0xff]
        %v665 = vld [vmem:[#allocation11 + $0x38] sm:$0xff]
        %v666 = vld [vmem:[#allocation11 + $0x40] sm:$0xff]
        %v667 = vld [vmem:[#allocation11 + $0x48] sm:$0xff]
        %v668 = vld [vmem:[#allocation11 + $0x50] sm:$0xff]
        %v669 = vld [vmem:[#allocation11 + $0x58] sm:$0xff]
        %v670 = vld [vmem:[#allocation11 + $0x60] sm:$0xff]
        %v671 = vld [vmem:[#allocation11 + $0x68] sm:$0xff]
        %v672 = vld [vmem:[#allocation11 + $0x70] sm:$0xff]
        %v673 = vld [vmem:[#allocation11 + $0x78] sm:$0xff]
        %v674 = vld [vmem:[#allocation13] sm:$0xf]
        %v675 = vld [vmem:[#allocation13 + $0x4] sm:$0xf]
        %v676 = vld [vmem:[#allocation13 + $0x8] sm:$0xf]
        %v677 = vld [vmem:[#allocation13 + $0xc] sm:$0xf]
        %v678 = vld [vmem:[#allocation13 + $0x10] sm:$0xf]
        %v679 = vld [vmem:[#allocation13 + $0x14] sm:$0xf]
        %v680 = vld [vmem:[#allocation13 + $0x18] sm:$0xf]
        %v681 = vld [vmem:[#allocation13 + $0x1c] sm:$0xf]
        %v682 = vld [vmem:[#allocation13 + $0x20] sm:$0xf]
        %v683 = vld [vmem:[#allocation13 + $0x24] sm:$0xf]
        %v684 = vld [vmem:[#allocation13 + $0x28] sm:$0xf]
        %v685 = vld [vmem:[#allocation13 + $0x2c] sm:$0xf]
        %v686 = vld [vmem:[#allocation13 + $0x30] sm:$0xf]
        %v687 = vld [vmem:[#allocation13 + $0x34] sm:$0xf]
        %v688 = vld [vmem:[#allocation13 + $0x38] sm:$0xf]
        %v689 = vld [vmem:[#allocation13 + $0x3c] sm:$0xf]
        %v690 = vld [vmem:[#allocation13 + $0x40] sm:$0xf]
        %v691 = vld [vmem:[#allocation13 + $0x44] sm:$0xf]
        %v692 = vld [vmem:[#allocation13 + $0x48] sm:$0xf]
        %v693 = vld [vmem:[#allocation13 + $0x4c] sm:$0xf]
        %v694 = vld [vmem:[#allocation13 + $0x50] sm:$0xf]
        %v695 = vld [vmem:[#allocation13 + $0x54] sm:$0xf]
        %v696 = vld [vmem:[#allocation13 + $0x58] sm:$0xf]
        %v697 = vld [vmem:[#allocation13 + $0x5c] sm:$0xf]
        %v698 = vld [vmem:[#allocation13 + $0x60] sm:$0xf]
        %v699 = vld [vmem:[#allocation13 + $0x64] sm:$0xf]
        %v700 = vld [vmem:[#allocation13 + $0x68] sm:$0xf]
        %v701 = vld [vmem:[#allocation13 + $0x6c] sm:$0xf]
        %v702 = vld [vmem:[#allocation13 + $0x70] sm:$0xf]
        %v703 = vld [vmem:[#allocation13 + $0x74] sm:$0xf]
        %v704 = vld [vmem:[#allocation13 + $0x78] sm:$0xf]
        %v705 = vld [vmem:[#allocation13 + $0x7c] sm:$0xf]
        %v706 = vld [vmem:[%s10] sm:$0xf]
        %v707 = vpack.c.bf16 %v557, %v556
        %v724 = vunpack.c.l.b16 %v594
        %v725 = vunpack.c.l.b16 %v596
        %v726 = vunpack.c.l.b16 %v598
        %v727 = vunpack.c.l.b16 %v600
        %v728 = vunpack.c.l.b16 %v602
        %v729 = vunpack.c.l.b16 %v604
        %v730 = vunpack.c.l.b16 %v606
        %v731 = vunpack.c.l.b16 %v608
        %v732 = vunpack.c.l.b16 %v610
        %v733 = vunpack.c.l.b16 %v612
        %v734 = vunpack.c.l.b16 %v614
        %v735 = vunpack.c.l.b16 %v616
        %v736 = vunpack.c.l.b16 %v618
        %v737 = vunpack.c.l.b16 %v620
        %v738 = vunpack.c.l.b16 %v622
        %v739 = vunpack.c.l.b16 %v624
        %v740 = vpack.c.b16 %v725, %v724
        %v741 = vpack.c.b16 %v727, %v726
        %v742 = vpack.c.b16 %v729, %v728
        %v743 = vpack.c.b16 %v731, %v730
        %v744 = vpack.c.b16 %v733, %v732
        %v745 = vpack.c.b16 %v735, %v734
        %v746 = vpack.c.b16 %v737, %v736
        %v747 = vpack.c.b16 %v739, %v738
        %756 = vmatprep.subr.bf16.mxu0 0
        %757 = vmatpush1.bf16.msra.mxu0 %v740
        %758 = vmatprep.subr.bf16.mxu0 0
        %759 = vmatpush1.bf16.msra.mxu0 %v741
        %760 = vmatprep.subr.bf16.mxu0 0
        %761 = vmatpush1.bf16.msra.mxu0 %v742
        %762 = vmatprep.subr.bf16.mxu0 0
        %763 = vmatpush1.bf16.msra.mxu0 %v743
        %764 = vmatprep.subr.bf16.mxu0 0
        %765 = vmatpush1.bf16.msra.mxu0 %v744
        %766 = vmatprep.subr.bf16.mxu0 0
        %767 = vmatpush1.bf16.msra.mxu0 %v745
        %768 = vmatprep.subr.bf16.mxu0 0
        %769 = vmatpush1.bf16.msra.mxu0 %v746
        %770 = vmatprep.subr.bf16.mxu0 0
        %771 = vmatpush1.bf16.msra.mxu0 %v747
        %772 = vmatprep.subr.bf16.mxu0 0
        %773 = vmatpush1.bf16.msra.mxu0 0
        %774 = vmatprep.subr.bf16.mxu0 0
        %775 = vmatpush1.bf16.msra.mxu0 0
        %776 = vmatprep.subr.bf16.mxu0 0
        %777 = vmatpush1.bf16.msra.mxu0 0
        %778 = vmatprep.subr.bf16.mxu0 0
        %779 = vmatpush1.bf16.msra.mxu0 0
        %780 = vmatprep.subr.bf16.mxu0 0
        %781 = vmatpush1.bf16.msra.mxu0 0
        %782 = vmatprep.subr.bf16.mxu0 0
        %783 = vmatpush1.bf16.msra.mxu0 0
        %784 = vmatprep.subr.bf16.mxu0 0
        %785 = vmatpush1.bf16.msra.mxu0 0
        %786 = vmatprep.subr.bf16.mxu0 0
        %787 = vmatpush1.bf16.msra.mxu0 0
        %788 = vmatprep.mubr.bf16.mxu0 0
        %789 = vmatmul.mubr.bf16.gmra.mrb[0].mxu0 %v707
        %v790 = vpop.f32.mrb[0].mxu0
        %v791 = vadd.f32 0.0, %v790
        %v792 = vpop.f32.mrb[0].mxu0
        %v793 = vpop.f32.mrb[0].mxu0
        %v794 = vadd.f32 0.0, %v793
        %v795 = vpop.f32.mrb[0].mxu0
        %796 = vdwg.mxu0
        %v813 = vunpack.c.h.b16 %v594
        %v814 = vunpack.c.l.b16 %v595
        %v815 = vunpack.c.h.b16 %v596
        %v816 = vunpack.c.l.b16 %v597
        %v817 = vunpack.c.h.b16 %v598
        %v818 = vunpack.c.l.b16 %v599
        %v819 = vunpack.c.h.b16 %v600
        %v820 = vunpack.c.l.b16 %v601
        %v821 = vunpack.c.h.b16 %v602
        %v822 = vunpack.c.l.b16 %v603
        %v823 = vunpack.c.h.b16 %v604
        %v824 = vunpack.c.l.b16 %v605
        %v825 = vunpack.c.h.b16 %v606
        %v826 = vunpack.c.l.b16 %v607
        %v827 = vunpack.c.h.b16 %v608
        %v828 = vunpack.c.l.b16 %v609
        %v829 = vunpack.c.h.b16 %v610
        %v830 = vunpack.c.l.b16 %v611
        %v831 = vunpack.c.h.b16 %v612
        %v832 = vunpack.c.l.b16 %v613
        %v833 = vunpack.c.h.b16 %v614
        %v834 = vunpack.c.l.b16 %v615
        %v835 = vunpack.c.h.b16 %v616
        %v836 = vunpack.c.l.b16 %v617
        %v837 = vunpack.c.h.b16 %v618
        %v838 = vunpack.c.l.b16 %v619
        %v839 = vunpack.c.h.b16 %v620
        %v840 = vunpack.c.l.b16 %v621
        %v841 = vunpack.c.h.b16 %v622
        %v842 = vunpack.c.l.b16 %v623
        %v843 = vunpack.c.h.b16 %v624
        %v844 = vunpack.c.l.b16 %v625
        %v845 = vpack.c.b16 %v815, %v813
        %v846 = vpack.c.b16 %v816, %v814
        %v847 = vpack.c.b16 %v819, %v817
        %v848 = vpack.c.b16 %v820, %v818
        %v849 = vpack.c.b16 %v823, %v821
        %v850 = vpack.c.b16 %v824, %v822
        %v851 = vpack.c.b16 %v827, %v825
        %v852 = vpack.c.b16 %v828, %v826
        %v853 = vpack.c.b16 %v831, %v829
        %v854 = vpack.c.b16 %v832, %v830
        %v855 = vpack.c.b16 %v835, %v833
        %v856 = vpack.c.b16 %v836, %v834
        %v857 = vpack.c.b16 %v839, %v837
        %v858 = vpack.c.b16 %v840, %v838
        %v859 = vpack.c.b16 %v843, %v841
        %v860 = vpack.c.b16 %v844, %v842
        %877 = vmatprep.subr.bf16.mxu0 %v846
        %878 = vmatpush1.bf16.msra.mxu0 %v845
        %879 = vmatprep.subr.bf16.mxu0 %v848
        %880 = vmatpush1.bf16.msra.mxu0 %v847
        %881 = vmatprep.subr.bf16.mxu0 %v850
        %882 = vmatpush1.bf16.msra.mxu0 %v849
        %883 = vmatprep.subr.bf16.mxu0 %v852
        %884 = vmatpush1.bf16.msra.mxu0 %v851
        %885 = vmatprep.subr.bf16.mxu0 %v854
        %886 = vmatpush1.bf16.msra.mxu0 %v853
        %887 = vmatprep.subr.bf16.mxu0 %v856
        %888 = vmatpush1.bf16.msra.mxu0 %v855
        %889 = vmatprep.subr.bf16.mxu0 %v858
        %890 = vmatpush1.bf16.msra.mxu0 %v857
        %891 = vmatprep.subr.bf16.mxu0 %v860
        %892 = vmatpush1.bf16.msra.mxu0 %v859
        %893 = vmatprep.subr.bf16.mxu0 0
        %894 = vmatpush1.bf16.msra.mxu0 0
        %895 = vmatprep.subr.bf16.mxu0 0
        %896 = vmatpush1.bf16.msra.mxu0 0
        %897 = vmatprep.subr.bf16.mxu0 0
        %898 = vmatpush1.bf16.msra.mxu0 0
        %899 = vmatprep.subr.bf16.mxu0 0
        %900 = vmatpush1.bf16.msra.mxu0 0
        %901 = vmatprep.subr.bf16.mxu0 0
        %902 = vmatpush1.bf16.msra.mxu0 0
        %903 = vmatprep.subr.bf16.mxu0 0
        %904 = vmatpush1.bf16.msra.mxu0 0
        %905 = vmatprep.subr.bf16.mxu0 0
        %906 = vmatpush1.bf16.msra.mxu0 0
        %907 = vmatprep.subr.bf16.mxu0 0
        %908 = vmatpush1.bf16.msra.mxu0 0
        %909 = vmatprep.mubr.bf16.mxu0 0
        %910 = vmatmul.mubr.bf16.gmra.mrb[0].mxu0 %v707
        %v911 = vpop.f32.mrb[0].mxu0
        %v912 = vadd.f32 0.0, %v911
        %v913 = vpop.f32.mrb[0].mxu0
        %v914 = vadd.f32 0.0, %v913
        %v915 = vpop.f32.mrb[0].mxu0
        %v916 = vadd.f32 0.0, %v915
        %v917 = vpop.f32.mrb[0].mxu0
        %v918 = vadd.f32 0.0, %v917
        %919 = vdwg.mxu0
        %vm920 = vcmp.gt.f32.partialorder %v791, 0.0
        %vm921 = vcmp.gt.f32.partialorder %v794, 0.0
        %v922 = vadd.f32 %v791, 1.0
        %v923 = vadd.f32 %v794, 1.0
        %v924 = vmul.f32 %v791, 1.442695
        %v925 = vpow.pop %v924
        %v926 = vmul.f32 %v794, 1.442695
        %v927 = vpow.pop %v926
        %v928 = vsel %vm920, %v922, %v925
        %v929 = vsel %vm921, %v923, %v927
        %vm930 = vcmp.gt.f32.partialorder %v912, 0.0
        %vm931 = vcmp.gt.f32.partialorder %v916, 0.0
        %v932 = vadd.f32 %v912, 1.0
        %v933 = vadd.f32 %v916, 1.0
        %v934 = vmul.f32 %v912, 1.442695
        %v935 = vpow.pop %v934
        %v936 = vmul.f32 %v916, 1.442695
        %v937 = vpow.pop %v936
        %v938 = vsel %vm930, %v932, %v935
        %v939 = vsel %vm931, %v933, %v937
        %v940 = vpack.c.bf16 %v939, %v938
        %v941 = vpack.c.bf16 %v918, %v914
        %942 = vxpose.xlu0.c.b16.start [1/8] %v940, 128
        %943 = vxpose.xlu0.c.b16.cont [2/8] 0, 128
        %944 = vxpose.xlu0.c.b16.cont [3/8] 0, 128
        %945 = vxpose.xlu0.c.b16.cont [4/8] 0, 128
        %946 = vxpose.xlu0.c.b16.cont [5/8] 0, 128
        %947 = vxpose.xlu0.c.b16.cont [6/8] 0, 128
        %948 = vxpose.xlu0.c.b16.cont [7/8] 0, 128
        %949 = vxpose.xlu0.c.b16.end [8/8] 0, 128
        %v950 = vpop.trf.xlu0
        %v951 = vpop.trf.xlu0
        %v952 = vpop.trf.xlu0
        %v953 = vpop.trf.xlu0
        %v954 = vpop.trf.xlu0
        %v955 = vpop.trf.xlu0
        %v956 = vpop.trf.xlu0
        %v957 = vpop.trf.xlu0
        %vm958 = vcmask 130048
        %v960 = vsel %vm958, %v950, 0
        %v963 = vsel %vm958, %v951, 0
        %v966 = vsel %vm958, %v952, 0
        %v969 = vsel %vm958, %v953, 0
        %v972 = vsel %vm958, %v954, 0
        %v975 = vsel %vm958, %v955, 0
        %v978 = vsel %vm958, %v956, 0
        %v981 = vsel %vm958, %v957, 0
        %983 = vmatprep.subr.bf16.mxu0 0
        %984 = vmatpush1.bf16.msra.mxu0 %v941
        %985 = vmatprep.subr.bf16.mxu0 0
        %986 = vmatpush1.bf16.msra.mxu0 0
        %987 = vmatprep.subr.bf16.mxu0 0
        %988 = vmatpush1.bf16.msra.mxu0 0
        %989 = vmatprep.subr.bf16.mxu0 0
        %990 = vmatpush1.bf16.msra.mxu0 0
        %991 = vmatprep.subr.bf16.mxu0 0
        %992 = vmatpush1.bf16.msra.mxu0 0
        %993 = vmatprep.subr.bf16.mxu0 0
        %994 = vmatpush1.bf16.msra.mxu0 0
        %995 = vmatprep.subr.bf16.mxu0 0
        %996 = vmatpush1.bf16.msra.mxu0 0
        %997 = vmatprep.subr.bf16.mxu0 0
        %998 = vmatpush1.bf16.msra.mxu0 0
        %999 = vmatprep.subr.bf16.mxu0 0
        %1000 = vmatpush1.bf16.msra.mxu0 0
        %1001 = vmatprep.subr.bf16.mxu0 0
        %1002 = vmatpush1.bf16.msra.mxu0 0
        %1003 = vmatprep.subr.bf16.mxu0 0
        %1004 = vmatpush1.bf16.msra.mxu0 0
        %1005 = vmatprep.subr.bf16.mxu0 0
        %1006 = vmatpush1.bf16.msra.mxu0 0
        %1007 = vmatprep.subr.bf16.mxu0 0
        %1008 = vmatpush1.bf16.msra.mxu0 0
        %1009 = vmatprep.subr.bf16.mxu0 0
        %1010 = vmatpush1.bf16.msra.mxu0 0
        %1011 = vmatprep.subr.bf16.mxu0 0
        %1012 = vmatpush1.bf16.msra.mxu0 0
        %1013 = vmatprep.subr.bf16.mxu0 0
        %1014 = vmatpush1.bf16.msra.mxu0 0
        %1015 = vmatprep.mubr.bf16.mxu0 0
        %1016 = vmatmul.mubr.bf16.gmra.mrb[0].mxu0 %v960
        %v1017 = vpop.f32.mrb[0].mxu0
        %v1018 = vadd.f32 0.0, %v1017
        %v1019 = vpop.f32.mrb[0].mxu0
        %v1020 = vpop.f32.mrb[0].mxu0
        %v1021 = vadd.f32 0.0, %v1020
        %v1022 = vpop.f32.mrb[0].mxu0
        %1023 = vmatprep.mubr.bf16.mxu0 0
        %1024 = vmatmul.mubr.bf16.gmra.mrb[0].mxu0 %v963
        %v1025 = vpop.f32.mrb[0].mxu0
        %v1026 = vadd.f32 0.0, %v1025
        %v1027 = vpop.f32.mrb[0].mxu0
        %v1028 = vpop.f32.mrb[0].mxu0
        %v1029 = vadd.f32 0.0, %v1028
        %v1030 = vpop.f32.mrb[0].mxu0
        %1031 = vmatprep.mubr.bf16.mxu0 0
        %1032 = vmatmul.mubr.bf16.gmra.mrb[0].mxu0 %v966
        %v1033 = vpop.f32.mrb[0].mxu0
        %v1034 = vadd.f32 0.0, %v1033
        %v1035 = vpop.f32.mrb[0].mxu0
        %v1036 = vpop.f32.mrb[0].mxu0
        %v1037 = vadd.f32 0.0, %v1036
        %v1038 = vpop.f32.mrb[0].mxu0
        %1039 = vmatprep.mubr.bf16.mxu0 0
        %1040 = vmatmul.mubr.bf16.gmra.mrb[0].mxu0 %v969
        %v1041 = vpop.f32.mrb[0].mxu0
        %v1042 = vadd.f32 0.0, %v1041
        %v1043 = vpop.f32.mrb[0].mxu0
        %v1044 = vpop.f32.mrb[0].mxu0
        %v1045 = vadd.f32 0.0, %v1044
        %v1046 = vpop.f32.mrb[0].mxu0
        %1047 = vmatprep.mubr.bf16.mxu0 0
        %1048 = vmatmul.mubr.bf16.gmra.mrb[0].mxu0 %v972
        %v1049 = vpop.f32.mrb[0].mxu0
        %v1050 = vadd.f32 0.0, %v1049
        %v1051 = vpop.f32.mrb[0].mxu0
        %v1052 = vpop.f32.mrb[0].mxu0
        %v1053 = vadd.f32 0.0, %v1052
        %v1054 = vpop.f32.mrb[0].mxu0
        %1055 = vmatprep.mubr.bf16.mxu0 0
        %1056 = vmatmul.mubr.bf16.gmra.mrb[0].mxu0 %v975
        %v1057 = vpop.f32.mrb[0].mxu0
        %v1058 = vadd.f32 0.0, %v1057
        %v1059 = vpop.f32.mrb[0].mxu0
        %v1060 = vpop.f32.mrb[0].mxu0
        %v1061 = vadd.f32 0.0, %v1060
        %v1062 = vpop.f32.mrb[0].mxu0
        %1063 = vmatprep.mubr.bf16.mxu0 0
        %1064 = vmatmul.mubr.bf16.gmra.mrb[0].mxu0 %v978
        %v1065 = vpop.f32.mrb[0].mxu0
        %v1066 = vadd.f32 0.0, %v1065
        %v1067 = vpop.f32.mrb[0].mxu0
        %v1068 = vpop.f32.mrb[0].mxu0
        %v1069 = vadd.f32 0.0, %v1068
        %v1070 = vpop.f32.mrb[0].mxu0
        %1071 = vmatprep.mubr.bf16.mxu0 0
        %1072 = vmatmul.mubr.bf16.gmra.mrb[0].mxu0 %v981
        %v1073 = vpop.f32.mrb[0].mxu0
        %v1074 = vadd.f32 0.0, %v1073
        %v1075 = vpop.f32.mrb[0].mxu0
        %v1076 = vpop.f32.mrb[0].mxu0
        %v1077 = vadd.f32 0.0, %v1076
        %v1078 = vpop.f32.mrb[0].mxu0
        %1079 = vdwg.mxu0
        %v1080 = vpack.c.bf16 %v1021, %v1018
        %v1081 = vpack.c.bf16 %v1029, %v1026
        %v1082 = vpack.c.bf16 %v1037, %v1034
        %v1083 = vpack.c.bf16 %v1045, %v1042
        %v1084 = vpack.c.bf16 %v1053, %v1050
        %v1085 = vpack.c.bf16 %v1061, %v1058
        %v1086 = vpack.c.bf16 %v1069, %v1066
        %v1087 = vpack.c.bf16 %v1077, %v1074
        %v1104 = vunpack.c.l.b16 %v561
        %v1105 = vunpack.c.l.b16 %v562
        %v1106 = vunpack.c.l.b16 %v563
        %v1107 = vunpack.c.l.b16 %v564
        %v1108 = vunpack.c.l.b16 %v565
        %v1109 = vunpack.c.l.b16 %v566
        %v1110 = vunpack.c.l.b16 %v567
        %v1111 = vunpack.c.l.b16 %v568
        %v1112 = vunpack.c.l.b16 %v569
        %v1113 = vunpack.c.l.b16 %v570
        %v1114 = vunpack.c.l.b16 %v571
        %v1115 = vunpack.c.l.b16 %v572
        %v1116 = vunpack.c.l.b16 %v573
        %v1117 = vunpack.c.l.b16 %v574
        %v1118 = vunpack.c.l.b16 %v575
        %v1119 = vunpack.c.l.b16 %v576
        %v1120 = vpack.c.b16 %v1105, %v1104
        %v1121 = vpack.c.b16 %v1107, %v1106
        %v1122 = vpack.c.b16 %v1109, %v1108
        %v1123 = vpack.c.b16 %v1111, %v1110
        %v1124 = vpack.c.b16 %v1113, %v1112
        %v1125 = vpack.c.b16 %v1115, %v1114
        %v1126 = vpack.c.b16 %v1117, %v1116
        %v1127 = vpack.c.b16 %v1119, %v1118
        %v1136 = vmul.bf16 %v1080, %v1120
        %v1137 = vmul.bf16 %v1081, %v1121
        %v1138 = vmul.bf16 %v1082, %v1122
        %v1139 = vmul.bf16 %v1083, %v1123
        %v1140 = vmul.bf16 %v1084, %v1124
        %v1141 = vmul.bf16 %v1085, %v1125
        %v1142 = vmul.bf16 %v1086, %v1126
        %v1143 = vmul.bf16 %v1087, %v1127
        %v1144 = vpack.c.bf16 %v929, %v928
        %1145 = vmatprep.subr.bf16.mxu0 0
        %1146 = vmatpush1.bf16.msra.mxu0 %v1136
        %1147 = vmatprep.subr.bf16.mxu0 0
        %1148 = vmatpush1.bf16.msra.mxu0 %v1137
        %1149 = vmatprep.subr.bf16.mxu0 0
        %1150 = vmatpush1.bf16.msra.mxu0 %v1138
        %1151 = vmatprep.subr.bf16.mxu0 0
        %1152 = vmatpush1.bf16.msra.mxu0 %v1139
        %1153 = vmatprep.subr.bf16.mxu0 0
        %1154 = vmatpush1.bf16.msra.mxu0 %v1140
        %1155 = vmatprep.subr.bf16.mxu0 0
        %1156 = vmatpush1.bf16.msra.mxu0 %v1141
        %1157 = vmatprep.subr.bf16.mxu0 0
        %1158 = vmatpush1.bf16.msra.mxu0 %v1142
        %1159 = vmatprep.subr.bf16.mxu0 0
        %1160 = vmatpush1.bf16.msra.mxu0 %v1143
        %1161 = vmatprep.subr.bf16.mxu0 0
        %1162 = vmatpush1.bf16.msra.mxu0 0
        %1163 = vmatprep.subr.bf16.mxu0 0
        %1164 = vmatpush1.bf16.msra.mxu0 0
        %1165 = vmatprep.subr.bf16.mxu0 0
        %1166 = vmatpush1.bf16.msra.mxu0 0
        %1167 = vmatprep.subr.bf16.mxu0 0
        %1168 = vmatpush1.bf16.msra.mxu0 0
        %1169 = vmatprep.subr.bf16.mxu0 0
        %1170 = vmatpush1.bf16.msra.mxu0 0
        %1171 = vmatprep.subr.bf16.mxu0 0
        %1172 = vmatpush1.bf16.msra.mxu0 0
        %1173 = vmatprep.subr.bf16.mxu0 0
        %1174 = vmatpush1.bf16.msra.mxu0 0
        %1175 = vmatprep.subr.bf16.mxu0 0
        %1176 = vmatpush1.bf16.msra.mxu0 0
        %1177 = vmatprep.mubr.bf16.mxu0 0
        %1178 = vmatmul.mubr.bf16.gmra.mrb[0].mxu0 %v1144
        %v1179 = vpop.f32.mrb[0].mxu0
        %v1180 = vadd.f32 0.0, %v1179
        %v1181 = vpop.f32.mrb[0].mxu0
        %v1182 = vpop.f32.mrb[0].mxu0
        %v1183 = vadd.f32 0.0, %v1182
        %v1184 = vpop.f32.mrb[0].mxu0
        %1185 = vdwg.mxu0
        %v1186 = vadd.f32 %v938, %v939
        %v1187 = vrot.slane %v1186, 4
        %v1188 = vadd.f32 %v1186, %v1187
        %v1189 = vrot.slane %v1188, 2
        %v1190 = vadd.f32 %v1188, %v1189
        %v1191 = vrot.slane %v1190, 1
        %v1192 = vadd.f32 %v1190, %v1191
        %v1193 = vmul.f32 %v928, %v1192
        %v1194 = vmul.f32 %v929, %v1192
        %1195 = vmatprep.subr.mxu0 0.0
        %1196 = vmatpush1.msra.mxu0 %v577
        %1197 = vmatprep.subr.mxu0 0.0
        %1198 = vmatpush1.msra.mxu0 %v578
        %1199 = vmatprep.subr.mxu0 0.0
        %1200 = vmatpush1.msra.mxu0 %v579
        %1201 = vmatprep.subr.mxu0 0.0
        %1202 = vmatpush1.msra.mxu0 %v580
        %1203 = vmatprep.subr.mxu0 0.0
        %1204 = vmatpush1.msra.mxu0 %v581
        %1205 = vmatprep.subr.mxu0 0.0
        %1206 = vmatpush1.msra.mxu0 %v582
        %1207 = vmatprep.subr.mxu0 0.0
        %1208 = vmatpush1.msra.mxu0 %v583
        %1209 = vmatprep.subr.mxu0 0.0
        %1210 = vmatpush1.msra.mxu0 %v584
        %1211 = vmatprep.subr.mxu0 0.0
        %1212 = vmatpush1.msra.mxu0 %v585
        %1213 = vmatprep.subr.mxu0 0.0
        %1214 = vmatpush1.msra.mxu0 %v586
        %1215 = vmatprep.subr.mxu0 0.0
        %1216 = vmatpush1.msra.mxu0 %v587
        %1217 = vmatprep.subr.mxu0 0.0
        %1218 = vmatpush1.msra.mxu0 %v588
        %1219 = vmatprep.subr.mxu0 0.0
        %1220 = vmatpush1.msra.mxu0 %v589
        %1221 = vmatprep.subr.mxu0 0.0
        %1222 = vmatpush1.msra.mxu0 %v590
        %1223 = vmatprep.subr.mxu0 0.0
        %1224 = vmatpush1.msra.mxu0 %v591
        %1225 = vmatprep.subr.mxu0 0.0
        %1226 = vmatpush1.msra.mxu0 %v592
        %1227 = vmatprep.subr.mxu0 0.0
        %1228 = vmatpush1.msra.mxu0 0.0
        %1229 = vmatprep.subr.mxu0 0.0
        %1230 = vmatpush1.msra.mxu0 0.0
        %1231 = vmatprep.subr.mxu0 0.0
        %1232 = vmatpush1.msra.mxu0 0.0
        %1233 = vmatprep.subr.mxu0 0.0
        %1234 = vmatpush1.msra.mxu0 0.0
        %1235 = vmatprep.subr.mxu0 0.0
        %1236 = vmatpush1.msra.mxu0 0.0
        %1237 = vmatprep.subr.mxu0 0.0
        %1238 = vmatpush1.msra.mxu0 0.0
        %1239 = vmatprep.subr.mxu0 0.0
        %1240 = vmatpush1.msra.mxu0 0.0
        %1241 = vmatprep.subr.mxu0 0.0
        %1242 = vmatpush1.msra.mxu0 0.0
        %1243 = vmatprep.subr.mxu0 0.0
        %1244 = vmatpush1.msra.mxu0 0.0
        %1245 = vmatprep.subr.mxu0 0.0
        %1246 = vmatpush1.msra.mxu0 0.0
        %1247 = vmatprep.subr.mxu0 0.0
        %1248 = vmatpush1.msra.mxu0 0.0
        %1249 = vmatprep.subr.mxu0 0.0
        %1250 = vmatpush1.msra.mxu0 0.0
        %1251 = vmatprep.subr.mxu0 0.0
        %1252 = vmatpush1.msra.mxu0 0.0
        %1253 = vmatprep.subr.mxu0 0.0
        %1254 = vmatpush1.msra.mxu0 0.0
        %1255 = vmatprep.subr.mxu0 0.0
        %1256 = vmatpush1.msra.mxu0 0.0
        %1257 = vmatprep.subr.mxu0 0.0
        %1258 = vmatpush1.msra.mxu0 0.0
        %1259 = vmatprep.mubr.f32.mxu0 0.0
        %1260 = vmatmul.mubr.f32.gmra.mrb[0].mxu0 %v1193
        %v1261 = vpop.f32.mrb[0].mxu0
        %v1262 = vadd.f32 0.0, %v1261
        %v1263 = vpop.f32.mrb[0].mxu0
        %1264 = vmatprep.mubr.f32.mxu0 0.0
        %1265 = vmatmul.mubr.f32.gmra.mrb[0].mxu0 %v1194
        %v1266 = vpop.f32.mrb[0].mxu0
        %v1267 = vadd.f32 0.0, %v1266
        %v1268 = vpop.f32.mrb[0].mxu0
        %1269 = vdwg.mxu0
        %vm1270 = vcmask 31744
        %v1272 = vsel %vm1270, %v1262, 0
        %v1275 = vsel %vm1270, %v1267, 0
        %vm1277 = vcmask 1043456
        %v1279 = vsel %vm1277, %v593, 0
        %1281 = vmatprep.subr.mxu0 0.0
        %1282 = vmatpush1.msra.mxu0 %v1279
        %1283 = vmatprep.subr.mxu0 0.0
        %1284 = vmatpush1.msra.mxu0 0.0
        %1285 = vmatprep.subr.mxu0 0.0
        %1286 = vmatpush1.msra.mxu0 0.0
        %1287 = vmatprep.subr.mxu0 0.0
        %1288 = vmatpush1.msra.mxu0 0.0
        %1289 = vmatprep.subr.mxu0 0.0
        %1290 = vmatpush1.msra.mxu0 0.0
        %1291 = vmatprep.subr.mxu0 0.0
        %1292 = vmatpush1.msra.mxu0 0.0
        %1293 = vmatprep.subr.mxu0 0.0
        %1294 = vmatpush1.msra.mxu0 0.0
        %1295 = vmatprep.subr.mxu0 0.0
        %1296 = vmatpush1.msra.mxu0 0.0
        %1297 = vmatprep.subr.mxu0 0.0
        %1298 = vmatpush1.msra.mxu0 0.0
        %1299 = vmatprep.subr.mxu0 0.0
        %1300 = vmatpush1.msra.mxu0 0.0
        %1301 = vmatprep.subr.mxu0 0.0
        %1302 = vmatpush1.msra.mxu0 0.0
        %1303 = vmatprep.subr.mxu0 0.0
        %1304 = vmatpush1.msra.mxu0 0.0
        %1305 = vmatprep.subr.mxu0 0.0
        %1306 = vmatpush1.msra.mxu0 0.0
        %1307 = vmatprep.subr.mxu0 0.0
        %1308 = vmatpush1.msra.mxu0 0.0
        %1309 = vmatprep.subr.mxu0 0.0
        %1310 = vmatpush1.msra.mxu0 0.0
        %1311 = vmatprep.subr.mxu0 0.0
        %1312 = vmatpush1.msra.mxu0 0.0
        %1313 = vmatprep.subr.mxu0 0.0
        %1314 = vmatpush1.msra.mxu0 0.0
        %1315 = vmatprep.subr.mxu0 0.0
        %1316 = vmatpush1.msra.mxu0 0.0
        %1317 = vmatprep.subr.mxu0 0.0
        %1318 = vmatpush1.msra.mxu0 0.0
        %1319 = vmatprep.subr.mxu0 0.0
        %1320 = vmatpush1.msra.mxu0 0.0
        %1321 = vmatprep.subr.mxu0 0.0
        %1322 = vmatpush1.msra.mxu0 0.0
        %1323 = vmatprep.subr.mxu0 0.0
        %1324 = vmatpush1.msra.mxu0 0.0
        %1325 = vmatprep.subr.mxu0 0.0
        %1326 = vmatpush1.msra.mxu0 0.0
        %1327 = vmatprep.subr.mxu0 0.0
        %1328 = vmatpush1.msra.mxu0 0.0
        %1329 = vmatprep.subr.mxu0 0.0
        %1330 = vmatpush1.msra.mxu0 0.0
        %1331 = vmatprep.subr.mxu0 0.0
        %1332 = vmatpush1.msra.mxu0 0.0
        %1333 = vmatprep.subr.mxu0 0.0
        %1334 = vmatpush1.msra.mxu0 0.0
        %1335 = vmatprep.subr.mxu0 0.0
        %1336 = vmatpush1.msra.mxu0 0.0
        %1337 = vmatprep.subr.mxu0 0.0
        %1338 = vmatpush1.msra.mxu0 0.0
        %1339 = vmatprep.subr.mxu0 0.0
        %1340 = vmatpush1.msra.mxu0 0.0
        %1341 = vmatprep.subr.mxu0 0.0
        %1342 = vmatpush1.msra.mxu0 0.0
        %1343 = vmatprep.subr.mxu0 0.0
        %1344 = vmatpush1.msra.mxu0 0.0
        %1345 = vmatprep.mubr.f32.mxu0 0.0
        %1346 = vmatmul.mubr.f32.gmra.mrb[0].mxu0 %v1272
        %v1347 = vpop.f32.mrb[0].mxu0
        %v1348 = vadd.f32 1e-06, %v1347
        %v1349 = vpop.f32.mrb[0].mxu0
        %1350 = vmatprep.mubr.f32.mxu0 0.0
        %1351 = vmatmul.mubr.f32.gmra.mrb[0].mxu0 %v1275
        %v1352 = vpop.f32.mrb[0].mxu0
        %v1353 = vadd.f32 1e-06, %v1352
        %v1354 = vpop.f32.mrb[0].mxu0
        %1355 = vdwg.mxu0
        %v1356 = vrcp.pop %v1348
        %v1357 = vrcp.pop %v1353
        %v1358 = vmul.f32 %v1180, %v1356
        %v1359 = vmul.f32 %v1183, %v1357
        %v1360 = vpack.c.bf16 %v1359, %v1358
        %v1377 = vunpack.c.l.b16 %v626
        %v1378 = vunpack.c.l.b16 %v627
        %v1379 = vunpack.c.l.b16 %v628
        %v1380 = vunpack.c.l.b16 %v629
        %v1381 = vunpack.c.l.b16 %v630
        %v1382 = vunpack.c.l.b16 %v631
        %v1383 = vunpack.c.l.b16 %v632
        %v1384 = vunpack.c.l.b16 %v633
        %v1385 = vunpack.c.l.b16 %v634
        %v1386 = vunpack.c.l.b16 %v635
        %v1387 = vunpack.c.l.b16 %v636
        %v1388 = vunpack.c.l.b16 %v637
        %v1389 = vunpack.c.l.b16 %v638
        %v1390 = vunpack.c.l.b16 %v639
        %v1391 = vunpack.c.l.b16 %v640
        %v1392 = vunpack.c.l.b16 %v641
        %v1393 = vpack.c.b16 %v1378, %v1377
        %v1394 = vpack.c.b16 %v1380, %v1379
        %v1395 = vpack.c.b16 %v1382, %v1381
        %v1396 = vpack.c.b16 %v1384, %v1383
        %v1397 = vpack.c.b16 %v1386, %v1385
        %v1398 = vpack.c.b16 %v1388, %v1387
        %v1399 = vpack.c.b16 %v1390, %v1389
        %v1400 = vpack.c.b16 %v1392, %v1391
        %1409 = vmatprep.subr.bf16.mxu0 0
        %1410 = vmatpush1.bf16.msra.mxu0 %v1393
        %1411 = vmatprep.subr.bf16.mxu0 0
        %1412 = vmatpush1.bf16.msra.mxu0 %v1394
        %1413 = vmatprep.subr.bf16.mxu0 0
        %1414 = vmatpush1.bf16.msra.mxu0 %v1395
        %1415 = vmatprep.subr.bf16.mxu0 0
        %1416 = vmatpush1.bf16.msra.mxu0 %v1396
        %1417 = vmatprep.subr.bf16.mxu0 0
        %1418 = vmatpush1.bf16.msra.mxu0 %v1397
        %1419 = vmatprep.subr.bf16.mxu0 0
        %1420 = vmatpush1.bf16.msra.mxu0 %v1398
        %1421 = vmatprep.subr.bf16.mxu0 0
        %1422 = vmatpush1.bf16.msra.mxu0 %v1399
        %1423 = vmatprep.subr.bf16.mxu0 0
        %1424 = vmatpush1.bf16.msra.mxu0 %v1400
        %1425 = vmatprep.subr.bf16.mxu0 0
        %1426 = vmatpush1.bf16.msra.mxu0 0
        %1427 = vmatprep.subr.bf16.mxu0 0
        %1428 = vmatpush1.bf16.msra.mxu0 0
        %1429 = vmatprep.subr.bf16.mxu0 0
        %1430 = vmatpush1.bf16.msra.mxu0 0
        %1431 = vmatprep.subr.bf16.mxu0 0
        %1432 = vmatpush1.bf16.msra.mxu0 0
        %1433 = vmatprep.subr.bf16.mxu0 0
        %1434 = vmatpush1.bf16.msra.mxu0 0
        %1435 = vmatprep.subr.bf16.mxu0 0
        %1436 = vmatpush1.bf16.msra.mxu0 0
        %1437 = vmatprep.subr.bf16.mxu0 0
        %1438 = vmatpush1.bf16.msra.mxu0 0
        %1439 = vmatprep.subr.bf16.mxu0 0
        %1440 = vmatpush1.bf16.msra.mxu0 0
        %1441 = vmatprep.mubr.bf16.mxu0 0
        %1442 = vmatmul.mubr.bf16.gmra.mrb[0].mxu0 %v1360
        %v1443 = vpop.f32.mrb[0].mxu0
        %v1444 = vadd.f32 0.0, %v1443
        %v1445 = vpop.f32.mrb[0].mxu0
        %v1446 = vpop.f32.mrb[0].mxu0
        %v1447 = vadd.f32 0.0, %v1446
        %v1448 = vpop.f32.mrb[0].mxu0
        %1449 = vdwg.mxu0
        %1450 = vadd.xlane.f32.xlu0 %v1444
        %v1451 = vpop.xlane.xlu0 %1450
        %1452 = vadd.xlane.f32.xlu0 %v1447
        %v1453 = vpop.xlane.xlu0 %1452
        %v1454 = vrcp.pop 128.0
        %v1455 = vmul.f32 %v1451, %v1454
        %v1456 = vmul.f32 %v1453, %v1454
        %v1457 = vsub.f32 %v1444, %v1455
        %v1458 = vsub.f32 %v1447, %v1456
        %v1459 = vmul.f32 %v1457, %v1457
        %v1460 = vmul.f32 %v1458, %v1458
        %1461 = vadd.xlane.f32.xlu0 %v1459
        %v1462 = vpop.xlane.xlu0 %1461
        %1463 = vadd.xlane.f32.xlu0 %v1460
        %v1464 = vpop.xlane.xlu0 %1463
        %v1465 = vmul.f32 %v1462, %v1454
        %v1466 = vmul.f32 %v1464, %v1454
        %v1467 = vadd.f32 %v1465, 1e-07
        %v1468 = vadd.f32 %v1466, 1e-07
        %v1469 = vrsqrt.pop %v1467
        %v1470 = vrsqrt.pop %v1468
        %v1471 = vmul.f32 %v1457, %v1469
        %v1472 = vmul.f32 %v1458, %v1470
        %v1473 = vlaneseq
        %v1474 = vshrl.u32 %v1473, 7
        %v1475 = vsub.s32 0, %v1474
        %v1476 = vrot.slane %v706, %v1475
        %v1477 = vmul.f32 %v1471, %v1476
        %v1478 = vmul.f32 %v1472, %v1476
        %v1479 = vlaneseq
        %v1480 = vshrl.u32 %v1479, 7
        %v1481 = vsub.s32 1, %v1480
        %v1482 = vrot.slane %v706, %v1481
        %v1483 = vadd.f32 %v1477, %v1482
        %v1484 = vadd.f32 %v1478, %v1482
        %v1485 = vpack.c.bf16 %v1484, %v1483
        %v1502 = vunpack.c.l.b16 %v658
        %v1503 = vunpack.c.h.b16 %v658
        %v1504 = vunpack.c.l.b16 %v659
        %v1505 = vunpack.c.h.b16 %v659
        %v1506 = vunpack.c.l.b16 %v660
        %v1507 = vunpack.c.h.b16 %v660
        %v1508 = vunpack.c.l.b16 %v661
        %v1509 = vunpack.c.h.b16 %v661
        %v1510 = vunpack.c.l.b16 %v662
        %v1511 = vunpack.c.h.b16 %v662
        %v1512 = vunpack.c.l.b16 %v663
        %v1513 = vunpack.c.h.b16 %v663
        %v1514 = vunpack.c.l.b16 %v664
        %v1515 = vunpack.c.h.b16 %v664
        %v1516 = vunpack.c.l.b16 %v665
        %v1517 = vunpack.c.h.b16 %v665
        %v1518 = vunpack.c.l.b16 %v666
        %v1519 = vunpack.c.h.b16 %v666
        %v1520 = vunpack.c.l.b16 %v667
        %v1521 = vunpack.c.h.b16 %v667
        %v1522 = vunpack.c.l.b16 %v668
        %v1523 = vunpack.c.h.b16 %v668
        %v1524 = vunpack.c.l.b16 %v669
        %v1525 = vunpack.c.h.b16 %v669
        %v1526 = vunpack.c.l.b16 %v670
        %v1527 = vunpack.c.h.b16 %v670
        %v1528 = vunpack.c.l.b16 %v671
        %v1529 = vunpack.c.h.b16 %v671
        %v1530 = vunpack.c.l.b16 %v672
        %v1531 = vunpack.c.h.b16 %v672
        %v1532 = vunpack.c.l.b16 %v673
        %v1533 = vunpack.c.h.b16 %v673
        %v1534 = vpack.c.b16 %v1504, %v1502
        %v1535 = vpack.c.b16 %v1505, %v1503
        %v1536 = vpack.c.b16 %v1508, %v1506
        %v1537 = vpack.c.b16 %v1509, %v1507
        %v1538 = vpack.c.b16 %v1512, %v1510
        %v1539 = vpack.c.b16 %v1513, %v1511
        %v1540 = vpack.c.b16 %v1516, %v1514
        %v1541 = vpack.c.b16 %v1517, %v1515
        %v1542 = vpack.c.b16 %v1520, %v1518
        %v1543 = vpack.c.b16 %v1521, %v1519
        %v1544 = vpack.c.b16 %v1524, %v1522
        %v1545 = vpack.c.b16 %v1525, %v1523
        %v1546 = vpack.c.b16 %v1528, %v1526
        %v1547 = vpack.c.b16 %v1529, %v1527
        %v1548 = vpack.c.b16 %v1532, %v1530
        %v1549 = vpack.c.b16 %v1533, %v1531
        %1566 = vmatprep.subr.bf16.mxu0 %v1535
        %1567 = vmatpush1.bf16.msra.mxu0 %v1534
        %1568 = vmatprep.subr.bf16.mxu0 %v1537
        %1569 = vmatpush1.bf16.msra.mxu0 %v1536
        %1570 = vmatprep.subr.bf16.mxu0 %v1539
        %1571 = vmatpush1.bf16.msra.mxu0 %v1538
        %1572 = vmatprep.subr.bf16.mxu0 %v1541
        %1573 = vmatpush1.bf16.msra.mxu0 %v1540
        %1574 = vmatprep.subr.bf16.mxu0 %v1543
        %1575 = vmatpush1.bf16.msra.mxu0 %v1542
        %1576 = vmatprep.subr.bf16.mxu0 %v1545
        %1577 = vmatpush1.bf16.msra.mxu0 %v1544
        %1578 = vmatprep.subr.bf16.mxu0 %v1547
        %1579 = vmatpush1.bf16.msra.mxu0 %v1546
        %1580 = vmatprep.subr.bf16.mxu0 %v1549
        %1581 = vmatpush1.bf16.msra.mxu0 %v1548
        %1582 = vmatprep.subr.bf16.mxu0 0
        %1583 = vmatpush1.bf16.msra.mxu0 0
        %1584 = vmatprep.subr.bf16.mxu0 0
        %1585 = vmatpush1.bf16.msra.mxu0 0
        %1586 = vmatprep.subr.bf16.mxu0 0
        %1587 = vmatpush1.bf16.msra.mxu0 0
        %1588 = vmatprep.subr.bf16.mxu0 0
        %1589 = vmatpush1.bf16.msra.mxu0 0
        %1590 = vmatprep.subr.bf16.mxu0 0
        %1591 = vmatpush1.bf16.msra.mxu0 0
        %1592 = vmatprep.subr.bf16.mxu0 0
        %1593 = vmatpush1.bf16.msra.mxu0 0
        %1594 = vmatprep.subr.bf16.mxu0 0
        %1595 = vmatpush1.bf16.msra.mxu0 0
        %1596 = vmatprep.subr.bf16.mxu0 0
        %1597 = vmatpush1.bf16.msra.mxu0 0
        %1598 = vmatprep.mubr.bf16.mxu0 0
        %1599 = vmatmul.mubr.bf16.gmra.mrb[0].mxu0 %v1485
        %v1600 = vpop.f32.mrb[0].mxu0
        %v1601 = vadd.f32 0.0, %v1600
        %v1602 = vpop.f32.mrb[0].mxu0
        %v1603 = vadd.f32 0.0, %v1602
        %v1604 = vpop.f32.mrb[0].mxu0
        %v1605 = vadd.f32 0.0, %v1604
        %v1606 = vpop.f32.mrb[0].mxu0
        %v1607 = vadd.f32 0.0, %v1606
        %1608 = vdwg.mxu0
        %v1625 = vunpack.c.l.b16 %v642
        %v1626 = vunpack.c.h.b16 %v642
        %v1627 = vunpack.c.l.b16 %v643
        %v1628 = vunpack.c.h.b16 %v643
        %v1629 = vunpack.c.l.b16 %v644
        %v1630 = vunpack.c.h.b16 %v644
        %v1631 = vunpack.c.l.b16 %v645
        %v1632 = vunpack.c.h.b16 %v645
        %v1633 = vunpack.c.l.b16 %v646
        %v1634 = vunpack.c.h.b16 %v646
        %v1635 = vunpack.c.l.b16 %v647
        %v1636 = vunpack.c.h.b16 %v647
        %v1637 = vunpack.c.l.b16 %v648
        %v1638 = vunpack.c.h.b16 %v648
        %v1639 = vunpack.c.l.b16 %v649
        %v1640 = vunpack.c.h.b16 %v649
        %v1641 = vunpack.c.l.b16 %v650
        %v1642 = vunpack.c.h.b16 %v650
        %v1643 = vunpack.c.l.b16 %v651
        %v1644 = vunpack.c.h.b16 %v651
        %v1645 = vunpack.c.l.b16 %v652
        %v1646 = vunpack.c.h.b16 %v652
        %v1647 = vunpack.c.l.b16 %v653
        %v1648 = vunpack.c.h.b16 %v653
        %v1649 = vunpack.c.l.b16 %v654
        %v1650 = vunpack.c.h.b16 %v654
        %v1651 = vunpack.c.l.b16 %v655
        %v1652 = vunpack.c.h.b16 %v655
        %v1653 = vunpack.c.l.b16 %v656
        %v1654 = vunpack.c.h.b16 %v656
        %v1655 = vunpack.c.l.b16 %v657
        %v1656 = vunpack.c.h.b16 %v657
        %v1657 = vpack.c.b16 %v1627, %v1625
        %v1658 = vpack.c.b16 %v1628, %v1626
        %v1659 = vpack.c.b16 %v1631, %v1629
        %v1660 = vpack.c.b16 %v1632, %v1630
        %v1661 = vpack.c.b16 %v1635, %v1633
        %v1662 = vpack.c.b16 %v1636, %v1634
        %v1663 = vpack.c.b16 %v1639, %v1637
        %v1664 = vpack.c.b16 %v1640, %v1638
        %v1665 = vpack.c.b16 %v1643, %v1641
        %v1666 = vpack.c.b16 %v1644, %v1642
        %v1667 = vpack.c.b16 %v1647, %v1645
        %v1668 = vpack.c.b16 %v1648, %v1646
        %v1669 = vpack.c.b16 %v1651, %v1649
        %v1670 = vpack.c.b16 %v1652, %v1650
        %v1671 = vpack.c.b16 %v1655, %v1653
        %v1672 = vpack.c.b16 %v1656, %v1654
        %1689 = vmatprep.subr.bf16.mxu0 %v1658
        %1690 = vmatpush1.bf16.msra.mxu0 %v1657
        %1691 = vmatprep.subr.bf16.mxu0 %v1660
        %1692 = vmatpush1.bf16.msra.mxu0 %v1659
        %1693 = vmatprep.subr.bf16.mxu0 %v1662
        %1694 = vmatpush1.bf16.msra.mxu0 %v1661
        %1695 = vmatprep.subr.bf16.mxu0 %v1664
        %1696 = vmatpush1.bf16.msra.mxu0 %v1663
        %1697 = vmatprep.subr.bf16.mxu0 %v1666
        %1698 = vmatpush1.bf16.msra.mxu0 %v1665
        %1699 = vmatprep.subr.bf16.mxu0 %v1668
        %1700 = vmatpush1.bf16.msra.mxu0 %v1667
        %1701 = vmatprep.subr.bf16.mxu0 %v1670
        %1702 = vmatpush1.bf16.msra.mxu0 %v1669
        %1703 = vmatprep.subr.bf16.mxu0 %v1672
        %1704 = vmatpush1.bf16.msra.mxu0 %v1671
        %1705 = vmatprep.subr.bf16.mxu0 0
        %1706 = vmatpush1.bf16.msra.mxu0 0
        %1707 = vmatprep.subr.bf16.mxu0 0
        %1708 = vmatpush1.bf16.msra.mxu0 0
        %1709 = vmatprep.subr.bf16.mxu0 0
        %1710 = vmatpush1.bf16.msra.mxu0 0
        %1711 = vmatprep.subr.bf16.mxu0 0
        %1712 = vmatpush1.bf16.msra.mxu0 0
        %1713 = vmatprep.subr.bf16.mxu0 0
        %1714 = vmatpush1.bf16.msra.mxu0 0
        %1715 = vmatprep.subr.bf16.mxu0 0
        %1716 = vmatpush1.bf16.msra.mxu0 0
        %1717 = vmatprep.subr.bf16.mxu0 0
        %1718 = vmatpush1.bf16.msra.mxu0 0
        %1719 = vmatprep.subr.bf16.mxu0 0
        %1720 = vmatpush1.bf16.msra.mxu0 0
        %1721 = vmatprep.mubr.bf16.mxu0 0
        %1722 = vmatmul.mubr.bf16.gmra.mrb[0].mxu0 %v707
        %v1723 = vpop.f32.mrb[0].mxu0
        %v1724 = vadd.f32 %v1601, %v1723
        %v1725 = vpop.f32.mrb[0].mxu0
        %v1726 = vadd.f32 %v1603, %v1725
        %v1727 = vpop.f32.mrb[0].mxu0
        %v1728 = vadd.f32 %v1605, %v1727
        %v1729 = vpop.f32.mrb[0].mxu0
        %v1730 = vadd.f32 %v1607, %v1729
        %1731 = vdwg.mxu0
        %v1732 = vmax.f32 %v1724, 0.0
        %v1733 = vmax.f32 %v1726, 0.0
        %v1734 = vmax.f32 %v1728, 0.0
        %v1735 = vmax.f32 %v1730, 0.0
        %v1736 = vpack.c.bf16 %v1734, %v1732
        %v1737 = vpack.c.bf16 %v1735, %v1733
        %v1770 = vunpack.c.l.b16 %v674
        %v1771 = vunpack.c.l.b16 %v675
        %v1772 = vunpack.c.l.b16 %v676
        %v1773 = vunpack.c.l.b16 %v677
        %v1774 = vunpack.c.l.b16 %v678
        %v1775 = vunpack.c.l.b16 %v679
        %v1776 = vunpack.c.l.b16 %v680
        %v1777 = vunpack.c.l.b16 %v681
        %v1778 = vunpack.c.l.b16 %v682
        %v1779 = vunpack.c.l.b16 %v683
        %v1780 = vunpack.c.l.b16 %v684
        %v1781 = vunpack.c.l.b16 %v685
        %v1782 = vunpack.c.l.b16 %v686
        %v1783 = vunpack.c.l.b16 %v687
        %v1784 = vunpack.c.l.b16 %v688
        %v1785 = vunpack.c.l.b16 %v689
        %v1786 = vunpack.c.l.b16 %v690
        %v1787 = vunpack.c.l.b16 %v691
        %v1788 = vunpack.c.l.b16 %v692
        %v1789 = vunpack.c.l.b16 %v693
        %v1790 = vunpack.c.l.b16 %v694
        %v1791 = vunpack.c.l.b16 %v695
        %v1792 = vunpack.c.l.b16 %v696
        %v1793 = vunpack.c.l.b16 %v697
        %v1794 = vunpack.c.l.b16 %v698
        %v1795 = vunpack.c.l.b16 %v699
        %v1796 = vunpack.c.l.b16 %v700
        %v1797 = vunpack.c.l.b16 %v701
        %v1798 = vunpack.c.l.b16 %v702
        %v1799 = vunpack.c.l.b16 %v703
        %v1800 = vunpack.c.l.b16 %v704
        %v1801 = vunpack.c.l.b16 %v705
        %v1802 = vpack.c.b16 %v1771, %v1770
        %v1803 = vpack.c.b16 %v1773, %v1772
        %v1804 = vpack.c.b16 %v1775, %v1774
        %v1805 = vpack.c.b16 %v1777, %v1776
        %v1806 = vpack.c.b16 %v1779, %v1778
        %v1807 = vpack.c.b16 %v1781, %v1780
        %v1808 = vpack.c.b16 %v1783, %v1782
        %v1809 = vpack.c.b16 %v1785, %v1784
        %v1810 = vpack.c.b16 %v1787, %v1786
        %v1811 = vpack.c.b16 %v1789, %v1788
        %v1812 = vpack.c.b16 %v1791, %v1790
        %v1813 = vpack.c.b16 %v1793, %v1792
        %v1814 = vpack.c.b16 %v1795, %v1794
        %v1815 = vpack.c.b16 %v1797, %v1796
        %v1816 = vpack.c.b16 %v1799, %v1798
        %v1817 = vpack.c.b16 %v1801, %v1800
        %1834 = vmatprep.subr.bf16.mxu0 0
        %1835 = vmatpush1.bf16.msra.mxu0 %v1802
        %1836 = vmatprep.subr.bf16.mxu0 0
        %1837 = vmatpush1.bf16.msra.mxu0 %v1803
        %1838 = vmatprep.subr.bf16.mxu0 0
        %1839 = vmatpush1.bf16.msra.mxu0 %v1804
        %1840 = vmatprep.subr.bf16.mxu0 0
        %1841 = vmatpush1.bf16.msra.mxu0 %v1805
        %1842 = vmatprep.subr.bf16.mxu0 0
        %1843 = vmatpush1.bf16.msra.mxu0 %v1806
        %1844 = vmatprep.subr.bf16.mxu0 0
        %1845 = vmatpush1.bf16.msra.mxu0 %v1807
        %1846 = vmatprep.subr.bf16.mxu0 0
        %1847 = vmatpush1.bf16.msra.mxu0 %v1808
        %1848 = vmatprep.subr.bf16.mxu0 0
        %1849 = vmatpush1.bf16.msra.mxu0 %v1809
        %1850 = vmatprep.subr.bf16.mxu0 0
        %1851 = vmatpush1.bf16.msra.mxu0 %v1810
        %1852 = vmatprep.subr.bf16.mxu0 0
        %1853 = vmatpush1.bf16.msra.mxu0 %v1811
        %1854 = vmatprep.subr.bf16.mxu0 0
        %1855 = vmatpush1.bf16.msra.mxu0 %v1812
        %1856 = vmatprep.subr.bf16.mxu0 0
        %1857 = vmatpush1.bf16.msra.mxu0 %v1813
        %1858 = vmatprep.subr.bf16.mxu0 0
        %1859 = vmatpush1.bf16.msra.mxu0 %v1814
        %1860 = vmatprep.subr.bf16.mxu0 0
        %1861 = vmatpush1.bf16.msra.mxu0 %v1815
        %1862 = vmatprep.subr.bf16.mxu0 0
        %1863 = vmatpush1.bf16.msra.mxu0 %v1816
        %1864 = vmatprep.subr.bf16.mxu0 0
        %1865 = vmatpush1.bf16.msra.mxu0 %v1817
        %1866 = vmatprep.mubr.bf16.mxu0 %v1737
        %1867 = vmatmul.mubr.bf16.gmra.mrb[0].mxu0 %v1736
        %v1868 = vpop.f32.mrb[0].mxu0
        %v1869 = vadd.f32 0.0, %v1868
        %v1870 = vpop.f32.mrb[0].mxu0
        %v1871 = vpop.f32.mrb[0].mxu0
        %v1872 = vadd.f32 0.0, %v1871
        %v1873 = vpop.f32.mrb[0].mxu0
        %1874 = vdwg.mxu0
        %1875 = vadd.xlane.f32.xlu0 %v1869
        %v1876 = vpop.xlane.xlu0 %1875
        %1877 = vadd.xlane.f32.xlu0 %v1872
        %v1878 = vpop.xlane.xlu0 %1877
        %v1879 = vmul.f32 %v1876, %v1454
        %v1880 = vmul.f32 %v1878, %v1454
        %v1881 = vsub.f32 %v1869, %v1879
        %v1882 = vsub.f32 %v1872, %v1880
        %v1883 = vmul.f32 %v1881, %v1881
        %v1884 = vmul.f32 %v1882, %v1882
        %1885 = vadd.xlane.f32.xlu0 %v1883
        %v1886 = vpop.xlane.xlu0 %1885
        %1887 = vadd.xlane.f32.xlu0 %v1884
        %v1888 = vpop.xlane.xlu0 %1887
        %v1889 = vmul.f32 %v1886, %v1454
        %v1890 = vmul.f32 %v1888, %v1454
        %v1891 = vadd.f32 %v1889, 1e-07
        %v1892 = vadd.f32 %v1890, 1e-07
        %v1893 = vrsqrt.pop %v1891
        %v1894 = vrsqrt.pop %v1892
        %v1895 = vmul.f32 %v1881, %v1893
        %v1896 = vmul.f32 %v1882, %v1894
        %v1897 = vlaneseq
        %v1898 = vshrl.u32 %v1897, 7
        %v1899 = vsub.s32 2, %v1898
        %v1900 = vrot.slane %v706, %v1899
        %v1901 = vmul.f32 %v1895, %v1900
        %v1902 = vmul.f32 %v1896, %v1900
        %v1903 = vlaneseq
        %v1904 = vshrl.u32 %v1903, 7
        %v1905 = vsub.s32 3, %v1904
        %v1906 = vrot.slane %v706, %v1905
        %v1907 = vadd.f32 %v1901, %v1906
        %v1908 = vadd.f32 %v1902, %v1906
        %v1909 = vadd.f32 %v556, %v1907
        %v1910 = vadd.f32 %v557, %v1908
        %v1911 = vpack.c.bf16 %v559, %v558
        %v1912 = vpack.c.bf16 %v560, %v560
        %1913 = vmatprep.subr.bf16.mxu0 0
        %1914 = vmatpush1.bf16.msra.mxu0 %v740
        %1915 = vmatprep.subr.bf16.mxu0 0
        %1916 = vmatpush1.bf16.msra.mxu0 %v741
        %1917 = vmatprep.subr.bf16.mxu0 0
        %1918 = vmatpush1.bf16.msra.mxu0 %v742
        %1919 = vmatprep.subr.bf16.mxu0 0
        %1920 = vmatpush1.bf16.msra.mxu0 %v743
        %1921 = vmatprep.subr.bf16.mxu0 0
        %1922 = vmatpush1.bf16.msra.mxu0 %v744
        %1923 = vmatprep.subr.bf16.mxu0 0
        %1924 = vmatpush1.bf16.msra.mxu0 %v745
        %1925 = vmatprep.subr.bf16.mxu0 0
        %1926 = vmatpush1.bf16.msra.mxu0 %v746
        %1927 = vmatprep.subr.bf16.mxu0 0
        %1928 = vmatpush1.bf16.msra.mxu0 %v747
        %1929 = vmatprep.subr.bf16.mxu0 0
        %1930 = vmatpush1.bf16.msra.mxu0 0
        %1931 = vmatprep.subr.bf16.mxu0 0
        %1932 = vmatpush1.bf16.msra.mxu0 0
        %1933 = vmatprep.subr.bf16.mxu0 0
        %1934 = vmatpush1.bf16.msra.mxu0 0
        %1935 = vmatprep.subr.bf16.mxu0 0
        %1936 = vmatpush1.bf16.msra.mxu0 0
        %1937 = vmatprep.subr.bf16.mxu0 0
        %1938 = vmatpush1.bf16.msra.mxu0 0
        %1939 = vmatprep.subr.bf16.mxu0 0
        %1940 = vmatpush1.bf16.msra.mxu0 0
        %1941 = vmatprep.subr.bf16.mxu0 0
        %1942 = vmatpush1.bf16.msra.mxu0 0
        %1943 = vmatprep.subr.bf16.mxu0 0
        %1944 = vmatpush1.bf16.msra.mxu0 0
        %1945 = vmatprep.mubr.bf16.mxu0 0
        %1946 = vmatmul.mubr.bf16.gmra.mrb[0].mxu0 %v1911
        %v1947 = vpop.f32.mrb[0].mxu0
        %v1948 = vadd.f32 0.0, %v1947
        %v1949 = vpop.f32.mrb[0].mxu0
        %v1950 = vpop.f32.mrb[0].mxu0
        %v1951 = vadd.f32 0.0, %v1950
        %v1952 = vpop.f32.mrb[0].mxu0
        %1953 = vmatprep.mubr.bf16.mxu0 0
        %1954 = vmatmul.mubr.bf16.gmra.mrb[0].mxu0 %v1912
        %v1955 = vpop.f32.mrb[0].mxu0
        %v1956 = vadd.f32 0.0, %v1955
        %v1957 = vpop.f32.mrb[0].mxu0
        %v1958 = vpop.f32.mrb[0].mxu0
        %v1959 = vpop.f32.mrb[0].mxu0
        %1960 = vdwg.mxu0
        %1961 = vmatprep.subr.bf16.mxu0 %v846
        %1962 = vmatpush1.bf16.msra.mxu0 %v845
        %1963 = vmatprep.subr.bf16.mxu0 %v848
        %1964 = vmatpush1.bf16.msra.mxu0 %v847
        %1965 = vmatprep.subr.bf16.mxu0 %v850
        %1966 = vmatpush1.bf16.msra.mxu0 %v849
        %1967 = vmatprep.subr.bf16.mxu0 %v852
        %1968 = vmatpush1.bf16.msra.mxu0 %v851
        %1969 = vmatprep.subr.bf16.mxu0 %v854
        %1970 = vmatpush1.bf16.msra.mxu0 %v853
        %1971 = vmatprep.subr.bf16.mxu0 %v856
        %1972 = vmatpush1.bf16.msra.mxu0 %v855
        %1973 = vmatprep.subr.bf16.mxu0 %v858
        %1974 = vmatpush1.bf16.msra.mxu0 %v857
        %1975 = vmatprep.subr.bf16.mxu0 %v860
        %1976 = vmatpush1.bf16.msra.mxu0 %v859
        %1977 = vmatprep.subr.bf16.mxu0 0
        %1978 = vmatpush1.bf16.msra.mxu0 0
        %1979 = vmatprep.subr.bf16.mxu0 0
        %1980 = vmatpush1.bf16.msra.mxu0 0
        %1981 = vmatprep.subr.bf16.mxu0 0
        %1982 = vmatpush1.bf16.msra.mxu0 0
        %1983 = vmatprep.subr.bf16.mxu0 0
        %1984 = vmatpush1.bf16.msra.mxu0 0
        %1985 = vmatprep.subr.bf16.mxu0 0
        %1986 = vmatpush1.bf16.msra.mxu0 0
        %1987 = vmatprep.subr.bf16.mxu0 0
        %1988 = vmatpush1.bf16.msra.mxu0 0
        %1989 = vmatprep.subr.bf16.mxu0 0
        %1990 = vmatpush1.bf16.msra.mxu0 0
        %1991 = vmatprep.subr.bf16.mxu0 0
        %1992 = vmatpush1.bf16.msra.mxu0 0
        %1993 = vmatprep.mubr.bf16.mxu0 0
        %1994 = vmatmul.mubr.bf16.gmra.mrb[0].mxu0 %v1911
        %v1995 = vpop.f32.mrb[0].mxu0
        %v1996 = vadd.f32 0.0, %v1995
        %v1997 = vpop.f32.mrb[0].mxu0
        %v1998 = vadd.f32 0.0, %v1997
        %v1999 = vpop.f32.mrb[0].mxu0
        %v2000 = vadd.f32 0.0, %v1999
        %v2001 = vpop.f32.mrb[0].mxu0
        %v2002 = vadd.f32 0.0, %v2001
        %2003 = vmatprep.mubr.bf16.mxu0 0
        %2004 = vmatmul.mubr.bf16.gmra.mrb[0].mxu0 %v1912
        %v2005 = vpop.f32.mrb[0].mxu0
        %v2006 = vadd.f32 0.0, %v2005
        %v2007 = vpop.f32.mrb[0].mxu0
        %v2008 = vadd.f32 0.0, %v2007
        %v2009 = vpop.f32.mrb[0].mxu0
        %v2010 = vpop.f32.mrb[0].mxu0
        %2011 = vdwg.mxu0
        %vm2012 = vcmp.gt.f32.partialorder %v1948, 0.0
        %vm2013 = vcmp.gt.f32.partialorder %v1951, 0.0
        %vm2014 = vcmp.gt.f32.partialorder %v1956, 0.0
        %v2015 = vadd.f32 %v1948, 1.0
        %v2016 = vadd.f32 %v1951, 1.0
        %v2017 = vadd.f32 %v1956, 1.0
        %v2018 = vmul.f32 %v1948, 1.442695
        %v2019 = vpow.pop %v2018
        %v2020 = vmul.f32 %v1951, 1.442695
        %v2021 = vpow.pop %v2020
        %v2022 = vmul.f32 %v1956, 1.442695
        %v2023 = vpow.pop %v2022
        %v2024 = vsel %vm2012, %v2015, %v2019
        %v2025 = vsel %vm2013, %v2016, %v2021
        %v2026 = vsel %vm2014, %v2017, %v2023
        %vm2027 = vcmp.gt.f32.partialorder %v1996, 0.0
        %vm2028 = vcmp.gt.f32.partialorder %v2000, 0.0
        %vm2029 = vcmp.gt.f32.partialorder %v2006, 0.0
        %v2030 = vadd.f32 %v1996, 1.0
        %v2031 = vadd.f32 %v2000, 1.0
        %v2032 = vadd.f32 %v2006, 1.0
        %v2033 = vmul.f32 %v1996, 1.442695
        %v2034 = vpow.pop %v2033
        %v2035 = vmul.f32 %v2000, 1.442695
        %v2036 = vpow.pop %v2035
        %v2037 = vmul.f32 %v2006, 1.442695
        %v2038 = vpow.pop %v2037
        %v2039 = vsel %vm2027, %v2030, %v2034
        %v2040 = vsel %vm2028, %v2031, %v2036
        %v2041 = vsel %vm2029, %v2032, %v2038
        %v2042 = vpack.c.bf16 %v2040, %v2039
        %v2043 = vpack.c.bf16 %v2041, %v2041
        %v2044 = vpack.c.bf16 %v2002, %v1998
        %v2045 = vpack.c.bf16 %v2008, %v2008
        %2046 = vxpose.xlu0.c.b16.start [1/8] %v2042, 128
        %2047 = vxpose.xlu0.c.b16.cont [2/8] %v2043, 128
        %2048 = vxpose.xlu0.c.b16.cont [3/8] 0, 128
        %2049 = vxpose.xlu0.c.b16.cont [4/8] 0, 128
        %2050 = vxpose.xlu0.c.b16.cont [5/8] 0, 128
        %2051 = vxpose.xlu0.c.b16.cont [6/8] 0, 128
        %2052 = vxpose.xlu0.c.b16.cont [7/8] 0, 128
        %2053 = vxpose.xlu0.c.b16.end [8/8] 0, 128
        %v2054 = vpop.trf.xlu0
        %v2055 = vpop.trf.xlu0
        %v2056 = vpop.trf.xlu0
        %v2057 = vpop.trf.xlu0
        %v2058 = vpop.trf.xlu0
        %v2059 = vpop.trf.xlu0
        %v2060 = vpop.trf.xlu0
        %v2061 = vpop.trf.xlu0
        %vm2062 = vcmask 195584
        %v2064 = vsel %vm2062, %v2054, 0
        %v2067 = vsel %vm2062, %v2055, 0
        %v2070 = vsel %vm2062, %v2056, 0
        %v2073 = vsel %vm2062, %v2057, 0
        %v2076 = vsel %vm2062, %v2058, 0
        %v2079 = vsel %vm2062, %v2059, 0
        %v2082 = vsel %vm2062, %v2060, 0
        %v2085 = vsel %vm2062, %v2061, 0
        %v2088 = vsel %vm1277, %v2045, 0
        %2090 = vmatprep.subr.bf16.mxu0 0
        %2091 = vmatpush1.bf16.msra.mxu0 %v2044
        %2092 = vmatprep.subr.bf16.mxu0 0
        %2093 = vmatpush1.bf16.msra.mxu0 %v2088
        %2094 = vmatprep.subr.bf16.mxu0 0
        %2095 = vmatpush1.bf16.msra.mxu0 0
        %2096 = vmatprep.subr.bf16.mxu0 0
        %2097 = vmatpush1.bf16.msra.mxu0 0
        %2098 = vmatprep.subr.bf16.mxu0 0
        %2099 = vmatpush1.bf16.msra.mxu0 0
        %2100 = vmatprep.subr.bf16.mxu0 0
        %2101 = vmatpush1.bf16.msra.mxu0 0
        %2102 = vmatprep.subr.bf16.mxu0 0
        %2103 = vmatpush1.bf16.msra.mxu0 0
        %2104 = vmatprep.subr.bf16.mxu0 0
        %2105 = vmatpush1.bf16.msra.mxu0 0
        %2106 = vmatprep.subr.bf16.mxu0 0
        %2107 = vmatpush1.bf16.msra.mxu0 0
        %2108 = vmatprep.subr.bf16.mxu0 0
        %2109 = vmatpush1.bf16.msra.mxu0 0
        %2110 = vmatprep.subr.bf16.mxu0 0
        %2111 = vmatpush1.bf16.msra.mxu0 0
        %2112 = vmatprep.subr.bf16.mxu0 0
        %2113 = vmatpush1.bf16.msra.mxu0 0
        %2114 = vmatprep.subr.bf16.mxu0 0
        %2115 = vmatpush1.bf16.msra.mxu0 0
        %2116 = vmatprep.subr.bf16.mxu0 0
        %2117 = vmatpush1.bf16.msra.mxu0 0
        %2118 = vmatprep.subr.bf16.mxu0 0
        %2119 = vmatpush1.bf16.msra.mxu0 0
        %2120 = vmatprep.subr.bf16.mxu0 0
        %2121 = vmatpush1.bf16.msra.mxu0 0
        %2122 = vmatprep.mubr.bf16.mxu0 0
        %2123 = vmatmul.mubr.bf16.gmra.mrb[0].mxu0 %v2064
        %v2124 = vpop.f32.mrb[0].mxu0
        %v2125 = vadd.f32 0.0, %v2124
        %v2126 = vpop.f32.mrb[0].mxu0
        %v2127 = vpop.f32.mrb[0].mxu0
        %v2128 = vadd.f32 0.0, %v2127
        %v2129 = vpop.f32.mrb[0].mxu0
        %2130 = vmatprep.mubr.bf16.mxu0 0
        %2131 = vmatmul.mubr.bf16.gmra.mrb[0].mxu0 %v2067
        %v2132 = vpop.f32.mrb[0].mxu0
        %v2133 = vadd.f32 0.0, %v2132
        %v2134 = vpop.f32.mrb[0].mxu0
        %v2135 = vpop.f32.mrb[0].mxu0
        %v2136 = vadd.f32 0.0, %v2135
        %v2137 = vpop.f32.mrb[0].mxu0
        %2138 = vmatprep.mubr.bf16.mxu0 0
        %2139 = vmatmul.mubr.bf16.gmra.mrb[0].mxu0 %v2070
        %v2140 = vpop.f32.mrb[0].mxu0
        %v2141 = vadd.f32 0.0, %v2140
        %v2142 = vpop.f32.mrb[0].mxu0
        %v2143 = vpop.f32.mrb[0].mxu0
        %v2144 = vadd.f32 0.0, %v2143
        %v2145 = vpop.f32.mrb[0].mxu0
        %2146 = vmatprep.mubr.bf16.mxu0 0
        %2147 = vmatmul.mubr.bf16.gmra.mrb[0].mxu0 %v2073
        %v2148 = vpop.f32.mrb[0].mxu0
        %v2149 = vadd.f32 0.0, %v2148
        %v2150 = vpop.f32.mrb[0].mxu0
        %v2151 = vpop.f32.mrb[0].mxu0
        %v2152 = vadd.f32 0.0, %v2151
        %v2153 = vpop.f32.mrb[0].mxu0
        %2154 = vmatprep.mubr.bf16.mxu0 0
        %2155 = vmatmul.mubr.bf16.gmra.mrb[0].mxu0 %v2076
        %v2156 = vpop.f32.mrb[0].mxu0
        %v2157 = vadd.f32 0.0, %v2156
        %v2158 = vpop.f32.mrb[0].mxu0
        %v2159 = vpop.f32.mrb[0].mxu0
        %v2160 = vadd.f32 0.0, %v2159
        %v2161 = vpop.f32.mrb[0].mxu0
        %2162 = vmatprep.mubr.bf16.mxu0 0
        %2163 = vmatmul.mubr.bf16.gmra.mrb[0].mxu0 %v2079
        %v2164 = vpop.f32.mrb[0].mxu0
        %v2165 = vadd.f32 0.0, %v2164
        %v2166 = vpop.f32.mrb[0].mxu0
        %v2167 = vpop.f32.mrb[0].mxu0
        %v2168 = vadd.f32 0.0, %v2167
        %v2169 = vpop.f32.mrb[0].mxu0
        %2170 = vmatprep.mubr.bf16.mxu0 0
        %2171 = vmatmul.mubr.bf16.gmra.mrb[0].mxu0 %v2082
        %v2172 = vpop.f32.mrb[0].mxu0
        %v2173 = vadd.f32 0.0, %v2172
        %v2174 = vpop.f32.mrb[0].mxu0
        %v2175 = vpop.f32.mrb[0].mxu0
        %v2176 = vadd.f32 0.0, %v2175
        %v2177 = vpop.f32.mrb[0].mxu0
        %2178 = vmatprep.mubr.bf16.mxu0 0
        %2179 = vmatmul.mubr.bf16.gmra.mrb[0].mxu0 %v2085
        %v2180 = vpop.f32.mrb[0].mxu0
        %v2181 = vadd.f32 0.0, %v2180
        %v2182 = vpop.f32.mrb[0].mxu0
        %v2183 = vpop.f32.mrb[0].mxu0
        %v2184 = vadd.f32 0.0, %v2183
        %v2185 = vpop.f32.mrb[0].mxu0
        %2186 = vdwg.mxu0
        %v2187 = vpack.c.bf16 %v2128, %v2125
        %v2188 = vpack.c.bf16 %v2136, %v2133
        %v2189 = vpack.c.bf16 %v2144, %v2141
        %v2190 = vpack.c.bf16 %v2152, %v2149
        %v2191 = vpack.c.bf16 %v2160, %v2157
        %v2192 = vpack.c.bf16 %v2168, %v2165
        %v2193 = vpack.c.bf16 %v2176, %v2173
        %v2194 = vpack.c.bf16 %v2184, %v2181
        %v2195 = vmul.bf16 %v2187, %v1120
        %v2196 = vmul.bf16 %v2188, %v1121
        %v2197 = vmul.bf16 %v2189, %v1122
        %v2198 = vmul.bf16 %v2190, %v1123
        %v2199 = vmul.bf16 %v2191, %v1124
        %v2200 = vmul.bf16 %v2192, %v1125
        %v2201 = vmul.bf16 %v2193, %v1126
        %v2202 = vmul.bf16 %v2194, %v1127
        %v2203 = vpack.c.bf16 %v2025, %v2024
        %v2204 = vpack.c.bf16 %v2026, %v2026
        %2205 = vmatprep.subr.bf16.mxu0 0
        %2206 = vmatpush1.bf16.msra.mxu0 %v2195
        %2207 = vmatprep.subr.bf16.mxu0 0
        %2208 = vmatpush1.bf16.msra.mxu0 %v2196
        %2209 = vmatprep.subr.bf16.mxu0 0
        %2210 = vmatpush1.bf16.msra.mxu0 %v2197
        %2211 = vmatprep.subr.bf16.mxu0 0
        %2212 = vmatpush1.bf16.msra.mxu0 %v2198
        %2213 = vmatprep.subr.bf16.mxu0 0
        %2214 = vmatpush1.bf16.msra.mxu0 %v2199
        %2215 = vmatprep.subr.bf16.mxu0 0
        %2216 = vmatpush1.bf16.msra.mxu0 %v2200
        %2217 = vmatprep.subr.bf16.mxu0 0
        %2218 = vmatpush1.bf16.msra.mxu0 %v2201
        %2219 = vmatprep.subr.bf16.mxu0 0
        %2220 = vmatpush1.bf16.msra.mxu0 %v2202
        %2221 = vmatprep.subr.bf16.mxu0 0
        %2222 = vmatpush1.bf16.msra.mxu0 0
        %2223 = vmatprep.subr.bf16.mxu0 0
        %2224 = vmatpush1.bf16.msra.mxu0 0
        %2225 = vmatprep.subr.bf16.mxu0 0
        %2226 = vmatpush1.bf16.msra.mxu0 0
        %2227 = vmatprep.subr.bf16.mxu0 0
        %2228 = vmatpush1.bf16.msra.mxu0 0
        %2229 = vmatprep.subr.bf16.mxu0 0
        %2230 = vmatpush1.bf16.msra.mxu0 0
        %2231 = vmatprep.subr.bf16.mxu0 0
        %2232 = vmatpush1.bf16.msra.mxu0 0
        %2233 = vmatprep.subr.bf16.mxu0 0
        %2234 = vmatpush1.bf16.msra.mxu0 0
        %2235 = vmatprep.subr.bf16.mxu0 0
        %2236 = vmatpush1.bf16.msra.mxu0 0
        %2237 = vmatprep.mubr.bf16.mxu0 0
        %2238 = vmatmul.mubr.bf16.gmra.mrb[0].mxu0 %v2203
        %v2239 = vpop.f32.mrb[0].mxu0
        %v2240 = vadd.f32 0.0, %v2239
        %v2241 = vpop.f32.mrb[0].mxu0
        %v2242 = vpop.f32.mrb[0].mxu0
        %v2243 = vadd.f32 0.0, %v2242
        %v2244 = vpop.f32.mrb[0].mxu0
        %2245 = vmatprep.mubr.bf16.mxu0 0
        %2246 = vmatmul.mubr.bf16.gmra.mrb[0].mxu0 %v2204
        %v2247 = vpop.f32.mrb[0].mxu0
        %v2248 = vadd.f32 0.0, %v2247
        %v2249 = vpop.f32.mrb[0].mxu0
        %v2250 = vpop.f32.mrb[0].mxu0
        %v2251 = vpop.f32.mrb[0].mxu0
        %2252 = vdwg.mxu0
        %v2253 = vadd.f32 %v2039, %v2040
        %v2254 = vadd.f32 %v2253, %v2041
        %v2255 = vrot.slane %v2254, 4
        %v2256 = vadd.f32 %v2254, %v2255
        %v2257 = vrot.slane %v2256, 2
        %v2258 = vadd.f32 %v2256, %v2257
        %v2259 = vrot.slane %v2258, 1
        %v2260 = vadd.f32 %v2258, %v2259
        %v2261 = vmul.f32 %v2024, %v2260
        %v2262 = vmul.f32 %v2025, %v2260
        %v2263 = vmul.f32 %v2026, %v2260
        %2264 = vmatprep.subr.mxu0 0.0
        %2265 = vmatpush1.msra.mxu0 %v577
        %2266 = vmatprep.subr.mxu0 0.0
        %2267 = vmatpush1.msra.mxu0 %v578
        %2268 = vmatprep.subr.mxu0 0.0
        %2269 = vmatpush1.msra.mxu0 %v579
        %2270 = vmatprep.subr.mxu0 0.0
        %2271 = vmatpush1.msra.mxu0 %v580
        %2272 = vmatprep.subr.mxu0 0.0
        %2273 = vmatpush1.msra.mxu0 %v581
        %2274 = vmatprep.subr.mxu0 0.0
        %2275 = vmatpush1.msra.mxu0 %v582
        %2276 = vmatprep.subr.mxu0 0.0
        %2277 = vmatpush1.msra.mxu0 %v583
        %2278 = vmatprep.subr.mxu0 0.0
        %2279 = vmatpush1.msra.mxu0 %v584
        %2280 = vmatprep.subr.mxu0 0.0
        %2281 = vmatpush1.msra.mxu0 %v585
        %2282 = vmatprep.subr.mxu0 0.0
        %2283 = vmatpush1.msra.mxu0 %v586
        %2284 = vmatprep.subr.mxu0 0.0
        %2285 = vmatpush1.msra.mxu0 %v587
        %2286 = vmatprep.subr.mxu0 0.0
        %2287 = vmatpush1.msra.mxu0 %v588
        %2288 = vmatprep.subr.mxu0 0.0
        %2289 = vmatpush1.msra.mxu0 %v589
        %2290 = vmatprep.subr.mxu0 0.0
        %2291 = vmatpush1.msra.mxu0 %v590
        %2292 = vmatprep.subr.mxu0 0.0
        %2293 = vmatpush1.msra.mxu0 %v591
        %2294 = vmatprep.subr.mxu0 0.0
        %2295 = vmatpush1.msra.mxu0 %v592
        %2296 = vmatprep.subr.mxu0 0.0
        %2297 = vmatpush1.msra.mxu0 0.0
        %2298 = vmatprep.subr.mxu0 0.0
        %2299 = vmatpush1.msra.mxu0 0.0
        %2300 = vmatprep.subr.mxu0 0.0
        %2301 = vmatpush1.msra.mxu0 0.0
        %2302 = vmatprep.subr.mxu0 0.0
        %2303 = vmatpush1.msra.mxu0 0.0
        %2304 = vmatprep.subr.mxu0 0.0
        %2305 = vmatpush1.msra.mxu0 0.0
        %2306 = vmatprep.subr.mxu0 0.0
        %2307 = vmatpush1.msra.mxu0 0.0
        %2308 = vmatprep.subr.mxu0 0.0
        %2309 = vmatpush1.msra.mxu0 0.0
        %2310 = vmatprep.subr.mxu0 0.0
        %2311 = vmatpush1.msra.mxu0 0.0
        %2312 = vmatprep.subr.mxu0 0.0
        %2313 = vmatpush1.msra.mxu0 0.0
        %2314 = vmatprep.subr.mxu0 0.0
        %2315 = vmatpush1.msra.mxu0 0.0
        %2316 = vmatprep.subr.mxu0 0.0
        %2317 = vmatpush1.msra.mxu0 0.0
        %2318 = vmatprep.subr.mxu0 0.0
        %2319 = vmatpush1.msra.mxu0 0.0
        %2320 = vmatprep.subr.mxu0 0.0
        %2321 = vmatpush1.msra.mxu0 0.0
        %2322 = vmatprep.subr.mxu0 0.0
        %2323 = vmatpush1.msra.mxu0 0.0
        %2324 = vmatprep.subr.mxu0 0.0
        %2325 = vmatpush1.msra.mxu0 0.0
        %2326 = vmatprep.subr.mxu0 0.0
        %2327 = vmatpush1.msra.mxu0 0.0
        %2328 = vmatprep.mubr.f32.mxu0 0.0
        %2329 = vmatmul.mubr.f32.gmra.mrb[0].mxu0 %v2261
        %v2330 = vpop.f32.mrb[0].mxu0
        %v2331 = vadd.f32 0.0, %v2330
        %v2332 = vpop.f32.mrb[0].mxu0
        %2333 = vmatprep.mubr.f32.mxu0 0.0
        %2334 = vmatmul.mubr.f32.gmra.mrb[0].mxu0 %v2262
        %v2335 = vpop.f32.mrb[0].mxu0
        %v2336 = vadd.f32 0.0, %v2335
        %v2337 = vpop.f32.mrb[0].mxu0
        %2338 = vmatprep.mubr.f32.mxu0 0.0
        %2339 = vmatmul.mubr.f32.gmra.mrb[0].mxu0 %v2263
        %v2340 = vpop.f32.mrb[0].mxu0
        %v2341 = vadd.f32 0.0, %v2340
        %v2342 = vpop.f32.mrb[0].mxu0
        %2343 = vdwg.mxu0
        %v2345 = vsel %vm1270, %v2331, 0
        %v2348 = vsel %vm1270, %v2336, 0
        %v2351 = vsel %vm1270, %v2341, 0
        %2353 = vmatprep.subr.mxu0 0.0
        %2354 = vmatpush1.msra.mxu0 %v1279
        %2355 = vmatprep.subr.mxu0 0.0
        %2356 = vmatpush1.msra.mxu0 0.0
        %2357 = vmatprep.subr.mxu0 0.0
        %2358 = vmatpush1.msra.mxu0 0.0
        %2359 = vmatprep.subr.mxu0 0.0
        %2360 = vmatpush1.msra.mxu0 0.0
        %2361 = vmatprep.subr.mxu0 0.0
        %2362 = vmatpush1.msra.mxu0 0.0
        %2363 = vmatprep.subr.mxu0 0.0
        %2364 = vmatpush1.msra.mxu0 0.0
        %2365 = vmatprep.subr.mxu0 0.0
        %2366 = vmatpush1.msra.mxu0 0.0
        %2367 = vmatprep.subr.mxu0 0.0
        %2368 = vmatpush1.msra.mxu0 0.0
        %2369 = vmatprep.subr.mxu0 0.0
        %2370 = vmatpush1.msra.mxu0 0.0
        %2371 = vmatprep.subr.mxu0 0.0
        %2372 = vmatpush1.msra.mxu0 0.0
        %2373 = vmatprep.subr.mxu0 0.0
        %2374 = vmatpush1.msra.mxu0 0.0
        %2375 = vmatprep.subr.mxu0 0.0
        %2376 = vmatpush1.msra.mxu0 0.0
        %2377 = vmatprep.subr.mxu0 0.0
        %2378 = vmatpush1.msra.mxu0 0.0
        %2379 = vmatprep.subr.mxu0 0.0
        %2380 = vmatpush1.msra.mxu0 0.0
        %2381 = vmatprep.subr.mxu0 0.0
        %2382 = vmatpush1.msra.mxu0 0.0
        %2383 = vmatprep.subr.mxu0 0.0
        %2384 = vmatpush1.msra.mxu0 0.0
        %2385 = vmatprep.subr.mxu0 0.0
        %2386 = vmatpush1.msra.mxu0 0.0
        %2387 = vmatprep.subr.mxu0 0.0
        %2388 = vmatpush1.msra.mxu0 0.0
        %2389 = vmatprep.subr.mxu0 0.0
        %2390 = vmatpush1.msra.mxu0 0.0
        %2391 = vmatprep.subr.mxu0 0.0
        %2392 = vmatpush1.msra.mxu0 0.0
        %2393 = vmatprep.subr.mxu0 0.0
        %2394 = vmatpush1.msra.mxu0 0.0
        %2395 = vmatprep.subr.mxu0 0.0
        %2396 = vmatpush1.msra.mxu0 0.0
        %2397 = vmatprep.subr.mxu0 0.0
        %2398 = vmatpush1.msra.mxu0 0.0
        %2399 = vmatprep.subr.mxu0 0.0
        %2400 = vmatpush1.msra.mxu0 0.0
        %2401 = vmatprep.subr.mxu0 0.0
        %2402 = vmatpush1.msra.mxu0 0.0
        %2403 = vmatprep.subr.mxu0 0.0
        %2404 = vmatpush1.msra.mxu0 0.0
        %2405 = vmatprep.subr.mxu0 0.0
        %2406 = vmatpush1.msra.mxu0 0.0
        %2407 = vmatprep.subr.mxu0 0.0
        %2408 = vmatpush1.msra.mxu0 0.0
        %2409 = vmatprep.subr.mxu0 0.0
        %2410 = vmatpush1.msra.mxu0 0.0
        %2411 = vmatprep.subr.mxu0 0.0
        %2412 = vmatpush1.msra.mxu0 0.0
        %2413 = vmatprep.subr.mxu0 0.0
        %2414 = vmatpush1.msra.mxu0 0.0
        %2415 = vmatprep.subr.mxu0 0.0
        %2416 = vmatpush1.msra.mxu0 0.0
        %2417 = vmatprep.mubr.f32.mxu0 0.0
        %2418 = vmatmul.mubr.f32.gmra.mrb[0].mxu0 %v2345
        %v2419 = vpop.f32.mrb[0].mxu0
        %v2420 = vadd.f32 1e-06, %v2419
        %v2421 = vpop.f32.mrb[0].mxu0
        %2422 = vmatprep.mubr.f32.mxu0 0.0
        %2423 = vmatmul.mubr.f32.gmra.mrb[0].mxu0 %v2348
        %v2424 = vpop.f32.mrb[0].mxu0
        %v2425 = vadd.f32 1e-06, %v2424
        %v2426 = vpop.f32.mrb[0].mxu0
        %2427 = vmatprep.mubr.f32.mxu0 0.0
        %2428 = vmatmul.mubr.f32.gmra.mrb[0].mxu0 %v2351
        %v2429 = vpop.f32.mrb[0].mxu0
        %v2430 = vadd.f32 1e-06, %v2429
        %v2431 = vpop.f32.mrb[0].mxu0
        %2432 = vdwg.mxu0
        %v2433 = vrcp.pop %v2420
        %v2434 = vrcp.pop %v2425
        %v2435 = vrcp.pop %v2430
        %v2436 = vmul.f32 %v2240, %v2433
        %v2437 = vmul.f32 %v2243, %v2434
        %v2438 = vmul.f32 %v2248, %v2435
        %v2439 = vpack.c.bf16 %v2437, %v2436
        %v2440 = vpack.c.bf16 %v2438, %v2438
        %2441 = vmatprep.subr.bf16.mxu0 0
        %2442 = vmatpush1.bf16.msra.mxu0 %v1393
        %2443 = vmatprep.subr.bf16.mxu0 0
        %2444 = vmatpush1.bf16.msra.mxu0 %v1394
        %2445 = vmatprep.subr.bf16.mxu0 0
        %2446 = vmatpush1.bf16.msra.mxu0 %v1395
        %2447 = vmatprep.subr.bf16.mxu0 0
        %2448 = vmatpush1.bf16.msra.mxu0 %v1396
        %2449 = vmatprep.subr.bf16.mxu0 0
        %2450 = vmatpush1.bf16.msra.mxu0 %v1397
        %2451 = vmatprep.subr.bf16.mxu0 0
        %2452 = vmatpush1.bf16.msra.mxu0 %v1398
        %2453 = vmatprep.subr.bf16.mxu0 0
        %2454 = vmatpush1.bf16.msra.mxu0 %v1399
        %2455 = vmatprep.subr.bf16.mxu0 0
        %2456 = vmatpush1.bf16.msra.mxu0 %v1400
        %2457 = vmatprep.subr.bf16.mxu0 0
        %2458 = vmatpush1.bf16.msra.mxu0 0
        %2459 = vmatprep.subr.bf16.mxu0 0
        %2460 = vmatpush1.bf16.msra.mxu0 0
        %2461 = vmatprep.subr.bf16.mxu0 0
        %2462 = vmatpush1.bf16.msra.mxu0 0
        %2463 = vmatprep.subr.bf16.mxu0 0
        %2464 = vmatpush1.bf16.msra.mxu0 0
        %2465 = vmatprep.subr.bf16.mxu0 0
        %2466 = vmatpush1.bf16.msra.mxu0 0
        %2467 = vmatprep.subr.bf16.mxu0 0
        %2468 = vmatpush1.bf16.msra.mxu0 0
        %2469 = vmatprep.subr.bf16.mxu0 0
        %2470 = vmatpush1.bf16.msra.mxu0 0
        %2471 = vmatprep.subr.bf16.mxu0 0
        %2472 = vmatpush1.bf16.msra.mxu0 0
        %2473 = vmatprep.mubr.bf16.mxu0 0
        %2474 = vmatmul.mubr.bf16.gmra.mrb[0].mxu0 %v2439
        %v2475 = vpop.f32.mrb[0].mxu0
        %v2476 = vadd.f32 0.0, %v2475
        %v2477 = vpop.f32.mrb[0].mxu0
        %v2478 = vpop.f32.mrb[0].mxu0
        %v2479 = vadd.f32 0.0, %v2478
        %v2480 = vpop.f32.mrb[0].mxu0
        %2481 = vmatprep.mubr.bf16.mxu0 0
        %2482 = vmatmul.mubr.bf16.gmra.mrb[0].mxu0 %v2440
        %v2483 = vpop.f32.mrb[0].mxu0
        %v2484 = vadd.f32 0.0, %v2483
        %v2485 = vpop.f32.mrb[0].mxu0
        %v2486 = vpop.f32.mrb[0].mxu0
        %v2487 = vpop.f32.mrb[0].mxu0
        %2488 = vdwg.mxu0
        %2489 = vadd.xlane.f32.xlu0 %v2476
        %v2490 = vpop.xlane.xlu0 %2489
        %2491 = vadd.xlane.f32.xlu0 %v2479
        %v2492 = vpop.xlane.xlu0 %2491
        %2493 = vadd.xlane.f32.xlu0 %v2484
        %v2494 = vpop.xlane.xlu0 %2493
        %v2495 = vmul.f32 %v2490, %v1454
        %v2496 = vmul.f32 %v2492, %v1454
        %v2497 = vmul.f32 %v2494, %v1454
        %v2498 = vsub.f32 %v2476, %v2495
        %v2499 = vsub.f32 %v2479, %v2496
        %v2500 = vsub.f32 %v2484, %v2497
        %v2501 = vmul.f32 %v2498, %v2498
        %v2502 = vmul.f32 %v2499, %v2499
        %v2503 = vmul.f32 %v2500, %v2500
        %2504 = vadd.xlane.f32.xlu0 %v2501
        %v2505 = vpop.xlane.xlu0 %2504
        %2506 = vadd.xlane.f32.xlu0 %v2502
        %v2507 = vpop.xlane.xlu0 %2506
        %2508 = vadd.xlane.f32.xlu0 %v2503
        %v2509 = vpop.xlane.xlu0 %2508
        %v2510 = vmul.f32 %v2505, %v1454
        %v2511 = vmul.f32 %v2507, %v1454
        %v2512 = vmul.f32 %v2509, %v1454
        %v2513 = vadd.f32 %v2510, 1e-07
        %v2514 = vadd.f32 %v2511, 1e-07
        %v2515 = vadd.f32 %v2512, 1e-07
        %v2516 = vrsqrt.pop %v2513
        %v2517 = vrsqrt.pop %v2514
        %v2518 = vrsqrt.pop %v2515
        %v2519 = vmul.f32 %v2498, %v2516
        %v2520 = vmul.f32 %v2499, %v2517
        %v2521 = vmul.f32 %v2500, %v2518
        %v2522 = vmul.f32 %v2519, %v1476
        %v2523 = vmul.f32 %v2520, %v1476
        %v2524 = vmul.f32 %v2521, %v1476
        %v2525 = vadd.f32 %v2522, %v1482
        %v2526 = vadd.f32 %v2523, %v1482
        %v2527 = vadd.f32 %v2524, %v1482
        %v2528 = vpack.c.bf16 %v2526, %v2525
        %v2529 = vpack.c.bf16 %v2527, %v2527
        %2530 = vmatprep.subr.bf16.mxu0 %v1535
        %2531 = vmatpush1.bf16.msra.mxu0 %v1534
        %2532 = vmatprep.subr.bf16.mxu0 %v1537
        %2533 = vmatpush1.bf16.msra.mxu0 %v1536
        %2534 = vmatprep.subr.bf16.mxu0 %v1539
        %2535 = vmatpush1.bf16.msra.mxu0 %v1538
        %2536 = vmatprep.subr.bf16.mxu0 %v1541
        %2537 = vmatpush1.bf16.msra.mxu0 %v1540
        %2538 = vmatprep.subr.bf16.mxu0 %v1543
        %2539 = vmatpush1.bf16.msra.mxu0 %v1542
        %2540 = vmatprep.subr.bf16.mxu0 %v1545
        %2541 = vmatpush1.bf16.msra.mxu0 %v1544
        %2542 = vmatprep.subr.bf16.mxu0 %v1547
        %2543 = vmatpush1.bf16.msra.mxu0 %v1546
        %2544 = vmatprep.subr.bf16.mxu0 %v1549
        %2545 = vmatpush1.bf16.msra.mxu0 %v1548
        %2546 = vmatprep.subr.bf16.mxu0 0
        %2547 = vmatpush1.bf16.msra.mxu0 0
        %2548 = vmatprep.subr.bf16.mxu0 0
        %2549 = vmatpush1.bf16.msra.mxu0 0
        %2550 = vmatprep.subr.bf16.mxu0 0
        %2551 = vmatpush1.bf16.msra.mxu0 0
        %2552 = vmatprep.subr.bf16.mxu0 0
        %2553 = vmatpush1.bf16.msra.mxu0 0
        %2554 = vmatprep.subr.bf16.mxu0 0
        %2555 = vmatpush1.bf16.msra.mxu0 0
        %2556 = vmatprep.subr.bf16.mxu0 0
        %2557 = vmatpush1.bf16.msra.mxu0 0
        %2558 = vmatprep.subr.bf16.mxu0 0
        %2559 = vmatpush1.bf16.msra.mxu0 0
        %2560 = vmatprep.subr.bf16.mxu0 0
        %2561 = vmatpush1.bf16.msra.mxu0 0
        %2562 = vmatprep.mubr.bf16.mxu0 0
        %2563 = vmatmul.mubr.bf16.gmra.mrb[0].mxu0 %v2528
        %v2564 = vpop.f32.mrb[0].mxu0
        %v2565 = vadd.f32 0.0, %v2564
        %v2566 = vpop.f32.mrb[0].mxu0
        %v2567 = vadd.f32 0.0, %v2566
        %v2568 = vpop.f32.mrb[0].mxu0
        %v2569 = vadd.f32 0.0, %v2568
        %v2570 = vpop.f32.mrb[0].mxu0
        %v2571 = vadd.f32 0.0, %v2570
        %2572 = vmatprep.mubr.bf16.mxu0 0
        %2573 = vmatmul.mubr.bf16.gmra.mrb[0].mxu0 %v2529
        %v2574 = vpop.f32.mrb[0].mxu0
        %v2575 = vadd.f32 0.0, %v2574
        %v2576 = vpop.f32.mrb[0].mxu0
        %v2577 = vadd.f32 0.0, %v2576
        %v2578 = vpop.f32.mrb[0].mxu0
        %v2579 = vpop.f32.mrb[0].mxu0
        %2580 = vdwg.mxu0
        %2581 = vmatprep.subr.bf16.mxu0 %v1658
        %2582 = vmatpush1.bf16.msra.mxu0 %v1657
        %2583 = vmatprep.subr.bf16.mxu0 %v1660
        %2584 = vmatpush1.bf16.msra.mxu0 %v1659
        %2585 = vmatprep.subr.bf16.mxu0 %v1662
        %2586 = vmatpush1.bf16.msra.mxu0 %v1661
        %2587 = vmatprep.subr.bf16.mxu0 %v1664
        %2588 = vmatpush1.bf16.msra.mxu0 %v1663
        %2589 = vmatprep.subr.bf16.mxu0 %v1666
        %2590 = vmatpush1.bf16.msra.mxu0 %v1665
        %2591 = vmatprep.subr.bf16.mxu0 %v1668
        %2592 = vmatpush1.bf16.msra.mxu0 %v1667
        %2593 = vmatprep.subr.bf16.mxu0 %v1670
        %2594 = vmatpush1.bf16.msra.mxu0 %v1669
        %2595 = vmatprep.subr.bf16.mxu0 %v1672
        %2596 = vmatpush1.bf16.msra.mxu0 %v1671
        %2597 = vmatprep.subr.bf16.mxu0 0
        %2598 = vmatpush1.bf16.msra.mxu0 0
        %2599 = vmatprep.subr.bf16.mxu0 0
        %2600 = vmatpush1.bf16.msra.mxu0 0
        %2601 = vmatprep.subr.bf16.mxu0 0
        %2602 = vmatpush1.bf16.msra.mxu0 0
        %2603 = vmatprep.subr.bf16.mxu0 0
        %2604 = vmatpush1.bf16.msra.mxu0 0
        %2605 = vmatprep.subr.bf16.mxu0 0
        %2606 = vmatpush1.bf16.msra.mxu0 0
        %2607 = vmatprep.subr.bf16.mxu0 0
        %2608 = vmatpush1.bf16.msra.mxu0 0
        %2609 = vmatprep.subr.bf16.mxu0 0
        %2610 = vmatpush1.bf16.msra.mxu0 0
        %2611 = vmatprep.subr.bf16.mxu0 0
        %2612 = vmatpush1.bf16.msra.mxu0 0
        %2613 = vmatprep.mubr.bf16.mxu0 0
        %2614 = vmatmul.mubr.bf16.gmra.mrb[0].mxu0 %v1911
        %v2615 = vpop.f32.mrb[0].mxu0
        %v2616 = vadd.f32 %v2565, %v2615
        %v2617 = vpop.f32.mrb[0].mxu0
        %v2618 = vadd.f32 %v2567, %v2617
        %v2619 = vpop.f32.mrb[0].mxu0
        %v2620 = vadd.f32 %v2569, %v2619
        %v2621 = vpop.f32.mrb[0].mxu0
        %v2622 = vadd.f32 %v2571, %v2621
        %2623 = vmatprep.mubr.bf16.mxu0 0
        %2624 = vmatmul.mubr.bf16.gmra.mrb[0].mxu0 %v1912
        %v2625 = vpop.f32.mrb[0].mxu0
        %v2626 = vadd.f32 %v2575, %v2625
        %v2627 = vpop.f32.mrb[0].mxu0
        %v2628 = vadd.f32 %v2577, %v2627
        %v2629 = vpop.f32.mrb[0].mxu0
        %v2630 = vpop.f32.mrb[0].mxu0
        %2631 = vdwg.mxu0
        %v2632 = vmax.f32 %v2616, 0.0
        %v2633 = vmax.f32 %v2618, 0.0
        %v2634 = vmax.f32 %v2620, 0.0
        %v2635 = vmax.f32 %v2622, 0.0
        %v2636 = vmax.f32 %v2626, 0.0
        %v2637 = vmax.f32 %v2628, 0.0
        %v2638 = vpack.c.bf16 %v2634, %v2632
        %v2639 = vpack.c.bf16 %v2635, %v2633
        %v2640 = vpack.c.bf16 %v2636, %v2636
        %v2641 = vpack.c.bf16 %v2637, %v2637
        %2642 = vmatprep.subr.bf16.mxu0 0
        %2643 = vmatpush1.bf16.msra.mxu0 %v1802
        %2644 = vmatprep.subr.bf16.mxu0 0
        %2645 = vmatpush1.bf16.msra.mxu0 %v1803
        %2646 = vmatprep.subr.bf16.mxu0 0
        %2647 = vmatpush1.bf16.msra.mxu0 %v1804
        %2648 = vmatprep.subr.bf16.mxu0 0
        %2649 = vmatpush1.bf16.msra.mxu0 %v1805
        %2650 = vmatprep.subr.bf16.mxu0 0
        %2651 = vmatpush1.bf16.msra.mxu0 %v1806
        %2652 = vmatprep.subr.bf16.mxu0 0
        %2653 = vmatpush1.bf16.msra.mxu0 %v1807
        %2654 = vmatprep.subr.bf16.mxu0 0
        %2655 = vmatpush1.bf16.msra.mxu0 %v1808
        %2656 = vmatprep.subr.bf16.mxu0 0
        %2657 = vmatpush1.bf16.msra.mxu0 %v1809
        %2658 = vmatprep.subr.bf16.mxu0 0
        %2659 = vmatpush1.bf16.msra.mxu0 %v1810
        %2660 = vmatprep.subr.bf16.mxu0 0
        %2661 = vmatpush1.bf16.msra.mxu0 %v1811
        %2662 = vmatprep.subr.bf16.mxu0 0
        %2663 = vmatpush1.bf16.msra.mxu0 %v1812
        %2664 = vmatprep.subr.bf16.mxu0 0
        %2665 = vmatpush1.bf16.msra.mxu0 %v1813
        %2666 = vmatprep.subr.bf16.mxu0 0
        %2667 = vmatpush1.bf16.msra.mxu0 %v1814
        %2668 = vmatprep.subr.bf16.mxu0 0
        %2669 = vmatpush1.bf16.msra.mxu0 %v1815
        %2670 = vmatprep.subr.bf16.mxu0 0
        %2671 = vmatpush1.bf16.msra.mxu0 %v1816
        %2672 = vmatprep.subr.bf16.mxu0 0
        %2673 = vmatpush1.bf16.msra.mxu0 %v1817
        %2674 = vmatprep.mubr.bf16.mxu0 %v2639
        %2675 = vmatmul.mubr.bf16.gmra.mrb[0].mxu0 %v2638
        %v2676 = vpop.f32.mrb[0].mxu0
        %v2677 = vadd.f32 0.0, %v2676
        %v2678 = vpop.f32.mrb[0].mxu0
        %v2679 = vpop.f32.mrb[0].mxu0
        %v2680 = vadd.f32 0.0, %v2679
        %v2681 = vpop.f32.mrb[0].mxu0
        %2682 = vmatprep.mubr.bf16.mxu0 %v2641
        %2683 = vmatmul.mubr.bf16.gmra.mrb[0].mxu0 %v2640
        %v2684 = vpop.f32.mrb[0].mxu0
        %v2685 = vadd.f32 0.0, %v2684
        %v2686 = vpop.f32.mrb[0].mxu0
        %v2687 = vpop.f32.mrb[0].mxu0
        %v2688 = vpop.f32.mrb[0].mxu0
        %2689 = vdwg.mxu0
        %2690 = vadd.xlane.f32.xlu0 %v2677
        %v2691 = vpop.xlane.xlu0 %2690
        %2692 = vadd.xlane.f32.xlu0 %v2680
        %v2693 = vpop.xlane.xlu0 %2692
        %2694 = vadd.xlane.f32.xlu0 %v2685
        %v2695 = vpop.xlane.xlu0 %2694
        %v2696 = vmul.f32 %v2691, %v1454
        %v2697 = vmul.f32 %v2693, %v1454
        %v2698 = vmul.f32 %v2695, %v1454
        %v2699 = vsub.f32 %v2677, %v2696
        %v2700 = vsub.f32 %v2680, %v2697
        %v2701 = vsub.f32 %v2685, %v2698
        %v2702 = vmul.f32 %v2699, %v2699
        %v2703 = vmul.f32 %v2700, %v2700
        %v2704 = vmul.f32 %v2701, %v2701
        %2705 = vadd.xlane.f32.xlu0 %v2702
        %v2706 = vpop.xlane.xlu0 %2705
        %2707 = vadd.xlane.f32.xlu0 %v2703
        %v2708 = vpop.xlane.xlu0 %2707
        %2709 = vadd.xlane.f32.xlu0 %v2704
        %v2710 = vpop.xlane.xlu0 %2709
        %v2711 = vmul.f32 %v2706, %v1454
        %v2712 = vmul.f32 %v2708, %v1454
        %v2713 = vmul.f32 %v2710, %v1454
        %v2714 = vadd.f32 %v2711, 1e-07
        %v2715 = vadd.f32 %v2712, 1e-07
        %v2716 = vadd.f32 %v2713, 1e-07
        %v2717 = vrsqrt.pop %v2714
        %v2718 = vrsqrt.pop %v2715
        %v2719 = vrsqrt.pop %v2716
        %v2720 = vmul.f32 %v2699, %v2717
        %v2721 = vmul.f32 %v2700, %v2718
        %v2722 = vmul.f32 %v2701, %v2719
        %v2723 = vmul.f32 %v2720, %v1900
        %v2724 = vmul.f32 %v2721, %v1900
        %v2725 = vmul.f32 %v2722, %v1900
        %v2726 = vadd.f32 %v2723, %v1906
        %v2727 = vadd.f32 %v2724, %v1906
        %v2728 = vadd.f32 %v2725, %v1906
        %v2729 = vadd.f32 %v558, %v2726
        %v2730 = vadd.f32 %v559, %v2727
        %v2731 = vadd.f32 %v560, %v2728
        %s2732 = scalar_lea.vmem [#allocation8], 192
        %v2733 = vld [vmem:[%s2732] sm:$0xff]
        %v2734 = vld [vmem:[%s2732 + $0x8] sm:$0xf]
        %v2735 = vld [vmem:[%s2732 + $0xc] sm:$0xff]
        %v2736 = vld [vmem:[%s2732 + $0x14] sm:$0xf]
        %v2737 = vld [vmem:[%s2732 + $0x18] sm:$0xff]
        %v2738 = vld [vmem:[%s2732 + $0x20] sm:$0xf]
        %v2739 = vld [vmem:[%s2732 + $0x24] sm:$0xff]
        %v2740 = vld [vmem:[%s2732 + $0x2c] sm:$0xf]
        %v2741 = vld [vmem:[%s2732 + $0x30] sm:$0xff]
        %v2742 = vld [vmem:[%s2732 + $0x38] sm:$0xf]
        %v2743 = vld [vmem:[%s2732 + $0x3c] sm:$0xff]
        %v2744 = vld [vmem:[%s2732 + $0x44] sm:$0xf]
        %v2745 = vld [vmem:[%s2732 + $0x48] sm:$0xff]
        %v2746 = vld [vmem:[%s2732 + $0x50] sm:$0xf]
        %v2747 = vld [vmem:[%s2732 + $0x54] sm:$0xff]
        %v2748 = vld [vmem:[%s2732 + $0x5c] sm:$0xf]
        %v2749 = vld [vmem:[%s2732 + $0x60] sm:$0xff]
        %v2750 = vld [vmem:[%s2732 + $0x68] sm:$0xf]
        %v2751 = vld [vmem:[%s2732 + $0x6c] sm:$0xff]
        %v2752 = vld [vmem:[%s2732 + $0x74] sm:$0xf]
        %v2753 = vld [vmem:[%s2732 + $0x78] sm:$0xff]
        %v2754 = vld [vmem:[%s2732 + $0x80] sm:$0xf]
        %v2755 = vld [vmem:[%s2732 + $0x84] sm:$0xff]
        %v2756 = vld [vmem:[%s2732 + $0x8c] sm:$0xf]
        %v2757 = vld [vmem:[%s2732 + $0x90] sm:$0xff]
        %v2758 = vld [vmem:[%s2732 + $0x98] sm:$0xf]
        %v2759 = vld [vmem:[%s2732 + $0x9c] sm:$0xff]
        %v2760 = vld [vmem:[%s2732 + $0xa4] sm:$0xf]
        %v2761 = vld [vmem:[%s2732 + $0xa8] sm:$0xff]
        %v2762 = vld [vmem:[%s2732 + $0xb0] sm:$0xf]
        %v2763 = vld [vmem:[%s2732 + $0xb4] sm:$0xff]
        %v2764 = vld [vmem:[%s2732 + $0xbc] sm:$0xf]
        %s2765 = scalar_lea.vmem %s6, 64
        %v2766 = vld [vmem:[%s2765] sm:$0xf]
        %v2767 = vld [vmem:[%s2765 + $0x4] sm:$0xf]
        %v2768 = vld [vmem:[%s2765 + $0x8] sm:$0xf]
        %v2769 = vld [vmem:[%s2765 + $0xc] sm:$0xf]
        %v2770 = vld [vmem:[%s2765 + $0x10] sm:$0xf]
        %v2771 = vld [vmem:[%s2765 + $0x14] sm:$0xf]
        %v2772 = vld [vmem:[%s2765 + $0x18] sm:$0xf]
        %v2773 = vld [vmem:[%s2765 + $0x1c] sm:$0xf]
        %v2774 = vld [vmem:[%s2765 + $0x20] sm:$0xf]
        %v2775 = vld [vmem:[%s2765 + $0x24] sm:$0xf]
        %v2776 = vld [vmem:[%s2765 + $0x28] sm:$0xf]
        %v2777 = vld [vmem:[%s2765 + $0x2c] sm:$0xf]
        %v2778 = vld [vmem:[%s2765 + $0x30] sm:$0xf]
        %v2779 = vld [vmem:[%s2765 + $0x34] sm:$0xf]
        %v2780 = vld [vmem:[%s2765 + $0x38] sm:$0xf]
        %v2781 = vld [vmem:[%s2765 + $0x3c] sm:$0xf]
        %s2782 = scalar_lea.vmem [#allocation10], 128
        %v2783 = vld [vmem:[%s2782] sm:$0xff]
        %v2784 = vld [vmem:[%s2782 + $0x8] sm:$0xff]
        %v2785 = vld [vmem:[%s2782 + $0x10] sm:$0xff]
        %v2786 = vld [vmem:[%s2782 + $0x18] sm:$0xff]
        %v2787 = vld [vmem:[%s2782 + $0x20] sm:$0xff]
        %v2788 = vld [vmem:[%s2782 + $0x28] sm:$0xff]
        %v2789 = vld [vmem:[%s2782 + $0x30] sm:$0xff]
        %v2790 = vld [vmem:[%s2782 + $0x38] sm:$0xff]
        %v2791 = vld [vmem:[%s2782 + $0x40] sm:$0xff]
        %v2792 = vld [vmem:[%s2782 + $0x48] sm:$0xff]
        %v2793 = vld [vmem:[%s2782 + $0x50] sm:$0xff]
        %v2794 = vld [vmem:[%s2782 + $0x58] sm:$0xff]
        %v2795 = vld [vmem:[%s2782 + $0x60] sm:$0xff]
        %v2796 = vld [vmem:[%s2782 + $0x68] sm:$0xff]
        %v2797 = vld [vmem:[%s2782 + $0x70] sm:$0xff]
        %v2798 = vld [vmem:[%s2782 + $0x78] sm:$0xff]
        %s2799 = scalar_lea.vmem [#allocation11], 128
        %v2800 = vld [vmem:[%s2799] sm:$0xff]
        %v2801 = vld [vmem:[%s2799 + $0x8] sm:$0xff]
        %v2802 = vld [vmem:[%s2799 + $0x10] sm:$0xff]
        %v2803 = vld [vmem:[%s2799 + $0x18] sm:$0xff]
        %v2804 = vld [vmem:[%s2799 + $0x20] sm:$0xff]
        %v2805 = vld [vmem:[%s2799 + $0x28] sm:$0xff]
        %v2806 = vld [vmem:[%s2799 + $0x30] sm:$0xff]
        %v2807 = vld [vmem:[%s2799 + $0x38] sm:$0xff]
        %v2808 = vld [vmem:[%s2799 + $0x40] sm:$0xff]
        %v2809 = vld [vmem:[%s2799 + $0x48] sm:$0xff]
        %v2810 = vld [vmem:[%s2799 + $0x50] sm:$0xff]
        %v2811 = vld [vmem:[%s2799 + $0x58] sm:$0xff]
        %v2812 = vld [vmem:[%s2799 + $0x60] sm:$0xff]
        %v2813 = vld [vmem:[%s2799 + $0x68] sm:$0xff]
        %v2814 = vld [vmem:[%s2799 + $0x70] sm:$0xff]
        %v2815 = vld [vmem:[%s2799 + $0x78] sm:$0xff]
        %s2816 = scalar_lea.vmem [#allocation13], 128
        %v2817 = vld [vmem:[%s2816] sm:$0xf]
        %v2818 = vld [vmem:[%s2816 + $0x4] sm:$0xf]
        %v2819 = vld [vmem:[%s2816 + $0x8] sm:$0xf]
        %v2820 = vld [vmem:[%s2816 + $0xc] sm:$0xf]
        %v2821 = vld [vmem:[%s2816 + $0x10] sm:$0xf]
        %v2822 = vld [vmem:[%s2816 + $0x14] sm:$0xf]
        %v2823 = vld [vmem:[%s2816 + $0x18] sm:$0xf]
        %v2824 = vld [vmem:[%s2816 + $0x1c] sm:$0xf]
        %v2825 = vld [vmem:[%s2816 + $0x20] sm:$0xf]
        %v2826 = vld [vmem:[%s2816 + $0x24] sm:$0xf]
        %v2827 = vld [vmem:[%s2816 + $0x28] sm:$0xf]
        %v2828 = vld [vmem:[%s2816 + $0x2c] sm:$0xf]
        %v2829 = vld [vmem:[%s2816 + $0x30] sm:$0xf]
        %v2830 = vld [vmem:[%s2816 + $0x34] sm:$0xf]
        %v2831 = vld [vmem:[%s2816 + $0x38] sm:$0xf]
        %v2832 = vld [vmem:[%s2816 + $0x3c] sm:$0xf]
        %v2833 = vld [vmem:[%s2816 + $0x40] sm:$0xf]
        %v2834 = vld [vmem:[%s2816 + $0x44] sm:$0xf]
        %v2835 = vld [vmem:[%s2816 + $0x48] sm:$0xf]
        %v2836 = vld [vmem:[%s2816 + $0x4c] sm:$0xf]
        %v2837 = vld [vmem:[%s2816 + $0x50] sm:$0xf]
        %v2838 = vld [vmem:[%s2816 + $0x54] sm:$0xf]
        %v2839 = vld [vmem:[%s2816 + $0x58] sm:$0xf]
        %v2840 = vld [vmem:[%s2816 + $0x5c] sm:$0xf]
        %v2841 = vld [vmem:[%s2816 + $0x60] sm:$0xf]
        %v2842 = vld [vmem:[%s2816 + $0x64] sm:$0xf]
        %v2843 = vld [vmem:[%s2816 + $0x68] sm:$0xf]
        %v2844 = vld [vmem:[%s2816 + $0x6c] sm:$0xf]
        %v2845 = vld [vmem:[%s2816 + $0x70] sm:$0xf]
        %v2846 = vld [vmem:[%s2816 + $0x74] sm:$0xf]
        %v2847 = vld [vmem:[%s2816 + $0x78] sm:$0xf]
        %v2848 = vld [vmem:[%s2816 + $0x7c] sm:$0xf]
        %s2849 = scalar_lea.vmem %s10, 4
        %v2850 = vld [vmem:[%s2849] sm:$0xf]
        %v2851 = vpack.c.bf16 %v1910, %v1909
        %v2852 = vpack.c.bf16 %v2730, %v2729
        %v2853 = vpack.c.bf16 %v2731, %v2731
        %v2870 = vunpack.c.l.b16 %v2733
        %v2871 = vunpack.c.l.b16 %v2735
        %v2872 = vunpack.c.l.b16 %v2737
        %v2873 = vunpack.c.l.b16 %v2739
        %v2874 = vunpack.c.l.b16 %v2741
        %v2875 = vunpack.c.l.b16 %v2743
        %v2876 = vunpack.c.l.b16 %v2745
        %v2877 = vunpack.c.l.b16 %v2747
        %v2878 = vunpack.c.l.b16 %v2749
        %v2879 = vunpack.c.l.b16 %v2751
        %v2880 = vunpack.c.l.b16 %v2753
        %v2881 = vunpack.c.l.b16 %v2755
        %v2882 = vunpack.c.l.b16 %v2757
        %v2883 = vunpack.c.l.b16 %v2759
        %v2884 = vunpack.c.l.b16 %v2761
        %v2885 = vunpack.c.l.b16 %v2763
        %v2886 = vpack.c.b16 %v2871, %v2870
        %v2887 = vpack.c.b16 %v2873, %v2872
        %v2888 = vpack.c.b16 %v2875, %v2874
        %v2889 = vpack.c.b16 %v2877, %v2876
        %v2890 = vpack.c.b16 %v2879, %v2878
        %v2891 = vpack.c.b16 %v2881, %v2880
        %v2892 = vpack.c.b16 %v2883, %v2882
        %v2893 = vpack.c.b16 %v2885, %v2884
        %2902 = vmatprep.subr.bf16.mxu0 0
        %2903 = vmatpush1.bf16.msra.mxu0 %v2886
        %2904 = vmatprep.subr.bf16.mxu0 0
        %2905 = vmatpush1.bf16.msra.mxu0 %v2887
        %2906 = vmatprep.subr.bf16.mxu0 0
        %2907 = vmatpush1.bf16.msra.mxu0 %v2888
        %2908 = vmatprep.subr.bf16.mxu0 0
        %2909 = vmatpush1.bf16.msra.mxu0 %v2889
        %2910 = vmatprep.subr.bf16.mxu0 0
        %2911 = vmatpush1.bf16.msra.mxu0 %v2890
        %2912 = vmatprep.subr.bf16.mxu0 0
        %2913 = vmatpush1.bf16.msra.mxu0 %v2891
        %2914 = vmatprep.subr.bf16.mxu0 0
        %2915 = vmatpush1.bf16.msra.mxu0 %v2892
        %2916 = vmatprep.subr.bf16.mxu0 0
        %2917 = vmatpush1.bf16.msra.mxu0 %v2893
        %2918 = vmatprep.subr.bf16.mxu0 0
        %2919 = vmatpush1.bf16.msra.mxu0 0
        %2920 = vmatprep.subr.bf16.mxu0 0
        %2921 = vmatpush1.bf16.msra.mxu0 0
        %2922 = vmatprep.subr.bf16.mxu0 0
        %2923 = vmatpush1.bf16.msra.mxu0 0
        %2924 = vmatprep.subr.bf16.mxu0 0
        %2925 = vmatpush1.bf16.msra.mxu0 0
        %2926 = vmatprep.subr.bf16.mxu0 0
        %2927 = vmatpush1.bf16.msra.mxu0 0
        %2928 = vmatprep.subr.bf16.mxu0 0
        %2929 = vmatpush1.bf16.msra.mxu0 0
        %2930 = vmatprep.subr.bf16.mxu0 0
        %2931 = vmatpush1.bf16.msra.mxu0 0
        %2932 = vmatprep.subr.bf16.mxu0 0
        %2933 = vmatpush1.bf16.msra.mxu0 0
        %2934 = vmatprep.mubr.bf16.mxu0 0
        %2935 = vmatmul.mubr.bf16.gmra.mrb[0].mxu0 %v2851
        %v2936 = vpop.f32.mrb[0].mxu0
        %v2937 = vadd.f32 0.0, %v2936
        %v2938 = vpop.f32.mrb[0].mxu0
        %v2939 = vpop.f32.mrb[0].mxu0
        %v2940 = vadd.f32 0.0, %v2939
        %v2941 = vpop.f32.mrb[0].mxu0
        %2942 = vdwg.mxu0
        %v2959 = vunpack.c.h.b16 %v2733
        %v2960 = vunpack.c.l.b16 %v2734
        %v2961 = vunpack.c.h.b16 %v2735
        %v2962 = vunpack.c.l.b16 %v2736
        %v2963 = vunpack.c.h.b16 %v2737
        %v2964 = vunpack.c.l.b16 %v2738
        %v2965 = vunpack.c.h.b16 %v2739
        %v2966 = vunpack.c.l.b16 %v2740
        %v2967 = vunpack.c.h.b16 %v2741
        %v2968 = vunpack.c.l.b16 %v2742
        %v2969 = vunpack.c.h.b16 %v2743
        %v2970 = vunpack.c.l.b16 %v2744
        %v2971 = vunpack.c.h.b16 %v2745
        %v2972 = vunpack.c.l.b16 %v2746
        %v2973 = vunpack.c.h.b16 %v2747
        %v2974 = vunpack.c.l.b16 %v2748
        %v2975 = vunpack.c.h.b16 %v2749
        %v2976 = vunpack.c.l.b16 %v2750
        %v2977 = vunpack.c.h.b16 %v2751
        %v2978 = vunpack.c.l.b16 %v2752
        %v2979 = vunpack.c.h.b16 %v2753
        %v2980 = vunpack.c.l.b16 %v2754
        %v2981 = vunpack.c.h.b16 %v2755
        %v2982 = vunpack.c.l.b16 %v2756
        %v2983 = vunpack.c.h.b16 %v2757
        %v2984 = vunpack.c.l.b16 %v2758
        %v2985 = vunpack.c.h.b16 %v2759
        %v2986 = vunpack.c.l.b16 %v2760
        %v2987 = vunpack.c.h.b16 %v2761
        %v2988 = vunpack.c.l.b16 %v2762
        %v2989 = vunpack.c.h.b16 %v2763
        %v2990 = vunpack.c.l.b16 %v2764
        %v2991 = vpack.c.b16 %v2961, %v2959
        %v2992 = vpack.c.b16 %v2962, %v2960
        %v2993 = vpack.c.b16 %v2965, %v2963
        %v2994 = vpack.c.b16 %v2966, %v2964
        %v2995 = vpack.c.b16 %v2969, %v2967
        %v2996 = vpack.c.b16 %v2970, %v2968
        %v2997 = vpack.c.b16 %v2973, %v2971
        %v2998 = vpack.c.b16 %v2974, %v2972
        %v2999 = vpack.c.b16 %v2977, %v2975
        %v3000 = vpack.c.b16 %v2978, %v2976
        %v3001 = vpack.c.b16 %v2981, %v2979
        %v3002 = vpack.c.b16 %v2982, %v2980
        %v3003 = vpack.c.b16 %v2985, %v2983
        %v3004 = vpack.c.b16 %v2986, %v2984
        %v3005 = vpack.c.b16 %v2989, %v2987
        %v3006 = vpack.c.b16 %v2990, %v2988
        %3023 = vmatprep.subr.bf16.mxu0 %v2992
        %3024 = vmatpush1.bf16.msra.mxu0 %v2991
        %3025 = vmatprep.subr.bf16.mxu0 %v2994
        %3026 = vmatpush1.bf16.msra.mxu0 %v2993
        %3027 = vmatprep.subr.bf16.mxu0 %v2996
        %3028 = vmatpush1.bf16.msra.mxu0 %v2995
        %3029 = vmatprep.subr.bf16.mxu0 %v2998
        %3030 = vmatpush1.bf16.msra.mxu0 %v2997
        %3031 = vmatprep.subr.bf16.mxu0 %v3000
        %3032 = vmatpush1.bf16.msra.mxu0 %v2999
        %3033 = vmatprep.subr.bf16.mxu0 %v3002
        %3034 = vmatpush1.bf16.msra.mxu0 %v3001
        %3035 = vmatprep.subr.bf16.mxu0 %v3004
        %3036 = vmatpush1.bf16.msra.mxu0 %v3003
        %3037 = vmatprep.subr.bf16.mxu0 %v3006
        %3038 = vmatpush1.bf16.msra.mxu0 %v3005
        %3039 = vmatprep.subr.bf16.mxu0 0
        %3040 = vmatpush1.bf16.msra.mxu0 0
        %3041 = vmatprep.subr.bf16.mxu0 0
        %3042 = vmatpush1.bf16.msra.mxu0 0
        %3043 = vmatprep.subr.bf16.mxu0 0
        %3044 = vmatpush1.bf16.msra.mxu0 0
        %3045 = vmatprep.subr.bf16.mxu0 0
        %3046 = vmatpush1.bf16.msra.mxu0 0
        %3047 = vmatprep.subr.bf16.mxu0 0
        %3048 = vmatpush1.bf16.msra.mxu0 0
        %3049 = vmatprep.subr.bf16.mxu0 0
        %3050 = vmatpush1.bf16.msra.mxu0 0
        %3051 = vmatprep.subr.bf16.mxu0 0
        %3052 = vmatpush1.bf16.msra.mxu0 0
        %3053 = vmatprep.subr.bf16.mxu0 0
        %3054 = vmatpush1.bf16.msra.mxu0 0
        %3055 = vmatprep.mubr.bf16.mxu0 0
        %3056 = vmatmul.mubr.bf16.gmra.mrb[0].mxu0 %v2852
        %v3057 = vpop.f32.mrb[0].mxu0
        %v3058 = vadd.f32 0.0, %v3057
        %v3059 = vpop.f32.mrb[0].mxu0
        %v3060 = vadd.f32 0.0, %v3059
        %v3061 = vpop.f32.mrb[0].mxu0
        %v3062 = vadd.f32 0.0, %v3061
        %v3063 = vpop.f32.mrb[0].mxu0
        %v3064 = vadd.f32 0.0, %v3063
        %3065 = vmatprep.mubr.bf16.mxu0 0
        %3066 = vmatmul.mubr.bf16.gmra.mrb[0].mxu0 %v2853
        %v3067 = vpop.f32.mrb[0].mxu0
        %v3068 = vadd.f32 0.0, %v3067
        %v3069 = vpop.f32.mrb[0].mxu0
        %v3070 = vadd.f32 0.0, %v3069
        %v3071 = vpop.f32.mrb[0].mxu0
        %v3072 = vpop.f32.mrb[0].mxu0
        %3073 = vdwg.mxu0
        %vm3074 = vcmp.gt.f32.partialorder %v2937, 0.0
        %vm3075 = vcmp.gt.f32.partialorder %v2940, 0.0
        %v3076 = vadd.f32 %v2937, 1.0
        %v3077 = vadd.f32 %v2940, 1.0
        %v3078 = vmul.f32 %v2937, 1.442695
        %v3079 = vpow.pop %v3078
        %v3080 = vmul.f32 %v2940, 1.442695
        %v3081 = vpow.pop %v3080
        %v3082 = vsel %vm3074, %v3076, %v3079
        %v3083 = vsel %vm3075, %v3077, %v3081
        %vm3084 = vcmp.gt.f32.partialorder %v3058, 0.0
        %vm3085 = vcmp.gt.f32.partialorder %v3062, 0.0
        %vm3086 = vcmp.gt.f32.partialorder %v3068, 0.0
        %v3087 = vadd.f32 %v3058, 1.0
        %v3088 = vadd.f32 %v3062, 1.0
        %v3089 = vadd.f32 %v3068, 1.0
        %v3090 = vmul.f32 %v3058, 1.442695
        %v3091 = vpow.pop %v3090
        %v3092 = vmul.f32 %v3062, 1.442695
        %v3093 = vpow.pop %v3092
        %v3094 = vmul.f32 %v3068, 1.442695
        %v3095 = vpow.pop %v3094
        %v3096 = vsel %vm3084, %v3087, %v3091
        %v3097 = vsel %vm3085, %v3088, %v3093
        %v3098 = vsel %vm3086, %v3089, %v3095
        %v3099 = vpack.c.bf16 %v3097, %v3096
        %v3100 = vpack.c.bf16 %v3098, %v3098
        %v3101 = vpack.c.bf16 %v3064, %v3060
        %v3102 = vpack.c.bf16 %v3070, %v3070
        %3103 = vxpose.xlu0.c.b16.start [1/8] %v3099, 128
        %3104 = vxpose.xlu0.c.b16.cont [2/8] %v3100, 128
        %3105 = vxpose.xlu0.c.b16.cont [3/8] 0, 128
        %3106 = vxpose.xlu0.c.b16.cont [4/8] 0, 128
        %3107 = vxpose.xlu0.c.b16.cont [5/8] 0, 128
        %3108 = vxpose.xlu0.c.b16.cont [6/8] 0, 128
        %3109 = vxpose.xlu0.c.b16.cont [7/8] 0, 128
        %3110 = vxpose.xlu0.c.b16.end [8/8] 0, 128
        %v3111 = vpop.trf.xlu0
        %v3112 = vpop.trf.xlu0
        %v3113 = vpop.trf.xlu0
        %v3114 = vpop.trf.xlu0
        %v3115 = vpop.trf.xlu0
        %v3116 = vpop.trf.xlu0
        %v3117 = vpop.trf.xlu0
        %v3118 = vpop.trf.xlu0
        %v3120 = vsel %vm2062, %v3111, 0
        %v3123 = vsel %vm2062, %v3112, 0
        %v3126 = vsel %vm2062, %v3113, 0
        %v3129 = vsel %vm2062, %v3114, 0
        %v3132 = vsel %vm2062, %v3115, 0
        %v3135 = vsel %vm2062, %v3116, 0
        %v3138 = vsel %vm2062, %v3117, 0
        %v3141 = vsel %vm2062, %v3118, 0
        %v3144 = vsel %vm1277, %v3102, 0
        %3146 = vmatprep.subr.bf16.mxu0 0
        %3147 = vmatpush1.bf16.msra.mxu0 %v3101
        %3148 = vmatprep.subr.bf16.mxu0 0
        %3149 = vmatpush1.bf16.msra.mxu0 %v3144
        %3150 = vmatprep.subr.bf16.mxu0 0
        %3151 = vmatpush1.bf16.msra.mxu0 0
        %3152 = vmatprep.subr.bf16.mxu0 0
        %3153 = vmatpush1.bf16.msra.mxu0 0
        %3154 = vmatprep.subr.bf16.mxu0 0
        %3155 = vmatpush1.bf16.msra.mxu0 0
        %3156 = vmatprep.subr.bf16.mxu0 0
        %3157 = vmatpush1.bf16.msra.mxu0 0
        %3158 = vmatprep.subr.bf16.mxu0 0
        %3159 = vmatpush1.bf16.msra.mxu0 0
        %3160 = vmatprep.subr.bf16.mxu0 0
        %3161 = vmatpush1.bf16.msra.mxu0 0
        %3162 = vmatprep.subr.bf16.mxu0 0
        %3163 = vmatpush1.bf16.msra.mxu0 0
        %3164 = vmatprep.subr.bf16.mxu0 0
        %3165 = vmatpush1.bf16.msra.mxu0 0
        %3166 = vmatprep.subr.bf16.mxu0 0
        %3167 = vmatpush1.bf16.msra.mxu0 0
        %3168 = vmatprep.subr.bf16.mxu0 0
        %3169 = vmatpush1.bf16.msra.mxu0 0
        %3170 = vmatprep.subr.bf16.mxu0 0
        %3171 = vmatpush1.bf16.msra.mxu0 0
        %3172 = vmatprep.subr.bf16.mxu0 0
        %3173 = vmatpush1.bf16.msra.mxu0 0
        %3174 = vmatprep.subr.bf16.mxu0 0
        %3175 = vmatpush1.bf16.msra.mxu0 0
        %3176 = vmatprep.subr.bf16.mxu0 0
        %3177 = vmatpush1.bf16.msra.mxu0 0
        %3178 = vmatprep.mubr.bf16.mxu0 0
        %3179 = vmatmul.mubr.bf16.gmra.mrb[0].mxu0 %v3120
        %v3180 = vpop.f32.mrb[0].mxu0
        %v3181 = vadd.f32 0.0, %v3180
        %v3182 = vpop.f32.mrb[0].mxu0
        %v3183 = vpop.f32.mrb[0].mxu0
        %v3184 = vadd.f32 0.0, %v3183
        %v3185 = vpop.f32.mrb[0].mxu0
        %3186 = vmatprep.mubr.bf16.mxu0 0
        %3187 = vmatmul.mubr.bf16.gmra.mrb[0].mxu0 %v3123
        %v3188 = vpop.f32.mrb[0].mxu0
        %v3189 = vadd.f32 0.0, %v3188
        %v3190 = vpop.f32.mrb[0].mxu0
        %v3191 = vpop.f32.mrb[0].mxu0
        %v3192 = vadd.f32 0.0, %v3191
        %v3193 = vpop.f32.mrb[0].mxu0
        %3194 = vmatprep.mubr.bf16.mxu0 0
        %3195 = vmatmul.mubr.bf16.gmra.mrb[0].mxu0 %v3126
        %v3196 = vpop.f32.mrb[0].mxu0
        %v3197 = vadd.f32 0.0, %v3196
        %v3198 = vpop.f32.mrb[0].mxu0
        %v3199 = vpop.f32.mrb[0].mxu0
        %v3200 = vadd.f32 0.0, %v3199
        %v3201 = vpop.f32.mrb[0].mxu0
        %3202 = vmatprep.mubr.bf16.mxu0 0
        %3203 = vmatmul.mubr.bf16.gmra.mrb[0].mxu0 %v3129
        %v3204 = vpop.f32.mrb[0].mxu0
        %v3205 = vadd.f32 0.0, %v3204
        %v3206 = vpop.f32.mrb[0].mxu0
        %v3207 = vpop.f32.mrb[0].mxu0
        %v3208 = vadd.f32 0.0, %v3207
        %v3209 = vpop.f32.mrb[0].mxu0
        %3210 = vmatprep.mubr.bf16.mxu0 0
        %3211 = vmatmul.mubr.bf16.gmra.mrb[0].mxu0 %v3132
        %v3212 = vpop.f32.mrb[0].mxu0
        %v3213 = vadd.f32 0.0, %v3212
        %v3214 = vpop.f32.mrb[0].mxu0
        %v3215 = vpop.f32.mrb[0].mxu0
        %v3216 = vadd.f32 0.0, %v3215
        %v3217 = vpop.f32.mrb[0].mxu0
        %3218 = vmatprep.mubr.bf16.mxu0 0
        %3219 = vmatmul.mubr.bf16.gmra.mrb[0].mxu0 %v3135
        %v3220 = vpop.f32.mrb[0].mxu0
        %v3221 = vadd.f32 0.0, %v3220
        %v3222 = vpop.f32.mrb[0].mxu0
        %v3223 = vpop.f32.mrb[0].mxu0
        %v3224 = vadd.f32 0.0, %v3223
        %v3225 = vpop.f32.mrb[0].mxu0
        %3226 = vmatprep.mubr.bf16.mxu0 0
        %3227 = vmatmul.mubr.bf16.gmra.mrb[0].mxu0 %v3138
        %v3228 = vpop.f32.mrb[0].mxu0
        %v3229 = vadd.f32 0.0, %v3228
        %v3230 = vpop.f32.mrb[0].mxu0
        %v3231 = vpop.f32.mrb[0].mxu0
        %v3232 = vadd.f32 0.0, %v3231
        %v3233 = vpop.f32.mrb[0].mxu0
        %3234 = vmatprep.mubr.bf16.mxu0 0
        %3235 = vmatmul.mubr.bf16.gmra.mrb[0].mxu0 %v3141
        %v3236 = vpop.f32.mrb[0].mxu0
        %v3237 = vadd.f32 0.0, %v3236
        %v3238 = vpop.f32.mrb[0].mxu0
        %v3239 = vpop.f32.mrb[0].mxu0
        %v3240 = vadd.f32 0.0, %v3239
        %v3241 = vpop.f32.mrb[0].mxu0
        %3242 = vdwg.mxu0
        %v3243 = vpack.c.bf16 %v3184, %v3181
        %v3244 = vpack.c.bf16 %v3192, %v3189
        %v3245 = vpack.c.bf16 %v3200, %v3197
        %v3246 = vpack.c.bf16 %v3208, %v3205
        %v3247 = vpack.c.bf16 %v3216, %v3213
        %v3248 = vpack.c.bf16 %v3224, %v3221
        %v3249 = vpack.c.bf16 %v3232, %v3229
        %v3250 = vpack.c.bf16 %v3240, %v3237
        %v3251 = vmul.bf16 %v3243, %v1120
        %v3252 = vmul.bf16 %v3244, %v1121
        %v3253 = vmul.bf16 %v3245, %v1122
        %v3254 = vmul.bf16 %v3246, %v1123
        %v3255 = vmul.bf16 %v3247, %v1124
        %v3256 = vmul.bf16 %v3248, %v1125
        %v3257 = vmul.bf16 %v3249, %v1126
        %v3258 = vmul.bf16 %v3250, %v1127
        %v3259 = vpack.c.bf16 %v3083, %v3082
        %3260 = vmatprep.subr.bf16.mxu0 0
        %3261 = vmatpush1.bf16.msra.mxu0 %v3251
        %3262 = vmatprep.subr.bf16.mxu0 0
        %3263 = vmatpush1.bf16.msra.mxu0 %v3252
        %3264 = vmatprep.subr.bf16.mxu0 0
        %3265 = vmatpush1.bf16.msra.mxu0 %v3253
        %3266 = vmatprep.subr.bf16.mxu0 0
        %3267 = vmatpush1.bf16.msra.mxu0 %v3254
        %3268 = vmatprep.subr.bf16.mxu0 0
        %3269 = vmatpush1.bf16.msra.mxu0 %v3255
        %3270 = vmatprep.subr.bf16.mxu0 0
        %3271 = vmatpush1.bf16.msra.mxu0 %v3256
        %3272 = vmatprep.subr.bf16.mxu0 0
        %3273 = vmatpush1.bf16.msra.mxu0 %v3257
        %3274 = vmatprep.subr.bf16.mxu0 0
        %3275 = vmatpush1.bf16.msra.mxu0 %v3258
        %3276 = vmatprep.subr.bf16.mxu0 0
        %3277 = vmatpush1.bf16.msra.mxu0 0
        %3278 = vmatprep.subr.bf16.mxu0 0
        %3279 = vmatpush1.bf16.msra.mxu0 0
        %3280 = vmatprep.subr.bf16.mxu0 0
        %3281 = vmatpush1.bf16.msra.mxu0 0
        %3282 = vmatprep.subr.bf16.mxu0 0
        %3283 = vmatpush1.bf16.msra.mxu0 0
        %3284 = vmatprep.subr.bf16.mxu0 0
        %3285 = vmatpush1.bf16.msra.mxu0 0
        %3286 = vmatprep.subr.bf16.mxu0 0
        %3287 = vmatpush1.bf16.msra.mxu0 0
        %3288 = vmatprep.subr.bf16.mxu0 0
        %3289 = vmatpush1.bf16.msra.mxu0 0
        %3290 = vmatprep.subr.bf16.mxu0 0
        %3291 = vmatpush1.bf16.msra.mxu0 0
        %3292 = vmatprep.mubr.bf16.mxu0 0
        %3293 = vmatmul.mubr.bf16.gmra.mrb[0].mxu0 %v3259
        %v3294 = vpop.f32.mrb[0].mxu0
        %v3295 = vadd.f32 0.0, %v3294
        %v3296 = vpop.f32.mrb[0].mxu0
        %v3297 = vpop.f32.mrb[0].mxu0
        %v3298 = vadd.f32 0.0, %v3297
        %v3299 = vpop.f32.mrb[0].mxu0
        %3300 = vdwg.mxu0
        %v3301 = vadd.f32 %v3096, %v3097
        %v3302 = vadd.f32 %v3301, %v3098
        %v3303 = vrot.slane %v3302, 4
        %v3304 = vadd.f32 %v3302, %v3303
        %v3305 = vrot.slane %v3304, 2
        %v3306 = vadd.f32 %v3304, %v3305
        %v3307 = vrot.slane %v3306, 1
        %v3308 = vadd.f32 %v3306, %v3307
        %v3309 = vmul.f32 %v3082, %v3308
        %v3310 = vmul.f32 %v3083, %v3308
        %3311 = vmatprep.subr.mxu0 0.0
        %3312 = vmatpush1.msra.mxu0 %v577
        %3313 = vmatprep.subr.mxu0 0.0
        %3314 = vmatpush1.msra.mxu0 %v578
        %3315 = vmatprep.subr.mxu0 0.0
        %3316 = vmatpush1.msra.mxu0 %v579
        %3317 = vmatprep.subr.mxu0 0.0
        %3318 = vmatpush1.msra.mxu0 %v580
        %3319 = vmatprep.subr.mxu0 0.0
        %3320 = vmatpush1.msra.mxu0 %v581
        %3321 = vmatprep.subr.mxu0 0.0
        %3322 = vmatpush1.msra.mxu0 %v582
        %3323 = vmatprep.subr.mxu0 0.0
        %3324 = vmatpush1.msra.mxu0 %v583
        %3325 = vmatprep.subr.mxu0 0.0
        %3326 = vmatpush1.msra.mxu0 %v584
        %3327 = vmatprep.subr.mxu0 0.0
        %3328 = vmatpush1.msra.mxu0 %v585
        %3329 = vmatprep.subr.mxu0 0.0
        %3330 = vmatpush1.msra.mxu0 %v586
        %3331 = vmatprep.subr.mxu0 0.0
        %3332 = vmatpush1.msra.mxu0 %v587
        %3333 = vmatprep.subr.mxu0 0.0
        %3334 = vmatpush1.msra.mxu0 %v588
        %3335 = vmatprep.subr.mxu0 0.0
        %3336 = vmatpush1.msra.mxu0 %v589
        %3337 = vmatprep.subr.mxu0 0.0
        %3338 = vmatpush1.msra.mxu0 %v590
        %3339 = vmatprep.subr.mxu0 0.0
        %3340 = vmatpush1.msra.mxu0 %v591
        %3341 = vmatprep.subr.mxu0 0.0
        %3342 = vmatpush1.msra.mxu0 %v592
        %3343 = vmatprep.subr.mxu0 0.0
        %3344 = vmatpush1.msra.mxu0 0.0
        %3345 = vmatprep.subr.mxu0 0.0
        %3346 = vmatpush1.msra.mxu0 0.0
        %3347 = vmatprep.subr.mxu0 0.0
        %3348 = vmatpush1.msra.mxu0 0.0
        %3349 = vmatprep.subr.mxu0 0.0
        %3350 = vmatpush1.msra.mxu0 0.0
        %3351 = vmatprep.subr.mxu0 0.0
        %3352 = vmatpush1.msra.mxu0 0.0
        %3353 = vmatprep.subr.mxu0 0.0
        %3354 = vmatpush1.msra.mxu0 0.0
        %3355 = vmatprep.subr.mxu0 0.0
        %3356 = vmatpush1.msra.mxu0 0.0
        %3357 = vmatprep.subr.mxu0 0.0
        %3358 = vmatpush1.msra.mxu0 0.0
        %3359 = vmatprep.subr.mxu0 0.0
        %3360 = vmatpush1.msra.mxu0 0.0
        %3361 = vmatprep.subr.mxu0 0.0
        %3362 = vmatpush1.msra.mxu0 0.0
        %3363 = vmatprep.subr.mxu0 0.0
        %3364 = vmatpush1.msra.mxu0 0.0
        %3365 = vmatprep.subr.mxu0 0.0
        %3366 = vmatpush1.msra.mxu0 0.0
        %3367 = vmatprep.subr.mxu0 0.0
        %3368 = vmatpush1.msra.mxu0 0.0
        %3369 = vmatprep.subr.mxu0 0.0
        %3370 = vmatpush1.msra.mxu0 0.0
        %3371 = vmatprep.subr.mxu0 0.0
        %3372 = vmatpush1.msra.mxu0 0.0
        %3373 = vmatprep.subr.mxu0 0.0
        %3374 = vmatpush1.msra.mxu0 0.0
        %3375 = vmatprep.mubr.f32.mxu0 0.0
        %3376 = vmatmul.mubr.f32.gmra.mrb[0].mxu0 %v3309
        %v3377 = vpop.f32.mrb[0].mxu0
        %v3378 = vadd.f32 0.0, %v3377
        %v3379 = vpop.f32.mrb[0].mxu0
        %3380 = vmatprep.mubr.f32.mxu0 0.0
        %3381 = vmatmul.mubr.f32.gmra.mrb[0].mxu0 %v3310
        %v3382 = vpop.f32.mrb[0].mxu0
        %v3383 = vadd.f32 0.0, %v3382
        %v3384 = vpop.f32.mrb[0].mxu0
        %3385 = vdwg.mxu0
        %v3387 = vsel %vm1270, %v3378, 0
        %v3390 = vsel %vm1270, %v3383, 0
        %3392 = vmatprep.subr.mxu0 0.0
        %3393 = vmatpush1.msra.mxu0 %v1279
        %3394 = vmatprep.subr.mxu0 0.0
        %3395 = vmatpush1.msra.mxu0 0.0
        %3396 = vmatprep.subr.mxu0 0.0
        %3397 = vmatpush1.msra.mxu0 0.0
        %3398 = vmatprep.subr.mxu0 0.0
        %3399 = vmatpush1.msra.mxu0 0.0
        %3400 = vmatprep.subr.mxu0 0.0
        %3401 = vmatpush1.msra.mxu0 0.0
        %3402 = vmatprep.subr.mxu0 0.0
        %3403 = vmatpush1.msra.mxu0 0.0
        %3404 = vmatprep.subr.mxu0 0.0
        %3405 = vmatpush1.msra.mxu0 0.0
        %3406 = vmatprep.subr.mxu0 0.0
        %3407 = vmatpush1.msra.mxu0 0.0
        %3408 = vmatprep.subr.mxu0 0.0
        %3409 = vmatpush1.msra.mxu0 0.0
        %3410 = vmatprep.subr.mxu0 0.0
        %3411 = vmatpush1.msra.mxu0 0.0
        %3412 = vmatprep.subr.mxu0 0.0
        %3413 = vmatpush1.msra.mxu0 0.0
        %3414 = vmatprep.subr.mxu0 0.0
        %3415 = vmatpush1.msra.mxu0 0.0
        %3416 = vmatprep.subr.mxu0 0.0
        %3417 = vmatpush1.msra.mxu0 0.0
        %3418 = vmatprep.subr.mxu0 0.0
        %3419 = vmatpush1.msra.mxu0 0.0
        %3420 = vmatprep.subr.mxu0 0.0
        %3421 = vmatpush1.msra.mxu0 0.0
        %3422 = vmatprep.subr.mxu0 0.0
        %3423 = vmatpush1.msra.mxu0 0.0
        %3424 = vmatprep.subr.mxu0 0.0
        %3425 = vmatpush1.msra.mxu0 0.0
        %3426 = vmatprep.subr.mxu0 0.0
        %3427 = vmatpush1.msra.mxu0 0.0
        %3428 = vmatprep.subr.mxu0 0.0
        %3429 = vmatpush1.msra.mxu0 0.0
        %3430 = vmatprep.subr.mxu0 0.0
        %3431 = vmatpush1.msra.mxu0 0.0
        %3432 = vmatprep.subr.mxu0 0.0
        %3433 = vmatpush1.msra.mxu0 0.0
        %3434 = vmatprep.subr.mxu0 0.0
        %3435 = vmatpush1.msra.mxu0 0.0
        %3436 = vmatprep.subr.mxu0 0.0
        %3437 = vmatpush1.msra.mxu0 0.0
        %3438 = vmatprep.subr.mxu0 0.0
        %3439 = vmatpush1.msra.mxu0 0.0
        %3440 = vmatprep.subr.mxu0 0.0
        %3441 = vmatpush1.msra.mxu0 0.0
        %3442 = vmatprep.subr.mxu0 0.0
        %3443 = vmatpush1.msra.mxu0 0.0
        %3444 = vmatprep.subr.mxu0 0.0
        %3445 = vmatpush1.msra.mxu0 0.0
        %3446 = vmatprep.subr.mxu0 0.0
        %3447 = vmatpush1.msra.mxu0 0.0
        %3448 = vmatprep.subr.mxu0 0.0
        %3449 = vmatpush1.msra.mxu0 0.0
        %3450 = vmatprep.subr.mxu0 0.0
        %3451 = vmatpush1.msra.mxu0 0.0
        %3452 = vmatprep.subr.mxu0 0.0
        %3453 = vmatpush1.msra.mxu0 0.0
        %3454 = vmatprep.subr.mxu0 0.0
        %3455 = vmatpush1.msra.mxu0 0.0
        %3456 = vmatprep.mubr.f32.mxu0 0.0
        %3457 = vmatmul.mubr.f32.gmra.mrb[0].mxu0 %v3387
        %v3458 = vpop.f32.mrb[0].mxu0
        %v3459 = vadd.f32 1e-06, %v3458
        %v3460 = vpop.f32.mrb[0].mxu0
        %3461 = vmatprep.mubr.f32.mxu0 0.0
        %3462 = vmatmul.mubr.f32.gmra.mrb[0].mxu0 %v3390
        %v3463 = vpop.f32.mrb[0].mxu0
        %v3464 = vadd.f32 1e-06, %v3463
        %v3465 = vpop.f32.mrb[0].mxu0
        %3466 = vdwg.mxu0
        %v3467 = vrcp.pop %v3459
        %v3468 = vrcp.pop %v3464
        %v3469 = vmul.f32 %v3295, %v3467
        %v3470 = vmul.f32 %v3298, %v3468
        %v3471 = vpack.c.bf16 %v3470, %v3469
        %v3488 = vunpack.c.l.b16 %v2766
        %v3489 = vunpack.c.l.b16 %v2767
        %v3490 = vunpack.c.l.b16 %v2768
        %v3491 = vunpack.c.l.b16 %v2769
        %v3492 = vunpack.c.l.b16 %v2770
        %v3493 = vunpack.c.l.b16 %v2771
        %v3494 = vunpack.c.l.b16 %v2772
        %v3495 = vunpack.c.l.b16 %v2773
        %v3496 = vunpack.c.l.b16 %v2774
        %v3497 = vunpack.c.l.b16 %v2775
        %v3498 = vunpack.c.l.b16 %v2776
        %v3499 = vunpack.c.l.b16 %v2777
        %v3500 = vunpack.c.l.b16 %v2778
        %v3501 = vunpack.c.l.b16 %v2779
        %v3502 = vunpack.c.l.b16 %v2780
        %v3503 = vunpack.c.l.b16 %v2781
        %v3504 = vpack.c.b16 %v3489, %v3488
        %v3505 = vpack.c.b16 %v3491, %v3490
        %v3506 = vpack.c.b16 %v3493, %v3492
        %v3507 = vpack.c.b16 %v3495, %v3494
        %v3508 = vpack.c.b16 %v3497, %v3496
        %v3509 = vpack.c.b16 %v3499, %v3498
        %v3510 = vpack.c.b16 %v3501, %v3500
        %v3511 = vpack.c.b16 %v3503, %v3502
        %3520 = vmatprep.subr.bf16.mxu0 0
        %3521 = vmatpush1.bf16.msra.mxu0 %v3504
        %3522 = vmatprep.subr.bf16.mxu0 0
        %3523 = vmatpush1.bf16.msra.mxu0 %v3505
        %3524 = vmatprep.subr.bf16.mxu0 0
        %3525 = vmatpush1.bf16.msra.mxu0 %v3506
        %3526 = vmatprep.subr.bf16.mxu0 0
        %3527 = vmatpush1.bf16.msra.mxu0 %v3507
        %3528 = vmatprep.subr.bf16.mxu0 0
        %3529 = vmatpush1.bf16.msra.mxu0 %v3508
        %3530 = vmatprep.subr.bf16.mxu0 0
        %3531 = vmatpush1.bf16.msra.mxu0 %v3509
        %3532 = vmatprep.subr.bf16.mxu0 0
        %3533 = vmatpush1.bf16.msra.mxu0 %v3510
        %3534 = vmatprep.subr.bf16.mxu0 0
        %3535 = vmatpush1.bf16.msra.mxu0 %v3511
        %3536 = vmatprep.subr.bf16.mxu0 0
        %3537 = vmatpush1.bf16.msra.mxu0 0
        %3538 = vmatprep.subr.bf16.mxu0 0
        %3539 = vmatpush1.bf16.msra.mxu0 0
        %3540 = vmatprep.subr.bf16.mxu0 0
        %3541 = vmatpush1.bf16.msra.mxu0 0
        %3542 = vmatprep.subr.bf16.mxu0 0
        %3543 = vmatpush1.bf16.msra.mxu0 0
        %3544 = vmatprep.subr.bf16.mxu0 0
        %3545 = vmatpush1.bf16.msra.mxu0 0
        %3546 = vmatprep.subr.bf16.mxu0 0
        %3547 = vmatpush1.bf16.msra.mxu0 0
        %3548 = vmatprep.subr.bf16.mxu0 0
        %3549 = vmatpush1.bf16.msra.mxu0 0
        %3550 = vmatprep.subr.bf16.mxu0 0
        %3551 = vmatpush1.bf16.msra.mxu0 0
        %3552 = vmatprep.mubr.bf16.mxu0 0
        %3553 = vmatmul.mubr.bf16.gmra.mrb[0].mxu0 %v3471
        %v3554 = vpop.f32.mrb[0].mxu0
        %v3555 = vadd.f32 0.0, %v3554
        %v3556 = vpop.f32.mrb[0].mxu0
        %v3557 = vpop.f32.mrb[0].mxu0
        %v3558 = vadd.f32 0.0, %v3557
        %v3559 = vpop.f32.mrb[0].mxu0
        %3560 = vdwg.mxu0
        %3561 = vadd.xlane.f32.xlu0 %v3555
        %v3562 = vpop.xlane.xlu0 %3561
        %3563 = vadd.xlane.f32.xlu0 %v3558
        %v3564 = vpop.xlane.xlu0 %3563
        %v3565 = vmul.f32 %v3562, %v1454
        %v3566 = vmul.f32 %v3564, %v1454
        %v3567 = vsub.f32 %v3555, %v3565
        %v3568 = vsub.f32 %v3558, %v3566
        %v3569 = vmul.f32 %v3567, %v3567
        %v3570 = vmul.f32 %v3568, %v3568
        %3571 = vadd.xlane.f32.xlu0 %v3569
        %v3572 = vpop.xlane.xlu0 %3571
        %3573 = vadd.xlane.f32.xlu0 %v3570
        %v3574 = vpop.xlane.xlu0 %3573
        %v3575 = vmul.f32 %v3572, %v1454
        %v3576 = vmul.f32 %v3574, %v1454
        %v3577 = vadd.f32 %v3575, 1e-07
        %v3578 = vadd.f32 %v3576, 1e-07
        %v3579 = vrsqrt.pop %v3577
        %v3580 = vrsqrt.pop %v3578
        %v3581 = vmul.f32 %v3567, %v3579
        %v3582 = vmul.f32 %v3568, %v3580
        %v3583 = vlaneseq
        %v3584 = vshrl.u32 %v3583, 7
        %v3585 = vsub.s32 0, %v3584
        %v3586 = vrot.slane %v2850, %v3585
        %v3587 = vmul.f32 %v3581, %v3586
        %v3588 = vmul.f32 %v3582, %v3586
        %v3589 = vlaneseq
        %v3590 = vshrl.u32 %v3589, 7
        %v3591 = vsub.s32 1, %v3590
        %v3592 = vrot.slane %v2850, %v3591
        %v3593 = vadd.f32 %v3587, %v3592
        %v3594 = vadd.f32 %v3588, %v3592
        %v3595 = vpack.c.bf16 %v3594, %v3593
        %v3612 = vunpack.c.l.b16 %v2800
        %v3613 = vunpack.c.h.b16 %v2800
        %v3614 = vunpack.c.l.b16 %v2801
        %v3615 = vunpack.c.h.b16 %v2801
        %v3616 = vunpack.c.l.b16 %v2802
        %v3617 = vunpack.c.h.b16 %v2802
        %v3618 = vunpack.c.l.b16 %v2803
        %v3619 = vunpack.c.h.b16 %v2803
        %v3620 = vunpack.c.l.b16 %v2804
        %v3621 = vunpack.c.h.b16 %v2804
        %v3622 = vunpack.c.l.b16 %v2805
        %v3623 = vunpack.c.h.b16 %v2805
        %v3624 = vunpack.c.l.b16 %v2806
        %v3625 = vunpack.c.h.b16 %v2806
        %v3626 = vunpack.c.l.b16 %v2807
        %v3627 = vunpack.c.h.b16 %v2807
        %v3628 = vunpack.c.l.b16 %v2808
        %v3629 = vunpack.c.h.b16 %v2808
        %v3630 = vunpack.c.l.b16 %v2809
        %v3631 = vunpack.c.h.b16 %v2809
        %v3632 = vunpack.c.l.b16 %v2810
        %v3633 = vunpack.c.h.b16 %v2810
        %v3634 = vunpack.c.l.b16 %v2811
        %v3635 = vunpack.c.h.b16 %v2811
        %v3636 = vunpack.c.l.b16 %v2812
        %v3637 = vunpack.c.h.b16 %v2812
        %v3638 = vunpack.c.l.b16 %v2813
        %v3639 = vunpack.c.h.b16 %v2813
        %v3640 = vunpack.c.l.b16 %v2814
        %v3641 = vunpack.c.h.b16 %v2814
        %v3642 = vunpack.c.l.b16 %v2815
        %v3643 = vunpack.c.h.b16 %v2815
        %v3644 = vpack.c.b16 %v3614, %v3612
        %v3645 = vpack.c.b16 %v3615, %v3613
        %v3646 = vpack.c.b16 %v3618, %v3616
        %v3647 = vpack.c.b16 %v3619, %v3617
        %v3648 = vpack.c.b16 %v3622, %v3620
        %v3649 = vpack.c.b16 %v3623, %v3621
        %v3650 = vpack.c.b16 %v3626, %v3624
        %v3651 = vpack.c.b16 %v3627, %v3625
        %v3652 = vpack.c.b16 %v3630, %v3628
        %v3653 = vpack.c.b16 %v3631, %v3629
        %v3654 = vpack.c.b16 %v3634, %v3632
        %v3655 = vpack.c.b16 %v3635, %v3633
        %v3656 = vpack.c.b16 %v3638, %v3636
        %v3657 = vpack.c.b16 %v3639, %v3637
        %v3658 = vpack.c.b16 %v3642, %v3640
        %v3659 = vpack.c.b16 %v3643, %v3641
        %3676 = vmatprep.subr.bf16.mxu0 %v3645
        %3677 = vmatpush1.bf16.msra.mxu0 %v3644
        %3678 = vmatprep.subr.bf16.mxu0 %v3647
        %3679 = vmatpush1.bf16.msra.mxu0 %v3646
        %3680 = vmatprep.subr.bf16.mxu0 %v3649
        %3681 = vmatpush1.bf16.msra.mxu0 %v3648
        %3682 = vmatprep.subr.bf16.mxu0 %v3651
        %3683 = vmatpush1.bf16.msra.mxu0 %v3650
        %3684 = vmatprep.subr.bf16.mxu0 %v3653
        %3685 = vmatpush1.bf16.msra.mxu0 %v3652
        %3686 = vmatprep.subr.bf16.mxu0 %v3655
        %3687 = vmatpush1.bf16.msra.mxu0 %v3654
        %3688 = vmatprep.subr.bf16.mxu0 %v3657
        %3689 = vmatpush1.bf16.msra.mxu0 %v3656
        %3690 = vmatprep.subr.bf16.mxu0 %v3659
        %3691 = vmatpush1.bf16.msra.mxu0 %v3658
        %3692 = vmatprep.subr.bf16.mxu0 0
        %3693 = vmatpush1.bf16.msra.mxu0 0
        %3694 = vmatprep.subr.bf16.mxu0 0
        %3695 = vmatpush1.bf16.msra.mxu0 0
        %3696 = vmatprep.subr.bf16.mxu0 0
        %3697 = vmatpush1.bf16.msra.mxu0 0
        %3698 = vmatprep.subr.bf16.mxu0 0
        %3699 = vmatpush1.bf16.msra.mxu0 0
        %3700 = vmatprep.subr.bf16.mxu0 0
        %3701 = vmatpush1.bf16.msra.mxu0 0
        %3702 = vmatprep.subr.bf16.mxu0 0
        %3703 = vmatpush1.bf16.msra.mxu0 0
        %3704 = vmatprep.subr.bf16.mxu0 0
        %3705 = vmatpush1.bf16.msra.mxu0 0
        %3706 = vmatprep.subr.bf16.mxu0 0
        %3707 = vmatpush1.bf16.msra.mxu0 0
        %3708 = vmatprep.mubr.bf16.mxu0 0
        %3709 = vmatmul.mubr.bf16.gmra.mrb[0].mxu0 %v3595
        %v3710 = vpop.f32.mrb[0].mxu0
        %v3711 = vadd.f32 0.0, %v3710
        %v3712 = vpop.f32.mrb[0].mxu0
        %v3713 = vadd.f32 0.0, %v3712
        %v3714 = vpop.f32.mrb[0].mxu0
        %v3715 = vadd.f32 0.0, %v3714
        %v3716 = vpop.f32.mrb[0].mxu0
        %v3717 = vadd.f32 0.0, %v3716
        %3718 = vdwg.mxu0
        %v3735 = vunpack.c.l.b16 %v2783
        %v3736 = vunpack.c.h.b16 %v2783
        %v3737 = vunpack.c.l.b16 %v2784
        %v3738 = vunpack.c.h.b16 %v2784
        %v3739 = vunpack.c.l.b16 %v2785
        %v3740 = vunpack.c.h.b16 %v2785
        %v3741 = vunpack.c.l.b16 %v2786
        %v3742 = vunpack.c.h.b16 %v2786
        %v3743 = vunpack.c.l.b16 %v2787
        %v3744 = vunpack.c.h.b16 %v2787
        %v3745 = vunpack.c.l.b16 %v2788
        %v3746 = vunpack.c.h.b16 %v2788
        %v3747 = vunpack.c.l.b16 %v2789
        %v3748 = vunpack.c.h.b16 %v2789
        %v3749 = vunpack.c.l.b16 %v2790
        %v3750 = vunpack.c.h.b16 %v2790
        %v3751 = vunpack.c.l.b16 %v2791
        %v3752 = vunpack.c.h.b16 %v2791
        %v3753 = vunpack.c.l.b16 %v2792
        %v3754 = vunpack.c.h.b16 %v2792
        %v3755 = vunpack.c.l.b16 %v2793
        %v3756 = vunpack.c.h.b16 %v2793
        %v3757 = vunpack.c.l.b16 %v2794
        %v3758 = vunpack.c.h.b16 %v2794
        %v3759 = vunpack.c.l.b16 %v2795
        %v3760 = vunpack.c.h.b16 %v2795
        %v3761 = vunpack.c.l.b16 %v2796
        %v3762 = vunpack.c.h.b16 %v2796
        %v3763 = vunpack.c.l.b16 %v2797
        %v3764 = vunpack.c.h.b16 %v2797
        %v3765 = vunpack.c.l.b16 %v2798
        %v3766 = vunpack.c.h.b16 %v2798
        %v3767 = vpack.c.b16 %v3737, %v3735
        %v3768 = vpack.c.b16 %v3738, %v3736
        %v3769 = vpack.c.b16 %v3741, %v3739
        %v3770 = vpack.c.b16 %v3742, %v3740
        %v3771 = vpack.c.b16 %v3745, %v3743
        %v3772 = vpack.c.b16 %v3746, %v3744
        %v3773 = vpack.c.b16 %v3749, %v3747
        %v3774 = vpack.c.b16 %v3750, %v3748
        %v3775 = vpack.c.b16 %v3753, %v3751
        %v3776 = vpack.c.b16 %v3754, %v3752
        %v3777 = vpack.c.b16 %v3757, %v3755
        %v3778 = vpack.c.b16 %v3758, %v3756
        %v3779 = vpack.c.b16 %v3761, %v3759
        %v3780 = vpack.c.b16 %v3762, %v3760
        %v3781 = vpack.c.b16 %v3765, %v3763
        %v3782 = vpack.c.b16 %v3766, %v3764
        %3799 = vmatprep.subr.bf16.mxu0 %v3768
        %3800 = vmatpush1.bf16.msra.mxu0 %v3767
        %3801 = vmatprep.subr.bf16.mxu0 %v3770
        %3802 = vmatpush1.bf16.msra.mxu0 %v3769
        %3803 = vmatprep.subr.bf16.mxu0 %v3772
        %3804 = vmatpush1.bf16.msra.mxu0 %v3771
        %3805 = vmatprep.subr.bf16.mxu0 %v3774
        %3806 = vmatpush1.bf16.msra.mxu0 %v3773
        %3807 = vmatprep.subr.bf16.mxu0 %v3776
        %3808 = vmatpush1.bf16.msra.mxu0 %v3775
        %3809 = vmatprep.subr.bf16.mxu0 %v3778
        %3810 = vmatpush1.bf16.msra.mxu0 %v3777
        %3811 = vmatprep.subr.bf16.mxu0 %v3780
        %3812 = vmatpush1.bf16.msra.mxu0 %v3779
        %3813 = vmatprep.subr.bf16.mxu0 %v3782
        %3814 = vmatpush1.bf16.msra.mxu0 %v3781
        %3815 = vmatprep.subr.bf16.mxu0 0
        %3816 = vmatpush1.bf16.msra.mxu0 0
        %3817 = vmatprep.subr.bf16.mxu0 0
        %3818 = vmatpush1.bf16.msra.mxu0 0
        %3819 = vmatprep.subr.bf16.mxu0 0
        %3820 = vmatpush1.bf16.msra.mxu0 0
        %3821 = vmatprep.subr.bf16.mxu0 0
        %3822 = vmatpush1.bf16.msra.mxu0 0
        %3823 = vmatprep.subr.bf16.mxu0 0
        %3824 = vmatpush1.bf16.msra.mxu0 0
        %3825 = vmatprep.subr.bf16.mxu0 0
        %3826 = vmatpush1.bf16.msra.mxu0 0
        %3827 = vmatprep.subr.bf16.mxu0 0
        %3828 = vmatpush1.bf16.msra.mxu0 0
        %3829 = vmatprep.subr.bf16.mxu0 0
        %3830 = vmatpush1.bf16.msra.mxu0 0
        %3831 = vmatprep.mubr.bf16.mxu0 0
        %3832 = vmatmul.mubr.bf16.gmra.mrb[0].mxu0 %v2851
        %v3833 = vpop.f32.mrb[0].mxu0
        %v3834 = vadd.f32 %v3711, %v3833
        %v3835 = vpop.f32.mrb[0].mxu0
        %v3836 = vadd.f32 %v3713, %v3835
        %v3837 = vpop.f32.mrb[0].mxu0
        %v3838 = vadd.f32 %v3715, %v3837
        %v3839 = vpop.f32.mrb[0].mxu0
        %v3840 = vadd.f32 %v3717, %v3839
        %3841 = vdwg.mxu0
        %v3842 = vmax.f32 %v3834, 0.0
        %v3843 = vmax.f32 %v3836, 0.0
        %v3844 = vmax.f32 %v3838, 0.0
        %v3845 = vmax.f32 %v3840, 0.0
        %v3846 = vpack.c.bf16 %v3844, %v3842
        %v3847 = vpack.c.bf16 %v3845, %v3843
        %v3880 = vunpack.c.l.b16 %v2817
        %v3881 = vunpack.c.l.b16 %v2818
        %v3882 = vunpack.c.l.b16 %v2819
        %v3883 = vunpack.c.l.b16 %v2820
        %v3884 = vunpack.c.l.b16 %v2821
        %v3885 = vunpack.c.l.b16 %v2822
        %v3886 = vunpack.c.l.b16 %v2823
        %v3887 = vunpack.c.l.b16 %v2824
        %v3888 = vunpack.c.l.b16 %v2825
        %v3889 = vunpack.c.l.b16 %v2826
        %v3890 = vunpack.c.l.b16 %v2827
        %v3891 = vunpack.c.l.b16 %v2828
        %v3892 = vunpack.c.l.b16 %v2829
        %v3893 = vunpack.c.l.b16 %v2830
        %v3894 = vunpack.c.l.b16 %v2831
        %v3895 = vunpack.c.l.b16 %v2832
        %v3896 = vunpack.c.l.b16 %v2833
        %v3897 = vunpack.c.l.b16 %v2834
        %v3898 = vunpack.c.l.b16 %v2835
        %v3899 = vunpack.c.l.b16 %v2836
        %v3900 = vunpack.c.l.b16 %v2837
        %v3901 = vunpack.c.l.b16 %v2838
        %v3902 = vunpack.c.l.b16 %v2839
        %v3903 = vunpack.c.l.b16 %v2840
        %v3904 = vunpack.c.l.b16 %v2841
        %v3905 = vunpack.c.l.b16 %v2842
        %v3906 = vunpack.c.l.b16 %v2843
        %v3907 = vunpack.c.l.b16 %v2844
        %v3908 = vunpack.c.l.b16 %v2845
        %v3909 = vunpack.c.l.b16 %v2846
        %v3910 = vunpack.c.l.b16 %v2847
        %v3911 = vunpack.c.l.b16 %v2848
        %v3912 = vpack.c.b16 %v3881, %v3880
        %v3913 = vpack.c.b16 %v3883, %v3882
        %v3914 = vpack.c.b16 %v3885, %v3884
        %v3915 = vpack.c.b16 %v3887, %v3886
        %v3916 = vpack.c.b16 %v3889, %v3888
        %v3917 = vpack.c.b16 %v3891, %v3890
        %v3918 = vpack.c.b16 %v3893, %v3892
        %v3919 = vpack.c.b16 %v3895, %v3894
        %v3920 = vpack.c.b16 %v3897, %v3896
        %v3921 = vpack.c.b16 %v3899, %v3898
        %v3922 = vpack.c.b16 %v3901, %v3900
        %v3923 = vpack.c.b16 %v3903, %v3902
        %v3924 = vpack.c.b16 %v3905, %v3904
        %v3925 = vpack.c.b16 %v3907, %v3906
        %v3926 = vpack.c.b16 %v3909, %v3908
        %v3927 = vpack.c.b16 %v3911, %v3910
        %3944 = vmatprep.subr.bf16.mxu0 0
        %3945 = vmatpush1.bf16.msra.mxu0 %v3912
        %3946 = vmatprep.subr.bf16.mxu0 0
        %3947 = vmatpush1.bf16.msra.mxu0 %v3913
        %3948 = vmatprep.subr.bf16.mxu0 0
        %3949 = vmatpush1.bf16.msra.mxu0 %v3914
        %3950 = vmatprep.subr.bf16.mxu0 0
        %3951 = vmatpush1.bf16.msra.mxu0 %v3915
        %3952 = vmatprep.subr.bf16.mxu0 0
        %3953 = vmatpush1.bf16.msra.mxu0 %v3916
        %3954 = vmatprep.subr.bf16.mxu0 0
        %3955 = vmatpush1.bf16.msra.mxu0 %v3917
        %3956 = vmatprep.subr.bf16.mxu0 0
        %3957 = vmatpush1.bf16.msra.mxu0 %v3918
        %3958 = vmatprep.subr.bf16.mxu0 0
        %3959 = vmatpush1.bf16.msra.mxu0 %v3919
        %3960 = vmatprep.subr.bf16.mxu0 0
        %3961 = vmatpush1.bf16.msra.mxu0 %v3920
        %3962 = vmatprep.subr.bf16.mxu0 0
        %3963 = vmatpush1.bf16.msra.mxu0 %v3921
        %3964 = vmatprep.subr.bf16.mxu0 0
        %3965 = vmatpush1.bf16.msra.mxu0 %v3922
        %3966 = vmatprep.subr.bf16.mxu0 0
        %3967 = vmatpush1.bf16.msra.mxu0 %v3923
        %3968 = vmatprep.subr.bf16.mxu0 0
        %3969 = vmatpush1.bf16.msra.mxu0 %v3924
        %3970 = vmatprep.subr.bf16.mxu0 0
        %3971 = vmatpush1.bf16.msra.mxu0 %v3925
        %3972 = vmatprep.subr.bf16.mxu0 0
        %3973 = vmatpush1.bf16.msra.mxu0 %v3926
        %3974 = vmatprep.subr.bf16.mxu0 0
        %3975 = vmatpush1.bf16.msra.mxu0 %v3927
        %3976 = vmatprep.mubr.bf16.mxu0 %v3847
        %3977 = vmatmul.mubr.bf16.gmra.mrb[0].mxu0 %v3846
        %v3978 = vpop.f32.mrb[0].mxu0
        %v3979 = vadd.f32 0.0, %v3978
        %v3980 = vpop.f32.mrb[0].mxu0
        %v3981 = vpop.f32.mrb[0].mxu0
        %v3982 = vadd.f32 0.0, %v3981
        %v3983 = vpop.f32.mrb[0].mxu0
        %3984 = vdwg.mxu0
        %3985 = vadd.xlane.f32.xlu0 %v3979
        %v3986 = vpop.xlane.xlu0 %3985
        %3987 = vadd.xlane.f32.xlu0 %v3982
        %v3988 = vpop.xlane.xlu0 %3987
        %v3989 = vmul.f32 %v3986, %v1454
        %v3990 = vmul.f32 %v3988, %v1454
        %v3991 = vsub.f32 %v3979, %v3989
        %v3992 = vsub.f32 %v3982, %v3990
        %v3993 = vmul.f32 %v3991, %v3991
        %v3994 = vmul.f32 %v3992, %v3992
        %3995 = vadd.xlane.f32.xlu0 %v3993
        %v3996 = vpop.xlane.xlu0 %3995
        %3997 = vadd.xlane.f32.xlu0 %v3994
        %v3998 = vpop.xlane.xlu0 %3997
        %v3999 = vmul.f32 %v3996, %v1454
        %v4000 = vmul.f32 %v3998, %v1454
        %v4001 = vadd.f32 %v3999, 1e-07
        %v4002 = vadd.f32 %v4000, 1e-07
        %v4003 = vrsqrt.pop %v4001
        %v4004 = vrsqrt.pop %v4002
        %v4005 = vmul.f32 %v3991, %v4003
        %v4006 = vmul.f32 %v3992, %v4004
        %v4007 = vlaneseq
        %v4008 = vshrl.u32 %v4007, 7
        %v4009 = vsub.s32 2, %v4008
        %v4010 = vrot.slane %v2850, %v4009
        %v4011 = vmul.f32 %v4005, %v4010
        %v4012 = vmul.f32 %v4006, %v4010
        %v4013 = vlaneseq
        %v4014 = vshrl.u32 %v4013, 7
        %v4015 = vsub.s32 3, %v4014
        %v4016 = vrot.slane %v2850, %v4015
        %v4017 = vadd.f32 %v4011, %v4016
        %v4018 = vadd.f32 %v4012, %v4016
        %v4019 = vadd.f32 %v1909, %v4017
        %v4020 = vadd.f32 %v1910, %v4018
        %v4021 = vpack.c.bf16 %v4020, %v4019
        %4022 = vmatprep.subr.bf16.mxu0 0
        %4023 = vmatpush1.bf16.msra.mxu0 %v2886
        %4024 = vmatprep.subr.bf16.mxu0 0
        %4025 = vmatpush1.bf16.msra.mxu0 %v2887
        %4026 = vmatprep.subr.bf16.mxu0 0
        %4027 = vmatpush1.bf16.msra.mxu0 %v2888
        %4028 = vmatprep.subr.bf16.mxu0 0
        %4029 = vmatpush1.bf16.msra.mxu0 %v2889
        %4030 = vmatprep.subr.bf16.mxu0 0
        %4031 = vmatpush1.bf16.msra.mxu0 %v2890
        %4032 = vmatprep.subr.bf16.mxu0 0
        %4033 = vmatpush1.bf16.msra.mxu0 %v2891
        %4034 = vmatprep.subr.bf16.mxu0 0
        %4035 = vmatpush1.bf16.msra.mxu0 %v2892
        %4036 = vmatprep.subr.bf16.mxu0 0
        %4037 = vmatpush1.bf16.msra.mxu0 %v2893
        %4038 = vmatprep.subr.bf16.mxu0 0
        %4039 = vmatpush1.bf16.msra.mxu0 0
        %4040 = vmatprep.subr.bf16.mxu0 0
        %4041 = vmatpush1.bf16.msra.mxu0 0
        %4042 = vmatprep.subr.bf16.mxu0 0
        %4043 = vmatpush1.bf16.msra.mxu0 0
        %4044 = vmatprep.subr.bf16.mxu0 0
        %4045 = vmatpush1.bf16.msra.mxu0 0
        %4046 = vmatprep.subr.bf16.mxu0 0
        %4047 = vmatpush1.bf16.msra.mxu0 0
        %4048 = vmatprep.subr.bf16.mxu0 0
        %4049 = vmatpush1.bf16.msra.mxu0 0
        %4050 = vmatprep.subr.bf16.mxu0 0
        %4051 = vmatpush1.bf16.msra.mxu0 0
        %4052 = vmatprep.subr.bf16.mxu0 0
        %4053 = vmatpush1.bf16.msra.mxu0 0
        %4054 = vmatprep.mubr.bf16.mxu0 0
        %4055 = vmatmul.mubr.bf16.gmra.mrb[0].mxu0 %v2852
        %v4056 = vpop.f32.mrb[0].mxu0
        %v4057 = vadd.f32 0.0, %v4056
        %v4058 = vpop.f32.mrb[0].mxu0
        %v4059 = vpop.f32.mrb[0].mxu0
        %v4060 = vadd.f32 0.0, %v4059
        %v4061 = vpop.f32.mrb[0].mxu0
        %4062 = vmatprep.mubr.bf16.mxu0 0
        %4063 = vmatmul.mubr.bf16.gmra.mrb[0].mxu0 %v2853
        %v4064 = vpop.f32.mrb[0].mxu0
        %v4065 = vadd.f32 0.0, %v4064
        %v4066 = vpop.f32.mrb[0].mxu0
        %v4067 = vpop.f32.mrb[0].mxu0
        %v4068 = vpop.f32.mrb[0].mxu0
        %4069 = vdwg.mxu0
        %4070 = vmatprep.subr.bf16.mxu0 %v2992
        %4071 = vmatpush1.bf16.msra.mxu0 %v2991
        %4072 = vmatprep.subr.bf16.mxu0 %v2994
        %4073 = vmatpush1.bf16.msra.mxu0 %v2993
        %4074 = vmatprep.subr.bf16.mxu0 %v2996
        %4075 = vmatpush1.bf16.msra.mxu0 %v2995
        %4076 = vmatprep.subr.bf16.mxu0 %v2998
        %4077 = vmatpush1.bf16.msra.mxu0 %v2997
        %4078 = vmatprep.subr.bf16.mxu0 %v3000
        %4079 = vmatpush1.bf16.msra.mxu0 %v2999
        %4080 = vmatprep.subr.bf16.mxu0 %v3002
        %4081 = vmatpush1.bf16.msra.mxu0 %v3001
        %4082 = vmatprep.subr.bf16.mxu0 %v3004
        %4083 = vmatpush1.bf16.msra.mxu0 %v3003
        %4084 = vmatprep.subr.bf16.mxu0 %v3006
        %4085 = vmatpush1.bf16.msra.mxu0 %v3005
        %4086 = vmatprep.subr.bf16.mxu0 0
        %4087 = vmatpush1.bf16.msra.mxu0 0
        %4088 = vmatprep.subr.bf16.mxu0 0
        %4089 = vmatpush1.bf16.msra.mxu0 0
        %4090 = vmatprep.subr.bf16.mxu0 0
        %4091 = vmatpush1.bf16.msra.mxu0 0
        %4092 = vmatprep.subr.bf16.mxu0 0
        %4093 = vmatpush1.bf16.msra.mxu0 0
        %4094 = vmatprep.subr.bf16.mxu0 0
        %4095 = vmatpush1.bf16.msra.mxu0 0
        %4096 = vmatprep.subr.bf16.mxu0 0
        %4097 = vmatpush1.bf16.msra.mxu0 0
        %4098 = vmatprep.subr.bf16.mxu0 0
        %4099 = vmatpush1.bf16.msra.mxu0 0
        %4100 = vmatprep.subr.bf16.mxu0 0
        %4101 = vmatpush1.bf16.msra.mxu0 0
        %4102 = vmatprep.mubr.bf16.mxu0 0
        %4103 = vmatmul.mubr.bf16.gmra.mrb[0].mxu0 %v4021
        %v4104 = vpop.f32.mrb[0].mxu0
        %v4105 = vadd.f32 0.0, %v4104
        %v4106 = vpop.f32.mrb[0].mxu0
        %v4107 = vadd.f32 0.0, %v4106
        %v4108 = vpop.f32.mrb[0].mxu0
        %v4109 = vadd.f32 0.0, %v4108
        %v4110 = vpop.f32.mrb[0].mxu0
        %v4111 = vadd.f32 0.0, %v4110
        %4112 = vdwg.mxu0
        %vm4113 = vcmp.gt.f32.partialorder %v4057, 0.0
        %vm4114 = vcmp.gt.f32.partialorder %v4060, 0.0
        %vm4115 = vcmp.gt.f32.partialorder %v4065, 0.0
        %v4116 = vadd.f32 %v4057, 1.0
        %v4117 = vadd.f32 %v4060, 1.0
        %v4118 = vadd.f32 %v4065, 1.0
        %v4119 = vmul.f32 %v4057, 1.442695
        %v4120 = vpow.pop %v4119
        %v4121 = vmul.f32 %v4060, 1.442695
        %v4122 = vpow.pop %v4121
        %v4123 = vmul.f32 %v4065, 1.442695
        %v4124 = vpow.pop %v4123
        %v4125 = vsel %vm4113, %v4116, %v4120
        %v4126 = vsel %vm4114, %v4117, %v4122
        %v4127 = vsel %vm4115, %v4118, %v4124
        %vm4128 = vcmp.gt.f32.partialorder %v4105, 0.0
        %vm4129 = vcmp.gt.f32.partialorder %v4109, 0.0
        %v4130 = vadd.f32 %v4105, 1.0
        %v4131 = vadd.f32 %v4109, 1.0
        %v4132 = vmul.f32 %v4105, 1.442695
        %v4133 = vpow.pop %v4132
        %v4134 = vmul.f32 %v4109, 1.442695
        %v4135 = vpow.pop %v4134
        %v4136 = vsel %vm4128, %v4130, %v4133
        %v4137 = vsel %vm4129, %v4131, %v4135
        %v4138 = vpack.c.bf16 %v4137, %v4136
        %v4139 = vpack.c.bf16 %v4111, %v4107
        %4140 = vxpose.xlu0.c.b16.start [1/8] %v4138, 128
        %4141 = vxpose.xlu0.c.b16.cont [2/8] 0, 128
        %4142 = vxpose.xlu0.c.b16.cont [3/8] 0, 128
        %4143 = vxpose.xlu0.c.b16.cont [4/8] 0, 128
        %4144 = vxpose.xlu0.c.b16.cont [5/8] 0, 128
        %4145 = vxpose.xlu0.c.b16.cont [6/8] 0, 128
        %4146 = vxpose.xlu0.c.b16.cont [7/8] 0, 128
        %4147 = vxpose.xlu0.c.b16.end [8/8] 0, 128
        %v4148 = vpop.trf.xlu0
        %v4149 = vpop.trf.xlu0
        %v4150 = vpop.trf.xlu0
        %v4151 = vpop.trf.xlu0
        %v4152 = vpop.trf.xlu0
        %v4153 = vpop.trf.xlu0
        %v4154 = vpop.trf.xlu0
        %v4155 = vpop.trf.xlu0
        %v4157 = vsel %vm958, %v4148, 0
        %v4160 = vsel %vm958, %v4149, 0
        %v4163 = vsel %vm958, %v4150, 0
        %v4166 = vsel %vm958, %v4151, 0
        %v4169 = vsel %vm958, %v4152, 0
        %v4172 = vsel %vm958, %v4153, 0
        %v4175 = vsel %vm958, %v4154, 0
        %v4178 = vsel %vm958, %v4155, 0
        %4180 = vmatprep.subr.bf16.mxu0 0
        %4181 = vmatpush1.bf16.msra.mxu0 %v4139
        %4182 = vmatprep.subr.bf16.mxu0 0
        %4183 = vmatpush1.bf16.msra.mxu0 0
        %4184 = vmatprep.subr.bf16.mxu0 0
        %4185 = vmatpush1.bf16.msra.mxu0 0
        %4186 = vmatprep.subr.bf16.mxu0 0
        %4187 = vmatpush1.bf16.msra.mxu0 0
        %4188 = vmatprep.subr.bf16.mxu0 0
        %4189 = vmatpush1.bf16.msra.mxu0 0
        %4190 = vmatprep.subr.bf16.mxu0 0
        %4191 = vmatpush1.bf16.msra.mxu0 0
        %4192 = vmatprep.subr.bf16.mxu0 0
        %4193 = vmatpush1.bf16.msra.mxu0 0
        %4194 = vmatprep.subr.bf16.mxu0 0
        %4195 = vmatpush1.bf16.msra.mxu0 0
        %4196 = vmatprep.subr.bf16.mxu0 0
        %4197 = vmatpush1.bf16.msra.mxu0 0
        %4198 = vmatprep.subr.bf16.mxu0 0
        %4199 = vmatpush1.bf16.msra.mxu0 0
        %4200 = vmatprep.subr.bf16.mxu0 0
        %4201 = vmatpush1.bf16.msra.mxu0 0
        %4202 = vmatprep.subr.bf16.mxu0 0
        %4203 = vmatpush1.bf16.msra.mxu0 0
        %4204 = vmatprep.subr.bf16.mxu0 0
        %4205 = vmatpush1.bf16.msra.mxu0 0
        %4206 = vmatprep.subr.bf16.mxu0 0
        %4207 = vmatpush1.bf16.msra.mxu0 0
        %4208 = vmatprep.subr.bf16.mxu0 0
        %4209 = vmatpush1.bf16.msra.mxu0 0
        %4210 = vmatprep.subr.bf16.mxu0 0
        %4211 = vmatpush1.bf16.msra.mxu0 0
        %4212 = vmatprep.mubr.bf16.mxu0 0
        %4213 = vmatmul.mubr.bf16.gmra.mrb[0].mxu0 %v4157
        %v4214 = vpop.f32.mrb[0].mxu0
        %v4215 = vadd.f32 0.0, %v4214
        %v4216 = vpop.f32.mrb[0].mxu0
        %v4217 = vpop.f32.mrb[0].mxu0
        %v4218 = vadd.f32 0.0, %v4217
        %v4219 = vpop.f32.mrb[0].mxu0
        %4220 = vmatprep.mubr.bf16.mxu0 0
        %4221 = vmatmul.mubr.bf16.gmra.mrb[0].mxu0 %v4160
        %v4222 = vpop.f32.mrb[0].mxu0
        %v4223 = vadd.f32 0.0, %v4222
        %v4224 = vpop.f32.mrb[0].mxu0
        %v4225 = vpop.f32.mrb[0].mxu0
        %v4226 = vadd.f32 0.0, %v4225
        %v4227 = vpop.f32.mrb[0].mxu0
        %4228 = vmatprep.mubr.bf16.mxu0 0
        %4229 = vmatmul.mubr.bf16.gmra.mrb[0].mxu0 %v4163
        %v4230 = vpop.f32.mrb[0].mxu0
        %v4231 = vadd.f32 0.0, %v4230
        %v4232 = vpop.f32.mrb[0].mxu0
        %v4233 = vpop.f32.mrb[0].mxu0
        %v4234 = vadd.f32 0.0, %v4233
        %v4235 = vpop.f32.mrb[0].mxu0
        %4236 = vmatprep.mubr.bf16.mxu0 0
        %4237 = vmatmul.mubr.bf16.gmra.mrb[0].mxu0 %v4166
        %v4238 = vpop.f32.mrb[0].mxu0
        %v4239 = vadd.f32 0.0, %v4238
        %v4240 = vpop.f32.mrb[0].mxu0
        %v4241 = vpop.f32.mrb[0].mxu0
        %v4242 = vadd.f32 0.0, %v4241
        %v4243 = vpop.f32.mrb[0].mxu0
        %4244 = vmatprep.mubr.bf16.mxu0 0
        %4245 = vmatmul.mubr.bf16.gmra.mrb[0].mxu0 %v4169
        %v4246 = vpop.f32.mrb[0].mxu0
        %v4247 = vadd.f32 0.0, %v4246
        %v4248 = vpop.f32.mrb[0].mxu0
        %v4249 = vpop.f32.mrb[0].mxu0
        %v4250 = vadd.f32 0.0, %v4249
        %v4251 = vpop.f32.mrb[0].mxu0
        %4252 = vmatprep.mubr.bf16.mxu0 0
        %4253 = vmatmul.mubr.bf16.gmra.mrb[0].mxu0 %v4172
        %v4254 = vpop.f32.mrb[0].mxu0
        %v4255 = vadd.f32 0.0, %v4254
        %v4256 = vpop.f32.mrb[0].mxu0
        %v4257 = vpop.f32.mrb[0].mxu0
        %v4258 = vadd.f32 0.0, %v4257
        %v4259 = vpop.f32.mrb[0].mxu0
        %4260 = vmatprep.mubr.bf16.mxu0 0
        %4261 = vmatmul.mubr.bf16.gmra.mrb[0].mxu0 %v4175
        %v4262 = vpop.f32.mrb[0].mxu0
        %v4263 = vadd.f32 0.0, %v4262
        %v4264 = vpop.f32.mrb[0].mxu0
        %v4265 = vpop.f32.mrb[0].mxu0
        %v4266 = vadd.f32 0.0, %v4265
        %v4267 = vpop.f32.mrb[0].mxu0
        %4268 = vmatprep.mubr.bf16.mxu0 0
        %4269 = vmatmul.mubr.bf16.gmra.mrb[0].mxu0 %v4178
        %v4270 = vpop.f32.mrb[0].mxu0
        %v4271 = vadd.f32 0.0, %v4270
        %v4272 = vpop.f32.mrb[0].mxu0
        %v4273 = vpop.f32.mrb[0].mxu0
        %v4274 = vadd.f32 0.0, %v4273
        %v4275 = vpop.f32.mrb[0].mxu0
        %4276 = vdwg.mxu0
        %v4277 = vpack.c.bf16 %v4218, %v4215
        %v4278 = vpack.c.bf16 %v4226, %v4223
        %v4279 = vpack.c.bf16 %v4234, %v4231
        %v4280 = vpack.c.bf16 %v4242, %v4239
        %v4281 = vpack.c.bf16 %v4250, %v4247
        %v4282 = vpack.c.bf16 %v4258, %v4255
        %v4283 = vpack.c.bf16 %v4266, %v4263
        %v4284 = vpack.c.bf16 %v4274, %v4271
        %v4285 = vmul.bf16 %v4277, %v1120
        %v4286 = vmul.bf16 %v4278, %v1121
        %v4287 = vmul.bf16 %v4279, %v1122
        %v4288 = vmul.bf16 %v4280, %v1123
        %v4289 = vmul.bf16 %v4281, %v1124
        %v4290 = vmul.bf16 %v4282, %v1125
        %v4291 = vmul.bf16 %v4283, %v1126
        %v4292 = vmul.bf16 %v4284, %v1127
        %v4293 = vpack.c.bf16 %v4126, %v4125
        %v4294 = vpack.c.bf16 %v4127, %v4127
        %4295 = vmatprep.subr.bf16.mxu0 0
        %4296 = vmatpush1.bf16.msra.mxu0 %v4285
        %4297 = vmatprep.subr.bf16.mxu0 0
        %4298 = vmatpush1.bf16.msra.mxu0 %v4286
        %4299 = vmatprep.subr.bf16.mxu0 0
        %4300 = vmatpush1.bf16.msra.mxu0 %v4287
        %4301 = vmatprep.subr.bf16.mxu0 0
        %4302 = vmatpush1.bf16.msra.mxu0 %v4288
        %4303 = vmatprep.subr.bf16.mxu0 0
        %4304 = vmatpush1.bf16.msra.mxu0 %v4289
        %4305 = vmatprep.subr.bf16.mxu0 0
        %4306 = vmatpush1.bf16.msra.mxu0 %v4290
        %4307 = vmatprep.subr.bf16.mxu0 0
        %4308 = vmatpush1.bf16.msra.mxu0 %v4291
        %4309 = vmatprep.subr.bf16.mxu0 0
        %4310 = vmatpush1.bf16.msra.mxu0 %v4292
        %4311 = vmatprep.subr.bf16.mxu0 0
        %4312 = vmatpush1.bf16.msra.mxu0 0
        %4313 = vmatprep.subr.bf16.mxu0 0
        %4314 = vmatpush1.bf16.msra.mxu0 0
        %4315 = vmatprep.subr.bf16.mxu0 0
        %4316 = vmatpush1.bf16.msra.mxu0 0
        %4317 = vmatprep.subr.bf16.mxu0 0
        %4318 = vmatpush1.bf16.msra.mxu0 0
        %4319 = vmatprep.subr.bf16.mxu0 0
        %4320 = vmatpush1.bf16.msra.mxu0 0
        %4321 = vmatprep.subr.bf16.mxu0 0
        %4322 = vmatpush1.bf16.msra.mxu0 0
        %4323 = vmatprep.subr.bf16.mxu0 0
        %4324 = vmatpush1.bf16.msra.mxu0 0
        %4325 = vmatprep.subr.bf16.mxu0 0
        %4326 = vmatpush1.bf16.msra.mxu0 0
        %4327 = vmatprep.mubr.bf16.mxu0 0
        %4328 = vmatmul.mubr.bf16.gmra.mrb[0].mxu0 %v4293
        %v4329 = vpop.f32.mrb[0].mxu0
        %v4330 = vadd.f32 0.0, %v4329
        %v4331 = vpop.f32.mrb[0].mxu0
        %v4332 = vpop.f32.mrb[0].mxu0
        %v4333 = vadd.f32 0.0, %v4332
        %v4334 = vpop.f32.mrb[0].mxu0
        %4335 = vmatprep.mubr.bf16.mxu0 0
        %4336 = vmatmul.mubr.bf16.gmra.mrb[0].mxu0 %v4294
        %v4337 = vpop.f32.mrb[0].mxu0
        %v4338 = vadd.f32 0.0, %v4337
        %v4339 = vpop.f32.mrb[0].mxu0
        %v4340 = vpop.f32.mrb[0].mxu0
        %v4341 = vpop.f32.mrb[0].mxu0
        %4342 = vdwg.mxu0
        %v4343 = vadd.f32 %v4136, %v4137
        %v4344 = vrot.slane %v4343, 4
        %v4345 = vadd.f32 %v4343, %v4344
        %v4346 = vrot.slane %v4345, 2
        %v4347 = vadd.f32 %v4345, %v4346
        %v4348 = vrot.slane %v4347, 1
        %v4349 = vadd.f32 %v4347, %v4348
        %v4350 = vmul.f32 %v4125, %v4349
        %v4351 = vmul.f32 %v4126, %v4349
        %v4352 = vmul.f32 %v4127, %v4349
        %4353 = vmatprep.subr.mxu0 0.0
        %4354 = vmatpush1.msra.mxu0 %v577
        %4355 = vmatprep.subr.mxu0 0.0
        %4356 = vmatpush1.msra.mxu0 %v578
        %4357 = vmatprep.subr.mxu0 0.0
        %4358 = vmatpush1.msra.mxu0 %v579
        %4359 = vmatprep.subr.mxu0 0.0
        %4360 = vmatpush1.msra.mxu0 %v580
        %4361 = vmatprep.subr.mxu0 0.0
        %4362 = vmatpush1.msra.mxu0 %v581
        %4363 = vmatprep.subr.mxu0 0.0
        %4364 = vmatpush1.msra.mxu0 %v582
        %4365 = vmatprep.subr.mxu0 0.0
        %4366 = vmatpush1.msra.mxu0 %v583
        %4367 = vmatprep.subr.mxu0 0.0
        %4368 = vmatpush1.msra.mxu0 %v584
        %4369 = vmatprep.subr.mxu0 0.0
        %4370 = vmatpush1.msra.mxu0 %v585
        %4371 = vmatprep.subr.mxu0 0.0
        %4372 = vmatpush1.msra.mxu0 %v586
        %4373 = vmatprep.subr.mxu0 0.0
        %4374 = vmatpush1.msra.mxu0 %v587
        %4375 = vmatprep.subr.mxu0 0.0
        %4376 = vmatpush1.msra.mxu0 %v588
        %4377 = vmatprep.subr.mxu0 0.0
        %4378 = vmatpush1.msra.mxu0 %v589
        %4379 = vmatprep.subr.mxu0 0.0
        %4380 = vmatpush1.msra.mxu0 %v590
        %4381 = vmatprep.subr.mxu0 0.0
        %4382 = vmatpush1.msra.mxu0 %v591
        %4383 = vmatprep.subr.mxu0 0.0
        %4384 = vmatpush1.msra.mxu0 %v592
        %4385 = vmatprep.subr.mxu0 0.0
        %4386 = vmatpush1.msra.mxu0 0.0
        %4387 = vmatprep.subr.mxu0 0.0
        %4388 = vmatpush1.msra.mxu0 0.0
        %4389 = vmatprep.subr.mxu0 0.0
        %4390 = vmatpush1.msra.mxu0 0.0
        %4391 = vmatprep.subr.mxu0 0.0
        %4392 = vmatpush1.msra.mxu0 0.0
        %4393 = vmatprep.subr.mxu0 0.0
        %4394 = vmatpush1.msra.mxu0 0.0
        %4395 = vmatprep.subr.mxu0 0.0
        %4396 = vmatpush1.msra.mxu0 0.0
        %4397 = vmatprep.subr.mxu0 0.0
        %4398 = vmatpush1.msra.mxu0 0.0
        %4399 = vmatprep.subr.mxu0 0.0
        %4400 = vmatpush1.msra.mxu0 0.0
        %4401 = vmatprep.subr.mxu0 0.0
        %4402 = vmatpush1.msra.mxu0 0.0
        %4403 = vmatprep.subr.mxu0 0.0
        %4404 = vmatpush1.msra.mxu0 0.0
        %4405 = vmatprep.subr.mxu0 0.0
        %4406 = vmatpush1.msra.mxu0 0.0
        %4407 = vmatprep.subr.mxu0 0.0
        %4408 = vmatpush1.msra.mxu0 0.0
        %4409 = vmatprep.subr.mxu0 0.0
        %4410 = vmatpush1.msra.mxu0 0.0
        %4411 = vmatprep.subr.mxu0 0.0
        %4412 = vmatpush1.msra.mxu0 0.0
        %4413 = vmatprep.subr.mxu0 0.0
        %4414 = vmatpush1.msra.mxu0 0.0
        %4415 = vmatprep.subr.mxu0 0.0
        %4416 = vmatpush1.msra.mxu0 0.0
        %4417 = vmatprep.mubr.f32.mxu0 0.0
        %4418 = vmatmul.mubr.f32.gmra.mrb[0].mxu0 %v4350
        %v4419 = vpop.f32.mrb[0].mxu0
        %v4420 = vadd.f32 0.0, %v4419
        %v4421 = vpop.f32.mrb[0].mxu0
        %4422 = vmatprep.mubr.f32.mxu0 0.0
        %4423 = vmatmul.mubr.f32.gmra.mrb[0].mxu0 %v4351
        %v4424 = vpop.f32.mrb[0].mxu0
        %v4425 = vadd.f32 0.0, %v4424
        %v4426 = vpop.f32.mrb[0].mxu0
        %4427 = vmatprep.mubr.f32.mxu0 0.0
        %4428 = vmatmul.mubr.f32.gmra.mrb[0].mxu0 %v4352
        %v4429 = vpop.f32.mrb[0].mxu0
        %v4430 = vadd.f32 0.0, %v4429
        %v4431 = vpop.f32.mrb[0].mxu0
        %4432 = vdwg.mxu0
        %v4434 = vsel %vm1270, %v4420, 0
        %v4437 = vsel %vm1270, %v4425, 0
        %v4440 = vsel %vm1270, %v4430, 0
        %4442 = vmatprep.subr.mxu0 0.0
        %4443 = vmatpush1.msra.mxu0 %v1279
        %4444 = vmatprep.subr.mxu0 0.0
        %4445 = vmatpush1.msra.mxu0 0.0
        %4446 = vmatprep.subr.mxu0 0.0
        %4447 = vmatpush1.msra.mxu0 0.0
        %4448 = vmatprep.subr.mxu0 0.0
        %4449 = vmatpush1.msra.mxu0 0.0
        %4450 = vmatprep.subr.mxu0 0.0
        %4451 = vmatpush1.msra.mxu0 0.0
        %4452 = vmatprep.subr.mxu0 0.0
        %4453 = vmatpush1.msra.mxu0 0.0
        %4454 = vmatprep.subr.mxu0 0.0
        %4455 = vmatpush1.msra.mxu0 0.0
        %4456 = vmatprep.subr.mxu0 0.0
        %4457 = vmatpush1.msra.mxu0 0.0
        %4458 = vmatprep.subr.mxu0 0.0
        %4459 = vmatpush1.msra.mxu0 0.0
        %4460 = vmatprep.subr.mxu0 0.0
        %4461 = vmatpush1.msra.mxu0 0.0
        %4462 = vmatprep.subr.mxu0 0.0
        %4463 = vmatpush1.msra.mxu0 0.0
        %4464 = vmatprep.subr.mxu0 0.0
        %4465 = vmatpush1.msra.mxu0 0.0
        %4466 = vmatprep.subr.mxu0 0.0
        %4467 = vmatpush1.msra.mxu0 0.0
        %4468 = vmatprep.subr.mxu0 0.0
        %4469 = vmatpush1.msra.mxu0 0.0
        %4470 = vmatprep.subr.mxu0 0.0
        %4471 = vmatpush1.msra.mxu0 0.0
        %4472 = vmatprep.subr.mxu0 0.0
        %4473 = vmatpush1.msra.mxu0 0.0
        %4474 = vmatprep.subr.mxu0 0.0
        %4475 = vmatpush1.msra.mxu0 0.0
        %4476 = vmatprep.subr.mxu0 0.0
        %4477 = vmatpush1.msra.mxu0 0.0
        %4478 = vmatprep.subr.mxu0 0.0
        %4479 = vmatpush1.msra.mxu0 0.0
        %4480 = vmatprep.subr.mxu0 0.0
        %4481 = vmatpush1.msra.mxu0 0.0
        %4482 = vmatprep.subr.mxu0 0.0
        %4483 = vmatpush1.msra.mxu0 0.0
        %4484 = vmatprep.subr.mxu0 0.0
        %4485 = vmatpush1.msra.mxu0 0.0
        %4486 = vmatprep.subr.mxu0 0.0
        %4487 = vmatpush1.msra.mxu0 0.0
        %4488 = vmatprep.subr.mxu0 0.0
        %4489 = vmatpush1.msra.mxu0 0.0
        %4490 = vmatprep.subr.mxu0 0.0
        %4491 = vmatpush1.msra.mxu0 0.0
        %4492 = vmatprep.subr.mxu0 0.0
        %4493 = vmatpush1.msra.mxu0 0.0
        %4494 = vmatprep.subr.mxu0 0.0
        %4495 = vmatpush1.msra.mxu0 0.0
        %4496 = vmatprep.subr.mxu0 0.0
        %4497 = vmatpush1.msra.mxu0 0.0
        %4498 = vmatprep.subr.mxu0 0.0
        %4499 = vmatpush1.msra.mxu0 0.0
        %4500 = vmatprep.subr.mxu0 0.0
        %4501 = vmatpush1.msra.mxu0 0.0
        %4502 = vmatprep.subr.mxu0 0.0
        %4503 = vmatpush1.msra.mxu0 0.0
        %4504 = vmatprep.subr.mxu0 0.0
        %4505 = vmatpush1.msra.mxu0 0.0
        %4506 = vmatprep.mubr.f32.mxu0 0.0
        %4507 = vmatmul.mubr.f32.gmra.mrb[0].mxu0 %v4434
        %v4508 = vpop.f32.mrb[0].mxu0
        %v4509 = vadd.f32 1e-06, %v4508
        %v4510 = vpop.f32.mrb[0].mxu0
        %4511 = vmatprep.mubr.f32.mxu0 0.0
        %4512 = vmatmul.mubr.f32.gmra.mrb[0].mxu0 %v4437
        %v4513 = vpop.f32.mrb[0].mxu0
        %v4514 = vadd.f32 1e-06, %v4513
        %v4515 = vpop.f32.mrb[0].mxu0
        %4516 = vmatprep.mubr.f32.mxu0 0.0
        %4517 = vmatmul.mubr.f32.gmra.mrb[0].mxu0 %v4440
        %v4518 = vpop.f32.mrb[0].mxu0
        %v4519 = vadd.f32 1e-06, %v4518
        %v4520 = vpop.f32.mrb[0].mxu0
        %4521 = vdwg.mxu0
        %v4522 = vrcp.pop %v4509
        %v4523 = vrcp.pop %v4514
        %v4524 = vrcp.pop %v4519
        %v4525 = vmul.f32 %v4330, %v4522
        %v4526 = vmul.f32 %v4333, %v4523
        %v4527 = vmul.f32 %v4338, %v4524
        %v4528 = vpack.c.bf16 %v4526, %v4525
        %v4529 = vpack.c.bf16 %v4527, %v4527
        %4530 = vmatprep.subr.bf16.mxu0 0
        %4531 = vmatpush1.bf16.msra.mxu0 %v3504
        %4532 = vmatprep.subr.bf16.mxu0 0
        %4533 = vmatpush1.bf16.msra.mxu0 %v3505
        %4534 = vmatprep.subr.bf16.mxu0 0
        %4535 = vmatpush1.bf16.msra.mxu0 %v3506
        %4536 = vmatprep.subr.bf16.mxu0 0
        %4537 = vmatpush1.bf16.msra.mxu0 %v3507
        %4538 = vmatprep.subr.bf16.mxu0 0
        %4539 = vmatpush1.bf16.msra.mxu0 %v3508
        %4540 = vmatprep.subr.bf16.mxu0 0
        %4541 = vmatpush1.bf16.msra.mxu0 %v3509
        %4542 = vmatprep.subr.bf16.mxu0 0
        %4543 = vmatpush1.bf16.msra.mxu0 %v3510
        %4544 = vmatprep.subr.bf16.mxu0 0
        %4545 = vmatpush1.bf16.msra.mxu0 %v3511
        %4546 = vmatprep.subr.bf16.mxu0 0
        %4547 = vmatpush1.bf16.msra.mxu0 0
        %4548 = vmatprep.subr.bf16.mxu0 0
        %4549 = vmatpush1.bf16.msra.mxu0 0
        %4550 = vmatprep.subr.bf16.mxu0 0
        %4551 = vmatpush1.bf16.msra.mxu0 0
        %4552 = vmatprep.subr.bf16.mxu0 0
        %4553 = vmatpush1.bf16.msra.mxu0 0
        %4554 = vmatprep.subr.bf16.mxu0 0
        %4555 = vmatpush1.bf16.msra.mxu0 0
        %4556 = vmatprep.subr.bf16.mxu0 0
        %4557 = vmatpush1.bf16.msra.mxu0 0
        %4558 = vmatprep.subr.bf16.mxu0 0
        %4559 = vmatpush1.bf16.msra.mxu0 0
        %4560 = vmatprep.subr.bf16.mxu0 0
        %4561 = vmatpush1.bf16.msra.mxu0 0
        %4562 = vmatprep.mubr.bf16.mxu0 0
        %4563 = vmatmul.mubr.bf16.gmra.mrb[0].mxu0 %v4528
        %v4564 = vpop.f32.mrb[0].mxu0
        %v4565 = vadd.f32 0.0, %v4564
        %v4566 = vpop.f32.mrb[0].mxu0
        %v4567 = vpop.f32.mrb[0].mxu0
        %v4568 = vadd.f32 0.0, %v4567
        %v4569 = vpop.f32.mrb[0].mxu0
        %4570 = vmatprep.mubr.bf16.mxu0 0
        %4571 = vmatmul.mubr.bf16.gmra.mrb[0].mxu0 %v4529
        %v4572 = vpop.f32.mrb[0].mxu0
        %v4573 = vadd.f32 0.0, %v4572
        %v4574 = vpop.f32.mrb[0].mxu0
        %v4575 = vpop.f32.mrb[0].mxu0
        %v4576 = vpop.f32.mrb[0].mxu0
        %4577 = vdwg.mxu0
        %4578 = vadd.xlane.f32.xlu0 %v4565
        %v4579 = vpop.xlane.xlu0 %4578
        %4580 = vadd.xlane.f32.xlu0 %v4568
        %v4581 = vpop.xlane.xlu0 %4580
        %4582 = vadd.xlane.f32.xlu0 %v4573
        %v4583 = vpop.xlane.xlu0 %4582
        %v4584 = vmul.f32 %v4579, %v1454
        %v4585 = vmul.f32 %v4581, %v1454
        %v4586 = vmul.f32 %v4583, %v1454
        %v4587 = vsub.f32 %v4565, %v4584
        %v4588 = vsub.f32 %v4568, %v4585
        %v4589 = vsub.f32 %v4573, %v4586
        %v4590 = vmul.f32 %v4587, %v4587
        %v4591 = vmul.f32 %v4588, %v4588
        %v4592 = vmul.f32 %v4589, %v4589
        %4593 = vadd.xlane.f32.xlu0 %v4590
        %v4594 = vpop.xlane.xlu0 %4593
        %4595 = vadd.xlane.f32.xlu0 %v4591
        %v4596 = vpop.xlane.xlu0 %4595
        %4597 = vadd.xlane.f32.xlu0 %v4592
        %v4598 = vpop.xlane.xlu0 %4597
        %v4599 = vmul.f32 %v4594, %v1454
        %v4600 = vmul.f32 %v4596, %v1454
        %v4601 = vmul.f32 %v4598, %v1454
        %v4602 = vadd.f32 %v4599, 1e-07
        %v4603 = vadd.f32 %v4600, 1e-07
        %v4604 = vadd.f32 %v4601, 1e-07
        %v4605 = vrsqrt.pop %v4602
        %v4606 = vrsqrt.pop %v4603
        %v4607 = vrsqrt.pop %v4604
        %v4608 = vmul.f32 %v4587, %v4605
        %v4609 = vmul.f32 %v4588, %v4606
        %v4610 = vmul.f32 %v4589, %v4607
        %v4611 = vmul.f32 %v4608, %v3586
        %v4612 = vmul.f32 %v4609, %v3586
        %v4613 = vmul.f32 %v4610, %v3586
        %v4614 = vadd.f32 %v4611, %v3592
        %v4615 = vadd.f32 %v4612, %v3592
        %v4616 = vadd.f32 %v4613, %v3592
        %v4617 = vpack.c.bf16 %v4615, %v4614
        %v4618 = vpack.c.bf16 %v4616, %v4616
        %4619 = vmatprep.subr.bf16.mxu0 %v3645
        %4620 = vmatpush1.bf16.msra.mxu0 %v3644
        %4621 = vmatprep.subr.bf16.mxu0 %v3647
        %4622 = vmatpush1.bf16.msra.mxu0 %v3646
        %4623 = vmatprep.subr.bf16.mxu0 %v3649
        %4624 = vmatpush1.bf16.msra.mxu0 %v3648
        %4625 = vmatprep.subr.bf16.mxu0 %v3651
        %4626 = vmatpush1.bf16.msra.mxu0 %v3650
        %4627 = vmatprep.subr.bf16.mxu0 %v3653
        %4628 = vmatpush1.bf16.msra.mxu0 %v3652
        %4629 = vmatprep.subr.bf16.mxu0 %v3655
        %4630 = vmatpush1.bf16.msra.mxu0 %v3654
        %4631 = vmatprep.subr.bf16.mxu0 %v3657
        %4632 = vmatpush1.bf16.msra.mxu0 %v3656
        %4633 = vmatprep.subr.bf16.mxu0 %v3659
        %4634 = vmatpush1.bf16.msra.mxu0 %v3658
        %4635 = vmatprep.subr.bf16.mxu0 0
        %4636 = vmatpush1.bf16.msra.mxu0 0
        %4637 = vmatprep.subr.bf16.mxu0 0
        %4638 = vmatpush1.bf16.msra.mxu0 0
        %4639 = vmatprep.subr.bf16.mxu0 0
        %4640 = vmatpush1.bf16.msra.mxu0 0
        %4641 = vmatprep.subr.bf16.mxu0 0
        %4642 = vmatpush1.bf16.msra.mxu0 0
        %4643 = vmatprep.subr.bf16.mxu0 0
        %4644 = vmatpush1.bf16.msra.mxu0 0
        %4645 = vmatprep.subr.bf16.mxu0 0
        %4646 = vmatpush1.bf16.msra.mxu0 0
        %4647 = vmatprep.subr.bf16.mxu0 0
        %4648 = vmatpush1.bf16.msra.mxu0 0
        %4649 = vmatprep.subr.bf16.mxu0 0
        %4650 = vmatpush1.bf16.msra.mxu0 0
        %4651 = vmatprep.mubr.bf16.mxu0 0
        %4652 = vmatmul.mubr.bf16.gmra.mrb[0].mxu0 %v4617
        %v4653 = vpop.f32.mrb[0].mxu0
        %v4654 = vadd.f32 0.0, %v4653
        %v4655 = vpop.f32.mrb[0].mxu0
        %v4656 = vadd.f32 0.0, %v4655
        %v4657 = vpop.f32.mrb[0].mxu0
        %v4658 = vadd.f32 0.0, %v4657
        %v4659 = vpop.f32.mrb[0].mxu0
        %v4660 = vadd.f32 0.0, %v4659
        %4661 = vmatprep.mubr.bf16.mxu0 0
        %4662 = vmatmul.mubr.bf16.gmra.mrb[0].mxu0 %v4618
        %v4663 = vpop.f32.mrb[0].mxu0
        %v4664 = vadd.f32 0.0, %v4663
        %v4665 = vpop.f32.mrb[0].mxu0
        %v4666 = vadd.f32 0.0, %v4665
        %v4667 = vpop.f32.mrb[0].mxu0
        %v4668 = vpop.f32.mrb[0].mxu0
        %4669 = vdwg.mxu0
        %4670 = vmatprep.subr.bf16.mxu0 %v3768
        %4671 = vmatpush1.bf16.msra.mxu0 %v3767
        %4672 = vmatprep.subr.bf16.mxu0 %v3770
        %4673 = vmatpush1.bf16.msra.mxu0 %v3769
        %4674 = vmatprep.subr.bf16.mxu0 %v3772
        %4675 = vmatpush1.bf16.msra.mxu0 %v3771
        %4676 = vmatprep.subr.bf16.mxu0 %v3774
        %4677 = vmatpush1.bf16.msra.mxu0 %v3773
        %4678 = vmatprep.subr.bf16.mxu0 %v3776
        %4679 = vmatpush1.bf16.msra.mxu0 %v3775
        %4680 = vmatprep.subr.bf16.mxu0 %v3778
        %4681 = vmatpush1.bf16.msra.mxu0 %v3777
        %4682 = vmatprep.subr.bf16.mxu0 %v3780
        %4683 = vmatpush1.bf16.msra.mxu0 %v3779
        %4684 = vmatprep.subr.bf16.mxu0 %v3782
        %4685 = vmatpush1.bf16.msra.mxu0 %v3781
        %4686 = vmatprep.subr.bf16.mxu0 0
        %4687 = vmatpush1.bf16.msra.mxu0 0
        %4688 = vmatprep.subr.bf16.mxu0 0
        %4689 = vmatpush1.bf16.msra.mxu0 0
        %4690 = vmatprep.subr.bf16.mxu0 0
        %4691 = vmatpush1.bf16.msra.mxu0 0
        %4692 = vmatprep.subr.bf16.mxu0 0
        %4693 = vmatpush1.bf16.msra.mxu0 0
        %4694 = vmatprep.subr.bf16.mxu0 0
        %4695 = vmatpush1.bf16.msra.mxu0 0
        %4696 = vmatprep.subr.bf16.mxu0 0
        %4697 = vmatpush1.bf16.msra.mxu0 0
        %4698 = vmatprep.subr.bf16.mxu0 0
        %4699 = vmatpush1.bf16.msra.mxu0 0
        %4700 = vmatprep.subr.bf16.mxu0 0
        %4701 = vmatpush1.bf16.msra.mxu0 0
        %4702 = vmatprep.mubr.bf16.mxu0 0
        %4703 = vmatmul.mubr.bf16.gmra.mrb[0].mxu0 %v2852
        %v4704 = vpop.f32.mrb[0].mxu0
        %v4705 = vadd.f32 %v4654, %v4704
        %v4706 = vpop.f32.mrb[0].mxu0
        %v4707 = vadd.f32 %v4656, %v4706
        %v4708 = vpop.f32.mrb[0].mxu0
        %v4709 = vadd.f32 %v4658, %v4708
        %v4710 = vpop.f32.mrb[0].mxu0
        %v4711 = vadd.f32 %v4660, %v4710
        %4712 = vmatprep.mubr.bf16.mxu0 0
        %4713 = vmatmul.mubr.bf16.gmra.mrb[0].mxu0 %v2853
        %v4714 = vpop.f32.mrb[0].mxu0
        %v4715 = vadd.f32 %v4664, %v4714
        %v4716 = vpop.f32.mrb[0].mxu0
        %v4717 = vadd.f32 %v4666, %v4716
        %v4718 = vpop.f32.mrb[0].mxu0
        %v4719 = vpop.f32.mrb[0].mxu0
        %4720 = vdwg.mxu0
        %v4721 = vmax.f32 %v4705, 0.0
        %v4722 = vmax.f32 %v4707, 0.0
        %v4723 = vmax.f32 %v4709, 0.0
        %v4724 = vmax.f32 %v4711, 0.0
        %v4725 = vmax.f32 %v4715, 0.0
        %v4726 = vmax.f32 %v4717, 0.0
        %v4727 = vpack.c.bf16 %v4723, %v4721
        %v4728 = vpack.c.bf16 %v4724, %v4722
        %v4729 = vpack.c.bf16 %v4725, %v4725
        %v4730 = vpack.c.bf16 %v4726, %v4726
        %4731 = vmatprep.subr.bf16.mxu0 0
        %4732 = vmatpush1.bf16.msra.mxu0 %v3912
        %4733 = vmatprep.subr.bf16.mxu0 0
        %4734 = vmatpush1.bf16.msra.mxu0 %v3913
        %4735 = vmatprep.subr.bf16.mxu0 0
        %4736 = vmatpush1.bf16.msra.mxu0 %v3914
        %4737 = vmatprep.subr.bf16.mxu0 0
        %4738 = vmatpush1.bf16.msra.mxu0 %v3915
        %4739 = vmatprep.subr.bf16.mxu0 0
        %4740 = vmatpush1.bf16.msra.mxu0 %v3916
        %4741 = vmatprep.subr.bf16.mxu0 0
        %4742 = vmatpush1.bf16.msra.mxu0 %v3917
        %4743 = vmatprep.subr.bf16.mxu0 0
        %4744 = vmatpush1.bf16.msra.mxu0 %v3918
        %4745 = vmatprep.subr.bf16.mxu0 0
        %4746 = vmatpush1.bf16.msra.mxu0 %v3919
        %4747 = vmatprep.subr.bf16.mxu0 0
        %4748 = vmatpush1.bf16.msra.mxu0 %v3920
        %4749 = vmatprep.subr.bf16.mxu0 0
        %4750 = vmatpush1.bf16.msra.mxu0 %v3921
        %4751 = vmatprep.subr.bf16.mxu0 0
        %4752 = vmatpush1.bf16.msra.mxu0 %v3922
        %4753 = vmatprep.subr.bf16.mxu0 0
        %4754 = vmatpush1.bf16.msra.mxu0 %v3923
        %4755 = vmatprep.subr.bf16.mxu0 0
        %4756 = vmatpush1.bf16.msra.mxu0 %v3924
        %4757 = vmatprep.subr.bf16.mxu0 0
        %4758 = vmatpush1.bf16.msra.mxu0 %v3925
        %4759 = vmatprep.subr.bf16.mxu0 0
        %4760 = vmatpush1.bf16.msra.mxu0 %v3926
        %4761 = vmatprep.subr.bf16.mxu0 0
        %4762 = vmatpush1.bf16.msra.mxu0 %v3927
        %4763 = vmatprep.mubr.bf16.mxu0 %v4728
        %4764 = vmatmul.mubr.bf16.gmra.mrb[0].mxu0 %v4727
        %v4765 = vpop.f32.mrb[0].mxu0
        %v4766 = vadd.f32 0.0, %v4765
        %v4767 = vpop.f32.mrb[0].mxu0
        %v4768 = vpop.f32.mrb[0].mxu0
        %v4769 = vadd.f32 0.0, %v4768
        %v4770 = vpop.f32.mrb[0].mxu0
        %4771 = vmatprep.mubr.bf16.mxu0 %v4730
        %4772 = vmatmul.mubr.bf16.gmra.mrb[0].mxu0 %v4729
        %v4773 = vpop.f32.mrb[0].mxu0
        %v4774 = vadd.f32 0.0, %v4773
        %v4775 = vpop.f32.mrb[0].mxu0
        %v4776 = vpop.f32.mrb[0].mxu0
        %v4777 = vpop.f32.mrb[0].mxu0
        %4778 = vdwg.mxu0
        %4779 = vadd.xlane.f32.xlu0 %v4766
        %v4780 = vpop.xlane.xlu0 %4779
        %4781 = vadd.xlane.f32.xlu0 %v4769
        %v4782 = vpop.xlane.xlu0 %4781
        %4783 = vadd.xlane.f32.xlu0 %v4774
        %v4784 = vpop.xlane.xlu0 %4783
        %v4785 = vmul.f32 %v4780, %v1454
        %v4786 = vmul.f32 %v4782, %v1454
        %v4787 = vmul.f32 %v4784, %v1454
        %v4788 = vsub.f32 %v4766, %v4785
        %v4789 = vsub.f32 %v4769, %v4786
        %v4790 = vsub.f32 %v4774, %v4787
        %v4791 = vmul.f32 %v4788, %v4788
        %v4792 = vmul.f32 %v4789, %v4789
        %v4793 = vmul.f32 %v4790, %v4790
        %4794 = vadd.xlane.f32.xlu0 %v4791
        %v4795 = vpop.xlane.xlu0 %4794
        %4796 = vadd.xlane.f32.xlu0 %v4792
        %v4797 = vpop.xlane.xlu0 %4796
        %4798 = vadd.xlane.f32.xlu0 %v4793
        %v4799 = vpop.xlane.xlu0 %4798
        %v4800 = vmul.f32 %v4795, %v1454
        %v4801 = vmul.f32 %v4797, %v1454
        %v4802 = vmul.f32 %v4799, %v1454
        %v4803 = vadd.f32 %v4800, 1e-07
        %v4804 = vadd.f32 %v4801, 1e-07
        %v4805 = vadd.f32 %v4802, 1e-07
        %v4806 = vrsqrt.pop %v4803
        %v4807 = vrsqrt.pop %v4804
        %v4808 = vrsqrt.pop %v4805
        %v4809 = vmul.f32 %v4788, %v4806
        %v4810 = vmul.f32 %v4789, %v4807
        %v4811 = vmul.f32 %v4790, %v4808
        %v4812 = vmul.f32 %v4809, %v4010
        %v4813 = vmul.f32 %v4810, %v4010
        %v4814 = vmul.f32 %v4811, %v4010
        %v4815 = vadd.f32 %v4812, %v4016
        %v4816 = vadd.f32 %v4813, %v4016
        %v4817 = vadd.f32 %v4814, %v4016
        %v4818 = vadd.f32 %v2729, %v4815
        %v4819 = vadd.f32 %v2730, %v4816
        %v4820 = vadd.f32 %v2731, %v4817
        %4821 = vst [vmem:[%s547] sm:$0xff] %v4019
        %4822 = vst [vmem:[%s547 + $0x8] sm:$0xff] %v4020
        %4823 = vst [vmem:[%s554] sm:$0xff] %v4818
        %4824 = vst [vmem:[%s554 + $0x8] sm:$0xff] %v4819
        %4825 = vst [vmem:[%s554 + $0x10] sm:$0xff] %v4820
        %s4826 = sand.u32 %s287, 1
        %s4827 = scalar_lea.sflag [#allocation4], %s4826
        %s4828 = sand.u32 %s287, 1
        %s4829 = smul.addr %s4828, 16
        %s4830 = scalar_lea.vmem [#allocation14], %s4829
        %s4831 = sand.u32 %s313, 1
        %s4832 = scalar_lea.sflag [#allocation16], %s4831
        %s4833 = sand.u32 %s313, 1
        %s4834 = smul.addr %s4833, 24
        %s4835 = scalar_lea.vmem [#allocation15], %s4834
        // Predicated region
        $region93: #{tpu_custom_call.1} parent=63 // pred_check
          %p4836 = pneg %p297
        $region94: #{tpu_custom_call.1} parent=63 // pred_check_branch
          %4838 = sbr.rel (%p4836) target = $region96
        $region95: #{tpu_custom_call.1} parent=63 // pred_region
          %s4840 = ssub.s32 256, 256
          %4841 = vsyncadd %s4827, %s4840
          %s4842 = smul.addr %s38, 2
          %s4843 = smul.addr %s4842, 128
          %s4844 = scalar_lea.hbm %s11, %s4843
          %s4845 = sshll.u32 %s4830, 4
          %s4846 = int_to_ptr.vmem [resolvable:$true] %s4845
          %4851 = dma.vmem_to_hbm [thread:$0]  %s4846, 256, %s4844, %s4827, 128, 128, 8
        $region96: #{tpu_custom_call.1} parent=63 // pred_fallthru
          _
        // Predicated region
        $region97: #{tpu_custom_call.1} parent=63 // pred_check
          %p4852 = pneg %p323
        $region98: #{tpu_custom_call.1} parent=63 // pred_check_branch
          %4854 = sbr.rel (%p4852) target = $region100
        $region99: #{tpu_custom_call.1} parent=63 // pred_region
          %s4856 = ssub.s32 384, 384
          %4857 = vsyncadd %s4832, %s4856
          %s4858 = smul.addr %s38, 3
          %s4859 = smul.addr %s4858, 128
          %s4860 = scalar_lea.hbm %s12, %s4859
          %s4861 = sshll.u32 %s4835, 4
          %s4862 = int_to_ptr.vmem [resolvable:$true] %s4861
          %4867 = dma.vmem_to_hbm [thread:$0]  %s4862, 384, %s4860, %s4832, 128, 128, 8
        $region100: #{tpu_custom_call.1} parent=63 // pred_fallthru
          _
      $region64: #{tpu_custom_call.1} parent=5 // pred_fallthru
        _
      %p4868 = scmp.le.s32.totalorder 2, %s33
      // Predicated region
      $region101: #{tpu_custom_call.1} parent=5 // pred_check
        %p4869 = pneg %p4868
      $region102: #{tpu_custom_call.1} parent=5 // pred_check_branch
        %4871 = sbr.rel (%p4869) target = $region104
      $region103: #{tpu_custom_call.1} parent=5 // pred_region
        %s4872 = ssub.s32 %s33, 2
        // Predicated region
        $region105: #{tpu_custom_call.1} parent=103 // pred_check
          %p4873 = pneg %p303
        $region106: #{tpu_custom_call.1} parent=103 // pred_check_branch
          %4875 = sbr.rel (%p4873) target = $region108
        $region107: #{tpu_custom_call.1} parent=103 // pred_region
          %s4876 = sand.u32 %s288, 1
          %s4877 = scalar_lea.sflag [#allocation4], %s4876
          %s4878 = sand.u32 %s288, 1
          %s4879 = smul.addr %s4878, 16
          %s4880 = scalar_lea.vmem [#allocation14], %s4879
          %4881 = dma.done %s4877, 256
        $region108: #{tpu_custom_call.1} parent=103 // pred_fallthru
          _
        // Predicated region
        $region109: #{tpu_custom_call.1} parent=103 // pred_check
          %p4882 = pneg %p329
        $region110: #{tpu_custom_call.1} parent=103 // pred_check_branch
          %4884 = sbr.rel (%p4882) target = $region112
        $region111: #{tpu_custom_call.1} parent=103 // pred_region
          %s4885 = sand.u32 %s314, 1
          %s4886 = scalar_lea.sflag [#allocation16], %s4885
          %s4887 = sand.u32 %s314, 1
          %s4888 = smul.addr %s4887, 24
          %s4889 = scalar_lea.vmem [#allocation15], %s4888
          %4890 = dma.done %s4886, 384
        $region112: #{tpu_custom_call.1} parent=103 // pred_fallthru
          _
      $region104: #{tpu_custom_call.1} parent=5 // pred_fallthru
        _
    $region6: #{tpu_custom_call.1} parent=1 // loop_footer
      %s37 = sadd.s32 1, %s33
    $region7: #{tpu_custom_call.1} parent=1 // loop_footer_branch
      %32 = sbr.rel target = $region3
    $region8: #{tpu_custom_call.1} parent=1 // loop_exit
      _
    %4891 = vsyncpa [#allocation3], 1
    %s4892 = scalar_lea.sflag [#allocation3], 1
    %4893 = vsyncpa %s4892, 1
    %4894 = vsyncpa [#allocation6], 1
    %s4895 = scalar_lea.sflag [#allocation6], 1
    %4896 = vsyncpa %s4895, 1
    %4897 = vsyncpa [#allocation9], 1
    %4898 = vsyncpa [#allocation12], 1
    %4899 = vsyncpa [#allocation4], 1
    %s4900 = scalar_lea.sflag [#allocation4], 1
    %4901 = vsyncpa %s4900, 1
    %4902 = vsyncpa [#allocation16], 1
    %s4903 = scalar_lea.sflag [#allocation16], 1
    %4904 = vsyncpa %s4903, 1

</llo_original>
